<compile_context>
chip_gen: v5e
topology: v5e:2x2
jax: 0.10.0
libtpu: 0.0.40
codegen_flags: <defaults>
</compile_context>

<pallas_src>
import functools

import jax
import jax.numpy as jnp
from jax.experimental import pallas as pl
from jax.experimental.pallas import tpu as pltpu

NUM_BOND_TYPE = 5
NUM_BOND_DIRECTION = 3
NUM_ATOM_TYPE = 119
NUM_CHIRALITY_TAG = 3
BN_EPS = 1e-5
LANE = 128
SUBLANE = 8
BOND_PAD = 8  # bond-type / bond-direction one-hot width padded to a sublane tile


def _round_up(v, m):
    return (v + m - 1) // m * m


def _bn_train(x, gamma, beta, count, mask=None):
    """BatchNorm1d, training mode, single-pass stats (var = E[x^2] - E[x]^2).

    `count` is the number of *real* rows; `mask` (rows x 1, 1.0/0.0) excludes
    padded rows from the statistics (padded rows still get normalized but are
    sliced away by the caller)."""
    xm = x if mask is None else x * mask
    inv_n = 1.0 / count
    mu = jnp.sum(xm, axis=0, keepdims=True) * inv_n
    var = jnp.sum(xm * xm, axis=0, keepdims=True) * inv_n - mu * mu
    var = jnp.maximum(var, 0.0)
    return (x - mu) * jax.lax.rsqrt(var + BN_EPS) * gamma + beta


# ----------------------------------------------------------------------------
# Fused forward kernel: structure build + all GIN layers + incremental mean
# pooling + feat_lin + out_lin head.
# ----------------------------------------------------------------------------
def _ginet_fused_kernel(num_layer, emb_pad, num_graphs,
                        h0_ref, edges_ref, batch_ref, ee_ref,
                        w1_ref, b1_ref, g1_ref, be1_ref,
                        w2_ref, b2_ref, go_ref, beo_ref,
                        fw_ref, fb_ref,
                        ow1_ref, ob1_ref, og1_ref, obe1_ref,
                        ow2_ref, ob2_ref, og2_ref, obe2_ref,
                        ow3_ref, ob3_ref,
                        hglobal_ref, out_ref):
    f32, bf16 = jnp.float32, jnp.bfloat16
    n = h0_ref.shape[0]
    e_pad = edges_ref.shape[1]
    g_pad = hglobal_ref.shape[0]

    # ---- Build graph-structure matrices in VMEM (no HBM round trip) --------
    src = edges_ref[0:1, :]                       # [1, E]   (padded edges = -1)
    dst = edges_ref[1:2, :]
    bt = edges_ref[2:3, :]
    bd = edges_ref[3:4, :]

    node_iota = jax.lax.broadcasted_iota(jnp.int32, (n, e_pad), 0)
    dst_ohT = (node_iota == dst).astype(bf16)     # [N, E]  (exact 0/1 counts)
    src_ohT = (node_iota == src).astype(bf16)     # [N, E]

    # combined bond-type (rows 0..7) / bond-direction (rows 8..15) one-hot
    iota16 = jax.lax.broadcasted_iota(jnp.int32, (2 * BOND_PAD, e_pad), 0)
    btd_ohT = (iota16 == jnp.where(iota16 < BOND_PAD, bt, bd + BOND_PAD)).astype(bf16)

    dn_edge = (((1,), (1,)), ((), ()))            # contract over the edge axis
    s_mat = jax.lax.dot_general(dst_ohT, src_ohT, dn_edge,
                                preferred_element_type=f32)        # [N, N]
    c12 = jax.lax.dot_general(dst_ohT, btd_ohT, dn_edge,
                              preferred_element_type=f32)          # [N, 16]
    s_bf = s_mat.astype(bf16)                     # small int counts: exact

    # mean-pool assignment matrix [Gpad, N]; rows for padded graphs are zero
    g_iota = jax.lax.broadcasted_iota(jnp.int32, (g_pad, n), 0)
    pool_oh = (g_iota == batch_ref[...]).astype(f32)
    counts = jnp.sum(pool_oh, axis=1, keepdims=True)
    pool = pool_oh / jnp.maximum(counts, 1.0)

    # layer-invariant edge-embedding aggregation, all layers in ONE matmul
    e_agg_all = jnp.dot(c12, ee_ref[...], preferred_element_type=f32)  # [N, L*Epad]

    # ---- GIN layers (h stays resident in VMEM) ------------------------------
    h = h0_ref[...]                               # [N, Epad] f32
    for layer in range(num_layer):                # static unroll (small L)
        col = layer * emb_pad
        aggr = (jnp.dot(s_bf, h.astype(bf16), preferred_element_type=f32)
                + e_agg_all[:, col:col + emb_pad])

        # GINEConv.update MLP: Linear -> BN -> ReLU -> Linear -> ReLU
        t = jnp.dot(aggr.astype(bf16), w1_ref[layer],
                    preferred_element_type=f32) + b1_ref[layer]
        t = jnp.maximum(_bn_train(t, g1_ref[layer], be1_ref[layer], n), 0.0)
        t = jnp.dot(t.astype(bf16), w2_ref[layer],
                    preferred_element_type=f32) + b2_ref[layer]
        t = jnp.maximum(t, 0.0)

        # outer per-layer BatchNorm1d (+ ReLU for all but the last layer)
        t = _bn_train(t, go_ref[layer], beo_ref[layer], n)
        if layer != num_layer - 1:
            t = jnp.maximum(t, 0.0)
        h = t

        # incremental mean pooling straight into the concatenated output slab
        hglobal_ref[:, col:col + emb_pad] = jnp.dot(
            pool, h, preferred_element_type=f32)

    # ---- head: feat_lin, then out_lin (Linear->BN->ReLU x2, final Linear) ---
    h_global = hglobal_ref[...]                   # [Gpad, L*Epad]
    gmask = (jax.lax.broadcasted_iota(jnp.int32, (g_pad, 1), 0)
             < num_graphs).astype(f32)
    t = jnp.dot(h_global.astype(bf16), fw_ref[...],
                preferred_element_type=f32) + fb_ref[...]
    t = jnp.dot(t.astype(bf16), ow1_ref[...],
                preferred_element_type=f32) + ob1_ref[...]
    t = jnp.maximum(_bn_train(t, og1_ref[...], obe1_ref[...], num_graphs, gmask), 0.0)
    t = jnp.dot(t.astype(bf16), ow2_ref[...],
                preferred_element_type=f32) + ob2_ref[...]
    t = jnp.maximum(_bn_train(t, og2_ref[...], obe2_ref[...], num_graphs, gmask), 0.0)
    out_ref[...] = jnp.dot(t.astype(bf16), ow3_ref[...],
                           preferred_element_type=f32) + ob3_ref[...]


def _fused_call(h0, edges, batch_row, kp, num_layer, emb_pad, feat_pad,
                num_graphs, g_pad):
    concat_pad = num_layer * emb_pad
    vmem = pl.BlockSpec(memory_space=pltpu.MemorySpace.VMEM)
    args = (h0, edges, batch_row, kp["ee"],
            kp["w1"], kp["b1"], kp["g1"], kp["be1"],
            kp["w2"], kp["b2"], kp["go"], kp["beo"],
            kp["fw"], kp["fb"],
            kp["ow1"], kp["ob1"], kp["og1"], kp["obe1"],
            kp["ow2"], kp["ob2"], kp["og2"], kp["obe2"],
            kp["ow3"], kp["ob3"])
    return pl.pallas_call(
        functools.partial(_ginet_fused_kernel, num_layer, emb_pad, num_graphs),
        out_shape=(jax.ShapeDtypeStruct((g_pad, concat_pad), jnp.float32),
                   jax.ShapeDtypeStruct((g_pad, feat_pad), jnp.float32)),
        in_specs=[vmem] * len(args),
        out_specs=(vmem, vmem),
    )(*args)


# ----------------------------------------------------------------------------
# Parameter init (deterministic, synthetic; PyTorch-like unpadded layout)
# ----------------------------------------------------------------------------
def init_params(key, num_layer, emb_dim, feat_dim):
    keys = iter(jax.random.split(key, 256))

    def nrm(shape, scale=0.1):
        return scale * jax.random.normal(next(keys), shape, dtype=jnp.float32)

    params = {
        "x_emb1": nrm((NUM_ATOM_TYPE, emb_dim)),
        "x_emb2": nrm((NUM_CHIRALITY_TAG, emb_dim)),
    }
    layers = []
    for _ in range(num_layer):
        layers.append(dict(
            edge_emb1=nrm((NUM_BOND_TYPE, emb_dim)),
            edge_emb2=nrm((NUM_BOND_DIRECTION, emb_dim)),
            w1=nrm((emb_dim, 2 * emb_dim)),        # Linear weights stored [in, out]
            b1=nrm((1, 2 * emb_dim)),
            g1=jnp.ones((1, 2 * emb_dim), jnp.float32),
            be1=jnp.zeros((1, 2 * emb_dim), jnp.float32),
            w2=nrm((2 * emb_dim, emb_dim)),
            b2=nrm((1, emb_dim)),
            go=jnp.ones((1, emb_dim), jnp.float32),
            beo=jnp.zeros((1, emb_dim), jnp.float32),
        ))
    params["layers"] = layers

    concat_dim = num_layer * emb_dim
    params["feat_w"] = nrm((concat_dim, feat_dim))
    params["feat_b"] = nrm((1, feat_dim))
    for i in (1, 2, 3):
        params[f"out_w{i}"] = nrm((feat_dim, feat_dim))
        params[f"out_b{i}"] = nrm((1, feat_dim))
    for i in (1, 2):
        params[f"out_g{i}"] = jnp.ones((1, feat_dim), jnp.float32)
        params[f"out_be{i}"] = jnp.zeros((1, feat_dim), jnp.float32)
    return params


def prepare_kernel_params(params, num_layer, emb_dim, feat_dim):
    """Pad feature dims to 128-lane multiples, stack per-layer tensors along a
    leading layer axis, cast matmul weights to bf16 (MXU inputs), and lay out
    the edge-embedding tables as one [16, L*Epad] block for the hoisted
    edge-aggregation matmul."""
    E = _round_up(emb_dim, LANE)
    H = _round_up(2 * emb_dim, LANE)
    F = _round_up(feat_dim, LANE)

    def pad2(a, rows, cols, dtype=jnp.float32):
        return jnp.pad(a, ((0, rows - a.shape[0]),
                           (0, cols - a.shape[1]))).astype(dtype)

    L = params["layers"]
    # rows 0..7: bond-type embeddings, rows 8..15: bond-direction embeddings;
    # columns are per-layer blocks of width E.
    ee_cols = [jnp.concatenate([pad2(l["edge_emb1"], BOND_PAD, E),
                                pad2(l["edge_emb2"], BOND_PAD, E)], axis=0)
               for l in L]
    kp = dict(
        ee=jnp.concatenate(ee_cols, axis=1),       # [16, L*E] f32
        w1=jnp.stack([pad2(l["w1"], E, H, jnp.bfloat16) for l in L]),
        b1=jnp.stack([pad2(l["b1"], 1, H) for l in L]),
        g1=jnp.stack([pad2(l["g1"], 1, H) for l in L]),
        be1=jnp.stack([pad2(l["be1"], 1, H) for l in L]),
        w2=jnp.stack([pad2(l["w2"], H, E, jnp.bfloat16) for l in L]),
        b2=jnp.stack([pad2(l["b2"], 1, E) for l in L]),
        go=jnp.stack([pad2(l["go"], 1, E) for l in L]),
        beo=jnp.stack([pad2(l["beo"], 1, E) for l in L]),
    )
    # feat_lin weight: insert zero rows so the padded h_global layout lines up.
    fw = params["feat_w"].reshape(num_layer, emb_dim, feat_dim)
    fw = jnp.pad(fw, ((0, 0), (0, E - emb_dim), (0, F - feat_dim)))
    kp["fw"] = fw.reshape(num_layer * E, F).astype(jnp.bfloat16)
    kp["fb"] = pad2(params["feat_b"], 1, F)
    for i in (1, 2, 3):
        kp[f"ow{i}"] = pad2(params[f"out_w{i}"], F, F, jnp.bfloat16)
        kp[f"ob{i}"] = pad2(params[f"out_b{i}"], 1, F)
    for i in (1, 2):
        kp[f"og{i}"] = pad2(params[f"out_g{i}"], 1, F)
        kp[f"obe{i}"] = pad2(params[f"out_be{i}"], 1, F)
    return kp


# ----------------------------------------------------------------------------
# Forward: tiny JAX glue (embedding gather + edge-list packing), then kernel.
# ----------------------------------------------------------------------------
def ginet_forward(params, kparams, x, edge_index, edge_attr, batch,
                  num_layer, emb_dim, feat_dim, num_graphs):
    n = x.shape[0]
    emb_pad = _round_up(emb_dim, LANE)
    feat_pad = _round_up(feat_dim, LANE)
    g_pad = _round_up(max(num_graphs, 1), SUBLANE)

    # Initial node embedding: x_embedding1(x[:,0]) + x_embedding2(x[:,1])
    h0 = (jnp.take(params["x_emb1"], x[:, 0], axis=0)
          + jnp.take(params["x_emb2"], x[:, 1], axis=0))
    h0 = jnp.pad(h0, ((0, 0), (0, emb_pad - emb_dim)))

    # add_self_loops: self loops appended after the original edges
    # (bond type 4, direction 0), then pad the edge axis to a lane multiple
    # with sentinel -1 indices (contribute nothing inside the kernel).
    loops = jnp.arange(n, dtype=jnp.int32)
    src = jnp.concatenate([edge_index[0].astype(jnp.int32), loops])
    dst = jnp.concatenate([edge_index[1].astype(jnp.int32), loops])
    bond_t = jnp.concatenate([edge_attr[:, 0].astype(jnp.int32),
                              jnp.full((n,), 4, jnp.int32)])
    bond_d = jnp.concatenate([edge_attr[:, 1].astype(jnp.int32),
                              jnp.zeros((n,), jnp.int32)])
    e_tot = src.shape[0]
    e_pad = _round_up(e_tot, LANE)
    pad_e = e_pad - e_tot
    src = jnp.pad(src, (0, pad_e), constant_values=-1)
    dst = jnp.pad(dst, (0, pad_e), constant_values=-1)
    bond_t = jnp.pad(bond_t, (0, pad_e))
    bond_d = jnp.pad(bond_d, (0, pad_e))
    edges = jnp.pad(jnp.stack([src, dst, bond_t, bond_d]),
                    ((0, SUBLANE - 4), (0, 0)))          # [8, E_pad] int32

    batch_row = batch.astype(jnp.int32)[None, :]         # [1, N] int32

    h_global_pad, out_pad = _fused_call(h0, edges, batch_row, kparams,
                                        num_layer, emb_pad, feat_pad,
                                        num_graphs, g_pad)

    # Strip graph-row and feature-dim padding (per-layer blocks of the slab).
    h_global = h_global_pad[:num_graphs].reshape(
        num_graphs, num_layer, emb_pad)[:, :, :emb_dim]
    h_global = h_global.reshape(num_graphs, num_layer * emb_dim)
    out = out_pad[:num_graphs, :feat_dim]
    return h_global, out


if __name__ == "__main__":
    num_layer, emb_dim, feat_dim = 5, 32, 64
    n_nodes, n_edges, n_graphs = 16, 24, 2

    key = jax.random.PRNGKey(0)
    kparam_key, k1, k2, k3, k4, k5 = jax.random.split(key, 6)
    params = init_params(kparam_key, num_layer, emb_dim, feat_dim)
    kparams = prepare_kernel_params(params, num_layer, emb_dim, feat_dim)

    x = jnp.stack(
        [jax.random.randint(k1, (n_nodes,), 0, NUM_ATOM_TYPE),
         jax.random.randint(k2, (n_nodes,), 0, NUM_CHIRALITY_TAG)], axis=1
    ).astype(jnp.int32)
    edge_index = jax.random.randint(k3, (2, n_edges), 0, n_nodes).astype(jnp.int32)
    edge_attr = jnp.stack(
        [jax.random.randint(k4, (n_edges,), 0, NUM_BOND_TYPE - 1),  # 0..3 (4 = self loop)
         jax.random.randint(k5, (n_edges,), 0, NUM_BOND_DIRECTION)], axis=1
    ).astype(jnp.int32)
    batch = jnp.concatenate(
        [jnp.zeros((n_nodes // 2,), jnp.int32),
         jnp.ones((n_nodes - n_nodes // 2,), jnp.int32)])

    fwd = jax.jit(functools.partial(ginet_forward,
                                    num_layer=num_layer, emb_dim=emb_dim,
                                    feat_dim=feat_dim, num_graphs=n_graphs))
    h_global, out = fwd(params, kparams, x, edge_index, edge_attr, batch)
    jax.block_until_ready((h_global, out))

    assert h_global.shape == (n_graphs, num_layer * emb_dim)
    assert out.shape == (n_graphs, feat_dim)
    assert bool(jnp.all(jnp.isfinite(h_global))) and bool(jnp.all(jnp.isfinite(out)))
    print("KERNEL_OK")
</pallas_src>

<mosaic_0001>
module attributes {stable_mosaic.version = 11 : i64} {
  func.func @_ginet_fused_kernel(%arg0: memref<16x128xf32, #tpu.memory_space<vmem>>, %arg1: memref<8x128xi32, #tpu.memory_space<vmem>>, %arg2: memref<1x16xi32, #tpu.memory_space<vmem>>, %arg3: memref<16x640xf32, #tpu.memory_space<vmem>>, %arg4: memref<5x128x128xbf16, #tpu.memory_space<vmem>>, %arg5: memref<5x1x128xf32, #tpu.memory_space<vmem>>, %arg6: memref<5x1x128xf32, #tpu.memory_space<vmem>>, %arg7: memref<5x1x128xf32, #tpu.memory_space<vmem>>, %arg8: memref<5x128x128xbf16, #tpu.memory_space<vmem>>, %arg9: memref<5x1x128xf32, #tpu.memory_space<vmem>>, %arg10: memref<5x1x128xf32, #tpu.memory_space<vmem>>, %arg11: memref<5x1x128xf32, #tpu.memory_space<vmem>>, %arg12: memref<640x128xbf16, #tpu.memory_space<vmem>>, %arg13: memref<1x128xf32, #tpu.memory_space<vmem>>, %arg14: memref<128x128xbf16, #tpu.memory_space<vmem>>, %arg15: memref<1x128xf32, #tpu.memory_space<vmem>>, %arg16: memref<1x128xf32, #tpu.memory_space<vmem>>, %arg17: memref<1x128xf32, #tpu.memory_space<vmem>>, %arg18: memref<128x128xbf16, #tpu.memory_space<vmem>>, %arg19: memref<1x128xf32, #tpu.memory_space<vmem>>, %arg20: memref<1x128xf32, #tpu.memory_space<vmem>>, %arg21: memref<1x128xf32, #tpu.memory_space<vmem>>, %arg22: memref<128x128xbf16, #tpu.memory_space<vmem>>, %arg23: memref<1x128xf32, #tpu.memory_space<vmem>>, %arg24: memref<8x640xf32, #tpu.memory_space<vmem>>, %arg25: memref<8x128xf32, #tpu.memory_space<vmem>>) attributes {dimension_semantics = [], scalar_prefetch = 0 : i64, scratch_operands = 0 : i64, tpu.core_type = #tpu.core_type<tc>} {
    %c0 = arith.constant 0 : index
    %c0_0 = arith.constant 0 : index
    %0 = vector.load %arg1[%c0, %c0_0] : memref<8x128xi32, #tpu.memory_space<vmem>>, vector<1x128xi32>
    %c1 = arith.constant 1 : index
    %c0_1 = arith.constant 0 : index
    %1 = vector.load %arg1[%c1, %c0_1] : memref<8x128xi32, #tpu.memory_space<vmem>>, vector<1x128xi32>
    %c2 = arith.constant 2 : index
    %c0_2 = arith.constant 0 : index
    %2 = vector.load %arg1[%c2, %c0_2] : memref<8x128xi32, #tpu.memory_space<vmem>>, vector<1x128xi32>
    %c3 = arith.constant 3 : index
    %c0_3 = arith.constant 0 : index
    %3 = vector.load %arg1[%c3, %c0_3] : memref<8x128xi32, #tpu.memory_space<vmem>>, vector<1x128xi32>
    %4 = tpu.iota {dimensions = array<i32: 0>} : vector<16x128xi32>
    %5 = vector.broadcast %1 : vector<1x128xi32> to vector<16x128xi32>
    %6 = arith.cmpi eq, %4, %5 : vector<16x128xi32>
    %7 = arith.extui %6 : vector<16x128xi1> to vector<16x128xi32>
    %8 = arith.sitofp %7 : vector<16x128xi32> to vector<16x128xf32>
    %9 = arith.truncf %8 : vector<16x128xf32> to vector<16x128xbf16>
    %10 = vector.broadcast %0 : vector<1x128xi32> to vector<16x128xi32>
    %11 = arith.cmpi eq, %4, %10 : vector<16x128xi32>
    %12 = arith.extui %11 : vector<16x128xi1> to vector<16x128xi32>
    %13 = arith.sitofp %12 : vector<16x128xi32> to vector<16x128xf32>
    %14 = arith.truncf %13 : vector<16x128xf32> to vector<16x128xbf16>
    %15 = tpu.iota {dimensions = array<i32: 0>} : vector<16x128xi32>
    %c8_i32 = arith.constant 8 : i32
    %16 = vector.broadcast %c8_i32 : i32 to vector<16x128xi32>
    %17 = arith.cmpi slt, %15, %16 : vector<16x128xi32>
    %c8_i32_4 = arith.constant 8 : i32
    %18 = vector.broadcast %c8_i32_4 : i32 to vector<1x128xi32>
    %19 = arith.addi %3, %18 : vector<1x128xi32>
    %20 = vector.shape_cast %2 : vector<1x128xi32> to vector<1x128xi32>
    %21 = vector.broadcast %20 : vector<1x128xi32> to vector<16x128xi32>
    %22 = vector.shape_cast %19 : vector<1x128xi32> to vector<1x128xi32>
    %23 = vector.broadcast %22 : vector<1x128xi32> to vector<16x128xi32>
    %24 = arith.select %17, %21, %23 : vector<16x128xi1>, vector<16x128xi32>
    %25 = arith.cmpi eq, %15, %24 : vector<16x128xi32>
    %26 = arith.extui %25 : vector<16x128xi1> to vector<16x128xi32>
    %27 = arith.sitofp %26 : vector<16x128xi32> to vector<16x128xf32>
    %28 = arith.truncf %27 : vector<16x128xf32> to vector<16x128xbf16>
    %cst = arith.constant dense<0.000000e+00> : vector<16x16xf32>
    %29 = tpu.matmul %9, %14, %cst {dimension_numbers = #tpu.dot_dimension_numbers<[1], [1], [0], [0], [0, 0, 1, 0], [], []>} : vector<16x128xbf16>, vector<16x128xbf16>, vector<16x16xf32> -> vector<16x16xf32>
    %cst_5 = arith.constant dense<0.000000e+00> : vector<16x16xf32>
    %30 = tpu.matmul %9, %28, %cst_5 {dimension_numbers = #tpu.dot_dimension_numbers<[1], [1], [0], [0], [0, 0, 1, 0], [], []>} : vector<16x128xbf16>, vector<16x128xbf16>, vector<16x16xf32> -> vector<16x16xf32>
    %31 = arith.truncf %29 : vector<16x16xf32> to vector<16x16xbf16>
    %32 = tpu.iota {dimensions = array<i32: 0>} : vector<8x16xi32>
    %c0_6 = arith.constant 0 : index
    %c0_7 = arith.constant 0 : index
    %33 = vector.load %arg2[%c0_6, %c0_7] : memref<1x16xi32, #tpu.memory_space<vmem>>, vector<1x16xi32>
    %34 = vector.broadcast %33 : vector<1x16xi32> to vector<8x16xi32>
    %35 = arith.cmpi eq, %32, %34 : vector<8x16xi32>
    %36 = arith.extui %35 : vector<8x16xi1> to vector<8x16xi32>
    %37 = arith.sitofp %36 : vector<8x16xi32> to vector<8x16xf32>
    %cst_8 = arith.constant dense<0.000000e+00> : vector<8xf32>
    %38 = vector.multi_reduction <add>, %37, %cst_8 [1] : vector<8x16xf32> to vector<8xf32>
    %39 = vector.shape_cast %38 : vector<8xf32> to vector<8x1xf32>
    %cst_9 = arith.constant 1.000000e+00 : f32
    %40 = vector.broadcast %cst_9 : f32 to vector<8x1xf32>
    %41 = arith.maximumf %39, %40 : vector<8x1xf32>
    %42 = vector.broadcast %41 : vector<8x1xf32> to vector<8x16xf32>
    %43 = arith.divf %37, %42 : vector<8x16xf32>
    %c0_10 = arith.constant 0 : index
    %c0_11 = arith.constant 0 : index
    %44 = vector.load %arg3[%c0_10, %c0_11] : memref<16x640xf32, #tpu.memory_space<vmem>>, vector<16x640xf32>
    %cst_12 = arith.constant dense<0.000000e+00> : vector<16x640xf32>
    %45 = tpu.matmul %30, %44, %cst_12 {dimension_numbers = #tpu.dot_dimension_numbers<[1], [0], [0], [1], [0, 0, 1, 1], [], []>} : vector<16x16xf32>, vector<16x640xf32>, vector<16x640xf32> -> vector<16x640xf32>
    %c0_13 = arith.constant 0 : index
    %c0_14 = arith.constant 0 : index
    %46 = vector.load %arg0[%c0_13, %c0_14] : memref<16x128xf32, #tpu.memory_space<vmem>>, vector<16x128xf32>
    %47 = arith.truncf %46 : vector<16x128xf32> to vector<16x128xbf16>
    %cst_15 = arith.constant dense<0.000000e+00> : vector<16x128xf32>
    %48 = tpu.matmul %31, %47, %cst_15 {dimension_numbers = #tpu.dot_dimension_numbers<[1], [0], [0], [1], [0, 0, 1, 1], [], []>} : vector<16x16xbf16>, vector<16x128xbf16>, vector<16x128xf32> -> vector<16x128xf32>
    %49 = vector.extract_strided_slice %45 {offsets = [0, 0], sizes = [16, 128], strides = [1, 1]} : vector<16x640xf32> to vector<16x128xf32>
    %50 = arith.addf %48, %49 : vector<16x128xf32>
    %51 = arith.truncf %50 : vector<16x128xf32> to vector<16x128xbf16>
    %c0_16 = arith.constant 0 : index
    %c0_17 = arith.constant 0 : index
    %c0_18 = arith.constant 0 : index
    %52 = vector.load %arg4[%c0_16, %c0_17, %c0_18] : memref<5x128x128xbf16, #tpu.memory_space<vmem>>, vector<1x128x128xbf16>
    %53 = vector.shape_cast %52 : vector<1x128x128xbf16> to vector<128x128xbf16>
    %cst_19 = arith.constant dense<0.000000e+00> : vector<16x128xf32>
    %54 = tpu.matmul %51, %53, %cst_19 {dimension_numbers = #tpu.dot_dimension_numbers<[1], [0], [0], [1], [0, 0, 1, 1], [], []>} : vector<16x128xbf16>, vector<128x128xbf16>, vector<16x128xf32> -> vector<16x128xf32>
    %c0_20 = arith.constant 0 : index
    %c0_21 = arith.constant 0 : index
    %c0_22 = arith.constant 0 : index
    %55 = vector.load %arg5[%c0_20, %c0_21, %c0_22] : memref<5x1x128xf32, #tpu.memory_space<vmem>>, vector<1x1x128xf32>
    %56 = vector.shape_cast %55 : vector<1x1x128xf32> to vector<1x128xf32>
    %57 = vector.broadcast %56 : vector<1x128xf32> to vector<16x128xf32>
    %58 = arith.addf %54, %57 : vector<16x128xf32>
    %c0_23 = arith.constant 0 : index
    %c0_24 = arith.constant 0 : index
    %c0_25 = arith.constant 0 : index
    %59 = vector.load %arg6[%c0_23, %c0_24, %c0_25] : memref<5x1x128xf32, #tpu.memory_space<vmem>>, vector<1x1x128xf32>
    %60 = vector.shape_cast %59 : vector<1x1x128xf32> to vector<1x128xf32>
    %c0_26 = arith.constant 0 : index
    %c0_27 = arith.constant 0 : index
    %c0_28 = arith.constant 0 : index
    %61 = vector.load %arg7[%c0_26, %c0_27, %c0_28] : memref<5x1x128xf32, #tpu.memory_space<vmem>>, vector<1x1x128xf32>
    %62 = vector.shape_cast %61 : vector<1x1x128xf32> to vector<1x128xf32>
    %cst_29 = arith.constant dense<0.000000e+00> : vector<128xf32>
    %63 = vector.multi_reduction <add>, %58, %cst_29 [0] : vector<16x128xf32> to vector<128xf32>
    %64 = vector.shape_cast %63 : vector<128xf32> to vector<1x128xf32>
    %cst_30 = arith.constant 6.250000e-02 : f32
    %65 = vector.broadcast %cst_30 : f32 to vector<1x128xf32>
    %66 = arith.mulf %64, %65 : vector<1x128xf32>
    %67 = arith.mulf %58, %58 : vector<16x128xf32>
    %cst_31 = arith.constant dense<0.000000e+00> : vector<128xf32>
    %68 = vector.multi_reduction <add>, %67, %cst_31 [0] : vector<16x128xf32> to vector<128xf32>
    %69 = vector.shape_cast %68 : vector<128xf32> to vector<1x128xf32>
    %cst_32 = arith.constant 6.250000e-02 : f32
    %70 = vector.broadcast %cst_32 : f32 to vector<1x128xf32>
    %71 = arith.mulf %69, %70 : vector<1x128xf32>
    %72 = arith.mulf %66, %66 : vector<1x128xf32>
    %73 = arith.subf %71, %72 : vector<1x128xf32>
    %cst_33 = arith.constant 0.000000e+00 : f32
    %74 = vector.broadcast %cst_33 : f32 to vector<1x128xf32>
    %75 = arith.maximumf %73, %74 : vector<1x128xf32>
    %76 = vector.broadcast %66 : vector<1x128xf32> to vector<16x128xf32>
    %77 = arith.subf %58, %76 : vector<16x128xf32>
    %cst_34 = arith.constant 9.99999974E-6 : f32
    %78 = vector.broadcast %cst_34 : f32 to vector<1x128xf32>
    %79 = arith.addf %75, %78 : vector<1x128xf32>
    %80 = math.rsqrt %79 : vector<1x128xf32>
    %81 = vector.broadcast %80 : vector<1x128xf32> to vector<16x128xf32>
    %82 = arith.mulf %77, %81 : vector<16x128xf32>
    %83 = vector.broadcast %60 : vector<1x128xf32> to vector<16x128xf32>
    %84 = arith.mulf %82, %83 : vector<16x128xf32>
    %85 = vector.broadcast %62 : vector<1x128xf32> to vector<16x128xf32>
    %86 = arith.addf %84, %85 : vector<16x128xf32>
    %cst_35 = arith.constant 0.000000e+00 : f32
    %87 = vector.broadcast %cst_35 : f32 to vector<16x128xf32>
    %88 = arith.maximumf %86, %87 : vector<16x128xf32>
    %89 = arith.truncf %88 : vector<16x128xf32> to vector<16x128xbf16>
    %c0_36 = arith.constant 0 : index
    %c0_37 = arith.constant 0 : index
    %c0_38 = arith.constant 0 : index
    %90 = vector.load %arg8[%c0_36, %c0_37, %c0_38] : memref<5x128x128xbf16, #tpu.memory_space<vmem>>, vector<1x128x128xbf16>
    %91 = vector.shape_cast %90 : vector<1x128x128xbf16> to vector<128x128xbf16>
    %cst_39 = arith.constant dense<0.000000e+00> : vector<16x128xf32>
    %92 = tpu.matmul %89, %91, %cst_39 {dimension_numbers = #tpu.dot_dimension_numbers<[1], [0], [0], [1], [0, 0, 1, 1], [], []>} : vector<16x128xbf16>, vector<128x128xbf16>, vector<16x128xf32> -> vector<16x128xf32>
    %c0_40 = arith.constant 0 : index
    %c0_41 = arith.constant 0 : index
    %c0_42 = arith.constant 0 : index
    %93 = vector.load %arg9[%c0_40, %c0_41, %c0_42] : memref<5x1x128xf32, #tpu.memory_space<vmem>>, vector<1x1x128xf32>
    %94 = vector.shape_cast %93 : vector<1x1x128xf32> to vector<1x128xf32>
    %95 = vector.broadcast %94 : vector<1x128xf32> to vector<16x128xf32>
    %96 = arith.addf %92, %95 : vector<16x128xf32>
    %cst_43 = arith.constant 0.000000e+00 : f32
    %97 = vector.broadcast %cst_43 : f32 to vector<16x128xf32>
    %98 = arith.maximumf %96, %97 : vector<16x128xf32>
    %c0_44 = arith.constant 0 : index
    %c0_45 = arith.constant 0 : index
    %c0_46 = arith.constant 0 : index
    %99 = vector.load %arg10[%c0_44, %c0_45, %c0_46] : memref<5x1x128xf32, #tpu.memory_space<vmem>>, vector<1x1x128xf32>
    %100 = vector.shape_cast %99 : vector<1x1x128xf32> to vector<1x128xf32>
    %c0_47 = arith.constant 0 : index
    %c0_48 = arith.constant 0 : index
    %c0_49 = arith.constant 0 : index
    %101 = vector.load %arg11[%c0_47, %c0_48, %c0_49] : memref<5x1x128xf32, #tpu.memory_space<vmem>>, vector<1x1x128xf32>
    %102 = vector.shape_cast %101 : vector<1x1x128xf32> to vector<1x128xf32>
    %cst_50 = arith.constant dense<0.000000e+00> : vector<128xf32>
    %103 = vector.multi_reduction <add>, %98, %cst_50 [0] : vector<16x128xf32> to vector<128xf32>
    %104 = vector.shape_cast %103 : vector<128xf32> to vector<1x128xf32>
    %cst_51 = arith.constant 6.250000e-02 : f32
    %105 = vector.broadcast %cst_51 : f32 to vector<1x128xf32>
    %106 = arith.mulf %104, %105 : vector<1x128xf32>
    %107 = arith.mulf %98, %98 : vector<16x128xf32>
    %cst_52 = arith.constant dense<0.000000e+00> : vector<128xf32>
    %108 = vector.multi_reduction <add>, %107, %cst_52 [0] : vector<16x128xf32> to vector<128xf32>
    %109 = vector.shape_cast %108 : vector<128xf32> to vector<1x128xf32>
    %cst_53 = arith.constant 6.250000e-02 : f32
    %110 = vector.broadcast %cst_53 : f32 to vector<1x128xf32>
    %111 = arith.mulf %109, %110 : vector<1x128xf32>
    %112 = arith.mulf %106, %106 : vector<1x128xf32>
    %113 = arith.subf %111, %112 : vector<1x128xf32>
    %cst_54 = arith.constant 0.000000e+00 : f32
    %114 = vector.broadcast %cst_54 : f32 to vector<1x128xf32>
    %115 = arith.maximumf %113, %114 : vector<1x128xf32>
    %116 = vector.broadcast %106 : vector<1x128xf32> to vector<16x128xf32>
    %117 = arith.subf %98, %116 : vector<16x128xf32>
    %cst_55 = arith.constant 9.99999974E-6 : f32
    %118 = vector.broadcast %cst_55 : f32 to vector<1x128xf32>
    %119 = arith.addf %115, %118 : vector<1x128xf32>
    %120 = math.rsqrt %119 : vector<1x128xf32>
    %121 = vector.broadcast %120 : vector<1x128xf32> to vector<16x128xf32>
    %122 = arith.mulf %117, %121 : vector<16x128xf32>
    %123 = vector.broadcast %100 : vector<1x128xf32> to vector<16x128xf32>
    %124 = arith.mulf %122, %123 : vector<16x128xf32>
    %125 = vector.broadcast %102 : vector<1x128xf32> to vector<16x128xf32>
    %126 = arith.addf %124, %125 : vector<16x128xf32>
    %cst_56 = arith.constant 0.000000e+00 : f32
    %127 = vector.broadcast %cst_56 : f32 to vector<16x128xf32>
    %128 = arith.maximumf %126, %127 : vector<16x128xf32>
    %cst_57 = arith.constant dense<0.000000e+00> : vector<8x128xf32>
    %129 = tpu.matmul %43, %128, %cst_57 {dimension_numbers = #tpu.dot_dimension_numbers<[1], [0], [0], [1], [0, 0, 1, 1], [], []>} : vector<8x16xf32>, vector<16x128xf32>, vector<8x128xf32> -> vector<8x128xf32>
    %c0_58 = arith.constant 0 : index
    %c0_59 = arith.constant 0 : index
    %130 = vector.load %arg24[%c0_58, %c0_59] : memref<8x640xf32, #tpu.memory_space<vmem>>, vector<8x128xf32>
    tpu.vector_store %arg24[%c0_58, %c0_59], %129 {strides = array<i32>} : memref<8x640xf32, #tpu.memory_space<vmem>>, vector<8x128xf32>,
    %131 = arith.truncf %128 : vector<16x128xf32> to vector<16x128xbf16>
    %cst_60 = arith.constant dense<0.000000e+00> : vector<16x128xf32>
    %132 = tpu.matmul %31, %131, %cst_60 {dimension_numbers = #tpu.dot_dimension_numbers<[1], [0], [0], [1], [0, 0, 1, 1], [], []>} : vector<16x16xbf16>, vector<16x128xbf16>, vector<16x128xf32> -> vector<16x128xf32>
    %133 = vector.extract_strided_slice %45 {offsets = [0, 128], sizes = [16, 128], strides = [1, 1]} : vector<16x640xf32> to vector<16x128xf32>
    %134 = arith.addf %132, %133 : vector<16x128xf32>
    %135 = arith.truncf %134 : vector<16x128xf32> to vector<16x128xbf16>
    %c1_61 = arith.constant 1 : index
    %c0_62 = arith.constant 0 : index
    %c0_63 = arith.constant 0 : index
    %136 = vector.load %arg4[%c1_61, %c0_62, %c0_63] : memref<5x128x128xbf16, #tpu.memory_space<vmem>>, vector<1x128x128xbf16>
    %137 = vector.shape_cast %136 : vector<1x128x128xbf16> to vector<128x128xbf16>
    %cst_64 = arith.constant dense<0.000000e+00> : vector<16x128xf32>
    %138 = tpu.matmul %135, %137, %cst_64 {dimension_numbers = #tpu.dot_dimension_numbers<[1], [0], [0], [1], [0, 0, 1, 1], [], []>} : vector<16x128xbf16>, vector<128x128xbf16>, vector<16x128xf32> -> vector<16x128xf32>
    %c1_65 = arith.constant 1 : index
    %c0_66 = arith.constant 0 : index
    %c0_67 = arith.constant 0 : index
    %139 = vector.load %arg5[%c1_65, %c0_66, %c0_67] : memref<5x1x128xf32, #tpu.memory_space<vmem>>, vector<1x1x128xf32>
    %140 = vector.shape_cast %139 : vector<1x1x128xf32> to vector<1x128xf32>
    %141 = vector.broadcast %140 : vector<1x128xf32> to vector<16x128xf32>
    %142 = arith.addf %138, %141 : vector<16x128xf32>
    %c1_68 = arith.constant 1 : index
    %c0_69 = arith.constant 0 : index
    %c0_70 = arith.constant 0 : index
    %143 = vector.load %arg6[%c1_68, %c0_69, %c0_70] : memref<5x1x128xf32, #tpu.memory_space<vmem>>, vector<1x1x128xf32>
    %144 = vector.shape_cast %143 : vector<1x1x128xf32> to vector<1x128xf32>
    %c1_71 = arith.constant 1 : index
    %c0_72 = arith.constant 0 : index
    %c0_73 = arith.constant 0 : index
    %145 = vector.load %arg7[%c1_71, %c0_72, %c0_73] : memref<5x1x128xf32, #tpu.memory_space<vmem>>, vector<1x1x128xf32>
    %146 = vector.shape_cast %145 : vector<1x1x128xf32> to vector<1x128xf32>
    %cst_74 = arith.constant dense<0.000000e+00> : vector<128xf32>
    %147 = vector.multi_reduction <add>, %142, %cst_74 [0] : vector<16x128xf32> to vector<128xf32>
    %148 = vector.shape_cast %147 : vector<128xf32> to vector<1x128xf32>
    %cst_75 = arith.constant 6.250000e-02 : f32
    %149 = vector.broadcast %cst_75 : f32 to vector<1x128xf32>
    %150 = arith.mulf %148, %149 : vector<1x128xf32>
    %151 = arith.mulf %142, %142 : vector<16x128xf32>
    %cst_76 = arith.constant dense<0.000000e+00> : vector<128xf32>
    %152 = vector.multi_reduction <add>, %151, %cst_76 [0] : vector<16x128xf32> to vector<128xf32>
    %153 = vector.shape_cast %152 : vector<128xf32> to vector<1x128xf32>
    %cst_77 = arith.constant 6.250000e-02 : f32
    %154 = vector.broadcast %cst_77 : f32 to vector<1x128xf32>
    %155 = arith.mulf %153, %154 : vector<1x128xf32>
    %156 = arith.mulf %150, %150 : vector<1x128xf32>
    %157 = arith.subf %155, %156 : vector<1x128xf32>
    %cst_78 = arith.constant 0.000000e+00 : f32
    %158 = vector.broadcast %cst_78 : f32 to vector<1x128xf32>
    %159 = arith.maximumf %157, %158 : vector<1x128xf32>
    %160 = vector.broadcast %150 : vector<1x128xf32> to vector<16x128xf32>
    %161 = arith.subf %142, %160 : vector<16x128xf32>
    %cst_79 = arith.constant 9.99999974E-6 : f32
    %162 = vector.broadcast %cst_79 : f32 to vector<1x128xf32>
    %163 = arith.addf %159, %162 : vector<1x128xf32>
    %164 = math.rsqrt %163 : vector<1x128xf32>
    %165 = vector.broadcast %164 : vector<1x128xf32> to vector<16x128xf32>
    %166 = arith.mulf %161, %165 : vector<16x128xf32>
    %167 = vector.broadcast %144 : vector<1x128xf32> to vector<16x128xf32>
    %168 = arith.mulf %166, %167 : vector<16x128xf32>
    %169 = vector.broadcast %146 : vector<1x128xf32> to vector<16x128xf32>
    %170 = arith.addf %168, %169 : vector<16x128xf32>
    %cst_80 = arith.constant 0.000000e+00 : f32
    %171 = vector.broadcast %cst_80 : f32 to vector<16x128xf32>
    %172 = arith.maximumf %170, %171 : vector<16x128xf32>
    %173 = arith.truncf %172 : vector<16x128xf32> to vector<16x128xbf16>
    %c1_81 = arith.constant 1 : index
    %c0_82 = arith.constant 0 : index
    %c0_83 = arith.constant 0 : index
    %174 = vector.load %arg8[%c1_81, %c0_82, %c0_83] : memref<5x128x128xbf16, #tpu.memory_space<vmem>>, vector<1x128x128xbf16>
    %175 = vector.shape_cast %174 : vector<1x128x128xbf16> to vector<128x128xbf16>
    %cst_84 = arith.constant dense<0.000000e+00> : vector<16x128xf32>
    %176 = tpu.matmul %173, %175, %cst_84 {dimension_numbers = #tpu.dot_dimension_numbers<[1], [0], [0], [1], [0, 0, 1, 1], [], []>} : vector<16x128xbf16>, vector<128x128xbf16>, vector<16x128xf32> -> vector<16x128xf32>
    %c1_85 = arith.constant 1 : index
    %c0_86 = arith.constant 0 : index
    %c0_87 = arith.constant 0 : index
    %177 = vector.load %arg9[%c1_85, %c0_86, %c0_87] : memref<5x1x128xf32, #tpu.memory_space<vmem>>, vector<1x1x128xf32>
    %178 = vector.shape_cast %177 : vector<1x1x128xf32> to vector<1x128xf32>
    %179 = vector.broadcast %178 : vector<1x128xf32> to vector<16x128xf32>
    %180 = arith.addf %176, %179 : vector<16x128xf32>
    %cst_88 = arith.constant 0.000000e+00 : f32
    %181 = vector.broadcast %cst_88 : f32 to vector<16x128xf32>
    %182 = arith.maximumf %180, %181 : vector<16x128xf32>
    %c1_89 = arith.constant 1 : index
    %c0_90 = arith.constant 0 : index
    %c0_91 = arith.constant 0 : index
    %183 = vector.load %arg10[%c1_89, %c0_90, %c0_91] : memref<5x1x128xf32, #tpu.memory_space<vmem>>, vector<1x1x128xf32>
    %184 = vector.shape_cast %183 : vector<1x1x128xf32> to vector<1x128xf32>
    %c1_92 = arith.constant 1 : index
    %c0_93 = arith.constant 0 : index
    %c0_94 = arith.constant 0 : index
    %185 = vector.load %arg11[%c1_92, %c0_93, %c0_94] : memref<5x1x128xf32, #tpu.memory_space<vmem>>, vector<1x1x128xf32>
    %186 = vector.shape_cast %185 : vector<1x1x128xf32> to vector<1x128xf32>
    %cst_95 = arith.constant dense<0.000000e+00> : vector<128xf32>
    %187 = vector.multi_reduction <add>, %182, %cst_95 [0] : vector<16x128xf32> to vector<128xf32>
    %188 = vector.shape_cast %187 : vector<128xf32> to vector<1x128xf32>
    %cst_96 = arith.constant 6.250000e-02 : f32
    %189 = vector.broadcast %cst_96 : f32 to vector<1x128xf32>
    %190 = arith.mulf %188, %189 : vector<1x128xf32>
    %191 = arith.mulf %182, %182 : vector<16x128xf32>
    %cst_97 = arith.constant dense<0.000000e+00> : vector<128xf32>
    %192 = vector.multi_reduction <add>, %191, %cst_97 [0] : vector<16x128xf32> to vector<128xf32>
    %193 = vector.shape_cast %192 : vector<128xf32> to vector<1x128xf32>
    %cst_98 = arith.constant 6.250000e-02 : f32
    %194 = vector.broadcast %cst_98 : f32 to vector<1x128xf32>
    %195 = arith.mulf %193, %194 : vector<1x128xf32>
    %196 = arith.mulf %190, %190 : vector<1x128xf32>
    %197 = arith.subf %195, %196 : vector<1x128xf32>
    %cst_99 = arith.constant 0.000000e+00 : f32
    %198 = vector.broadcast %cst_99 : f32 to vector<1x128xf32>
    %199 = arith.maximumf %197, %198 : vector<1x128xf32>
    %200 = vector.broadcast %190 : vector<1x128xf32> to vector<16x128xf32>
    %201 = arith.subf %182, %200 : vector<16x128xf32>
    %cst_100 = arith.constant 9.99999974E-6 : f32
    %202 = vector.broadcast %cst_100 : f32 to vector<1x128xf32>
    %203 = arith.addf %199, %202 : vector<1x128xf32>
    %204 = math.rsqrt %203 : vector<1x128xf32>
    %205 = vector.broadcast %204 : vector<1x128xf32> to vector<16x128xf32>
    %206 = arith.mulf %201, %205 : vector<16x128xf32>
    %207 = vector.broadcast %184 : vector<1x128xf32> to vector<16x128xf32>
    %208 = arith.mulf %206, %207 : vector<16x128xf32>
    %209 = vector.broadcast %186 : vector<1x128xf32> to vector<16x128xf32>
    %210 = arith.addf %208, %209 : vector<16x128xf32>
    %cst_101 = arith.constant 0.000000e+00 : f32
    %211 = vector.broadcast %cst_101 : f32 to vector<16x128xf32>
    %212 = arith.maximumf %210, %211 : vector<16x128xf32>
    %cst_102 = arith.constant dense<0.000000e+00> : vector<8x128xf32>
    %213 = tpu.matmul %43, %212, %cst_102 {dimension_numbers = #tpu.dot_dimension_numbers<[1], [0], [0], [1], [0, 0, 1, 1], [], []>} : vector<8x16xf32>, vector<16x128xf32>, vector<8x128xf32> -> vector<8x128xf32>
    %c0_103 = arith.constant 0 : index
    %c128 = arith.constant 128 : index
    %214 = vector.load %arg24[%c0_103, %c128] : memref<8x640xf32, #tpu.memory_space<vmem>>, vector<8x128xf32>
    tpu.vector_store %arg24[%c0_103, %c128], %213 {strides = array<i32>} : memref<8x640xf32, #tpu.memory_space<vmem>>, vector<8x128xf32>,
    %215 = arith.truncf %212 : vector<16x128xf32> to vector<16x128xbf16>
    %cst_104 = arith.constant dense<0.000000e+00> : vector<16x128xf32>
    %216 = tpu.matmul %31, %215, %cst_104 {dimension_numbers = #tpu.dot_dimension_numbers<[1], [0], [0], [1], [0, 0, 1, 1], [], []>} : vector<16x16xbf16>, vector<16x128xbf16>, vector<16x128xf32> -> vector<16x128xf32>
    %217 = vector.extract_strided_slice %45 {offsets = [0, 256], sizes = [16, 128], strides = [1, 1]} : vector<16x640xf32> to vector<16x128xf32>
    %218 = arith.addf %216, %217 : vector<16x128xf32>
    %219 = arith.truncf %218 : vector<16x128xf32> to vector<16x128xbf16>
    %c2_105 = arith.constant 2 : index
    %c0_106 = arith.constant 0 : index
    %c0_107 = arith.constant 0 : index
    %220 = vector.load %arg4[%c2_105, %c0_106, %c0_107] : memref<5x128x128xbf16, #tpu.memory_space<vmem>>, vector<1x128x128xbf16>
    %221 = vector.shape_cast %220 : vector<1x128x128xbf16> to vector<128x128xbf16>
    %cst_108 = arith.constant dense<0.000000e+00> : vector<16x128xf32>
    %222 = tpu.matmul %219, %221, %cst_108 {dimension_numbers = #tpu.dot_dimension_numbers<[1], [0], [0], [1], [0, 0, 1, 1], [], []>} : vector<16x128xbf16>, vector<128x128xbf16>, vector<16x128xf32> -> vector<16x128xf32>
    %c2_109 = arith.constant 2 : index
    %c0_110 = arith.constant 0 : index
    %c0_111 = arith.constant 0 : index
    %223 = vector.load %arg5[%c2_109, %c0_110, %c0_111] : memref<5x1x128xf32, #tpu.memory_space<vmem>>, vector<1x1x128xf32>
    %224 = vector.shape_cast %223 : vector<1x1x128xf32> to vector<1x128xf32>
    %225 = vector.broadcast %224 : vector<1x128xf32> to vector<16x128xf32>
    %226 = arith.addf %222, %225 : vector<16x128xf32>
    %c2_112 = arith.constant 2 : index
    %c0_113 = arith.constant 0 : index
    %c0_114 = arith.constant 0 : index
    %227 = vector.load %arg6[%c2_112, %c0_113, %c0_114] : memref<5x1x128xf32, #tpu.memory_space<vmem>>, vector<1x1x128xf32>
    %228 = vector.shape_cast %227 : vector<1x1x128xf32> to vector<1x128xf32>
    %c2_115 = arith.constant 2 : index
    %c0_116 = arith.constant 0 : index
    %c0_117 = arith.constant 0 : index
    %229 = vector.load %arg7[%c2_115, %c0_116, %c0_117] : memref<5x1x128xf32, #tpu.memory_space<vmem>>, vector<1x1x128xf32>
    %230 = vector.shape_cast %229 : vector<1x1x128xf32> to vector<1x128xf32>
    %cst_118 = arith.constant dense<0.000000e+00> : vector<128xf32>
    %231 = vector.multi_reduction <add>, %226, %cst_118 [0] : vector<16x128xf32> to vector<128xf32>
    %232 = vector.shape_cast %231 : vector<128xf32> to vector<1x128xf32>
    %cst_119 = arith.constant 6.250000e-02 : f32
    %233 = vector.broadcast %cst_119 : f32 to vector<1x128xf32>
    %234 = arith.mulf %232, %233 : vector<1x128xf32>
    %235 = arith.mulf %226, %226 : vector<16x128xf32>
    %cst_120 = arith.constant dense<0.000000e+00> : vector<128xf32>
    %236 = vector.multi_reduction <add>, %235, %cst_120 [0] : vector<16x128xf32> to vector<128xf32>
    %237 = vector.shape_cast %236 : vector<128xf32> to vector<1x128xf32>
    %cst_121 = arith.constant 6.250000e-02 : f32
    %238 = vector.broadcast %cst_121 : f32 to vector<1x128xf32>
    %239 = arith.mulf %237, %238 : vector<1x128xf32>
    %240 = arith.mulf %234, %234 : vector<1x128xf32>
    %241 = arith.subf %239, %240 : vector<1x128xf32>
    %cst_122 = arith.constant 0.000000e+00 : f32
    %242 = vector.broadcast %cst_122 : f32 to vector<1x128xf32>
    %243 = arith.maximumf %241, %242 : vector<1x128xf32>
    %244 = vector.broadcast %234 : vector<1x128xf32> to vector<16x128xf32>
    %245 = arith.subf %226, %244 : vector<16x128xf32>
    %cst_123 = arith.constant 9.99999974E-6 : f32
    %246 = vector.broadcast %cst_123 : f32 to vector<1x128xf32>
    %247 = arith.addf %243, %246 : vector<1x128xf32>
    %248 = math.rsqrt %247 : vector<1x128xf32>
    %249 = vector.broadcast %248 : vector<1x128xf32> to vector<16x128xf32>
    %250 = arith.mulf %245, %249 : vector<16x128xf32>
    %251 = vector.broadcast %228 : vector<1x128xf32> to vector<16x128xf32>
    %252 = arith.mulf %250, %251 : vector<16x128xf32>
    %253 = vector.broadcast %230 : vector<1x128xf32> to vector<16x128xf32>
    %254 = arith.addf %252, %253 : vector<16x128xf32>
    %cst_124 = arith.constant 0.000000e+00 : f32
    %255 = vector.broadcast %cst_124 : f32 to vector<16x128xf32>
    %256 = arith.maximumf %254, %255 : vector<16x128xf32>
    %257 = arith.truncf %256 : vector<16x128xf32> to vector<16x128xbf16>
    %c2_125 = arith.constant 2 : index
    %c0_126 = arith.constant 0 : index
    %c0_127 = arith.constant 0 : index
    %258 = vector.load %arg8[%c2_125, %c0_126, %c0_127] : memref<5x128x128xbf16, #tpu.memory_space<vmem>>, vector<1x128x128xbf16>
    %259 = vector.shape_cast %258 : vector<1x128x128xbf16> to vector<128x128xbf16>
    %cst_128 = arith.constant dense<0.000000e+00> : vector<16x128xf32>
    %260 = tpu.matmul %257, %259, %cst_128 {dimension_numbers = #tpu.dot_dimension_numbers<[1], [0], [0], [1], [0, 0, 1, 1], [], []>} : vector<16x128xbf16>, vector<128x128xbf16>, vector<16x128xf32> -> vector<16x128xf32>
    %c2_129 = arith.constant 2 : index
    %c0_130 = arith.constant 0 : index
    %c0_131 = arith.constant 0 : index
    %261 = vector.load %arg9[%c2_129, %c0_130, %c0_131] : memref<5x1x128xf32, #tpu.memory_space<vmem>>, vector<1x1x128xf32>
    %262 = vector.shape_cast %261 : vector<1x1x128xf32> to vector<1x128xf32>
    %263 = vector.broadcast %262 : vector<1x128xf32> to vector<16x128xf32>
    %264 = arith.addf %260, %263 : vector<16x128xf32>
    %cst_132 = arith.constant 0.000000e+00 : f32
    %265 = vector.broadcast %cst_132 : f32 to vector<16x128xf32>
    %266 = arith.maximumf %264, %265 : vector<16x128xf32>
    %c2_133 = arith.constant 2 : index
    %c0_134 = arith.constant 0 : index
    %c0_135 = arith.constant 0 : index
    %267 = vector.load %arg10[%c2_133, %c0_134, %c0_135] : memref<5x1x128xf32, #tpu.memory_space<vmem>>, vector<1x1x128xf32>
    %268 = vector.shape_cast %267 : vector<1x1x128xf32> to vector<1x128xf32>
    %c2_136 = arith.constant 2 : index
    %c0_137 = arith.constant 0 : index
    %c0_138 = arith.constant 0 : index
    %269 = vector.load %arg11[%c2_136, %c0_137, %c0_138] : memref<5x1x128xf32, #tpu.memory_space<vmem>>, vector<1x1x128xf32>
    %270 = vector.shape_cast %269 : vector<1x1x128xf32> to vector<1x128xf32>
    %cst_139 = arith.constant dense<0.000000e+00> : vector<128xf32>
    %271 = vector.multi_reduction <add>, %266, %cst_139 [0] : vector<16x128xf32> to vector<128xf32>
    %272 = vector.shape_cast %271 : vector<128xf32> to vector<1x128xf32>
    %cst_140 = arith.constant 6.250000e-02 : f32
    %273 = vector.broadcast %cst_140 : f32 to vector<1x128xf32>
    %274 = arith.mulf %272, %273 : vector<1x128xf32>
    %275 = arith.mulf %266, %266 : vector<16x128xf32>
    %cst_141 = arith.constant dense<0.000000e+00> : vector<128xf32>
    %276 = vector.multi_reduction <add>, %275, %cst_141 [0] : vector<16x128xf32> to vector<128xf32>
    %277 = vector.shape_cast %276 : vector<128xf32> to vector<1x128xf32>
    %cst_142 = arith.constant 6.250000e-02 : f32
    %278 = vector.broadcast %cst_142 : f32 to vector<1x128xf32>
    %279 = arith.mulf %277, %278 : vector<1x128xf32>
    %280 = arith.mulf %274, %274 : vector<1x128xf32>
    %281 = arith.subf %279, %280 : vector<1x128xf32>
    %cst_143 = arith.constant 0.000000e+00 : f32
    %282 = vector.broadcast %cst_143 : f32 to vector<1x128xf32>
    %283 = arith.maximumf %281, %282 : vector<1x128xf32>
    %284 = vector.broadcast %274 : vector<1x128xf32> to vector<16x128xf32>
    %285 = arith.subf %266, %284 : vector<16x128xf32>
    %cst_144 = arith.constant 9.99999974E-6 : f32
    %286 = vector.broadcast %cst_144 : f32 to vector<1x128xf32>
    %287 = arith.addf %283, %286 : vector<1x128xf32>
    %288 = math.rsqrt %287 : vector<1x128xf32>
    %289 = vector.broadcast %288 : vector<1x128xf32> to vector<16x128xf32>
    %290 = arith.mulf %285, %289 : vector<16x128xf32>
    %291 = vector.broadcast %268 : vector<1x128xf32> to vector<16x128xf32>
    %292 = arith.mulf %290, %291 : vector<16x128xf32>
    %293 = vector.broadcast %270 : vector<1x128xf32> to vector<16x128xf32>
    %294 = arith.addf %292, %293 : vector<16x128xf32>
    %cst_145 = arith.constant 0.000000e+00 : f32
    %295 = vector.broadcast %cst_145 : f32 to vector<16x128xf32>
    %296 = arith.maximumf %294, %295 : vector<16x128xf32>
    %cst_146 = arith.constant dense<0.000000e+00> : vector<8x128xf32>
    %297 = tpu.matmul %43, %296, %cst_146 {dimension_numbers = #tpu.dot_dimension_numbers<[1], [0], [0], [1], [0, 0, 1, 1], [], []>} : vector<8x16xf32>, vector<16x128xf32>, vector<8x128xf32> -> vector<8x128xf32>
    %c0_147 = arith.constant 0 : index
    %c256 = arith.constant 256 : index
    %298 = vector.load %arg24[%c0_147, %c256] : memref<8x640xf32, #tpu.memory_space<vmem>>, vector<8x128xf32>
    tpu.vector_store %arg24[%c0_147, %c256], %297 {strides = array<i32>} : memref<8x640xf32, #tpu.memory_space<vmem>>, vector<8x128xf32>,
    %299 = arith.truncf %296 : vector<16x128xf32> to vector<16x128xbf16>
    %cst_148 = arith.constant dense<0.000000e+00> : vector<16x128xf32>
    %300 = tpu.matmul %31, %299, %cst_148 {dimension_numbers = #tpu.dot_dimension_numbers<[1], [0], [0], [1], [0, 0, 1, 1], [], []>} : vector<16x16xbf16>, vector<16x128xbf16>, vector<16x128xf32> -> vector<16x128xf32>
    %301 = vector.extract_strided_slice %45 {offsets = [0, 384], sizes = [16, 128], strides = [1, 1]} : vector<16x640xf32> to vector<16x128xf32>
    %302 = arith.addf %300, %301 : vector<16x128xf32>
    %303 = arith.truncf %302 : vector<16x128xf32> to vector<16x128xbf16>
    %c3_149 = arith.constant 3 : index
    %c0_150 = arith.constant 0 : index
    %c0_151 = arith.constant 0 : index
    %304 = vector.load %arg4[%c3_149, %c0_150, %c0_151] : memref<5x128x128xbf16, #tpu.memory_space<vmem>>, vector<1x128x128xbf16>
    %305 = vector.shape_cast %304 : vector<1x128x128xbf16> to vector<128x128xbf16>
    %cst_152 = arith.constant dense<0.000000e+00> : vector<16x128xf32>
    %306 = tpu.matmul %303, %305, %cst_152 {dimension_numbers = #tpu.dot_dimension_numbers<[1], [0], [0], [1], [0, 0, 1, 1], [], []>} : vector<16x128xbf16>, vector<128x128xbf16>, vector<16x128xf32> -> vector<16x128xf32>
    %c3_153 = arith.constant 3 : index
    %c0_154 = arith.constant 0 : index
    %c0_155 = arith.constant 0 : index
    %307 = vector.load %arg5[%c3_153, %c0_154, %c0_155] : memref<5x1x128xf32, #tpu.memory_space<vmem>>, vector<1x1x128xf32>
    %308 = vector.shape_cast %307 : vector<1x1x128xf32> to vector<1x128xf32>
    %309 = vector.broadcast %308 : vector<1x128xf32> to vector<16x128xf32>
    %310 = arith.addf %306, %309 : vector<16x128xf32>
    %c3_156 = arith.constant 3 : index
    %c0_157 = arith.constant 0 : index
    %c0_158 = arith.constant 0 : index
    %311 = vector.load %arg6[%c3_156, %c0_157, %c0_158] : memref<5x1x128xf32, #tpu.memory_space<vmem>>, vector<1x1x128xf32>
    %312 = vector.shape_cast %311 : vector<1x1x128xf32> to vector<1x128xf32>
    %c3_159 = arith.constant 3 : index
    %c0_160 = arith.constant 0 : index
    %c0_161 = arith.constant 0 : index
    %313 = vector.load %arg7[%c3_159, %c0_160, %c0_161] : memref<5x1x128xf32, #tpu.memory_space<vmem>>, vector<1x1x128xf32>
    %314 = vector.shape_cast %313 : vector<1x1x128xf32> to vector<1x128xf32>
    %cst_162 = arith.constant dense<0.000000e+00> : vector<128xf32>
    %315 = vector.multi_reduction <add>, %310, %cst_162 [0] : vector<16x128xf32> to vector<128xf32>
    %316 = vector.shape_cast %315 : vector<128xf32> to vector<1x128xf32>
    %cst_163 = arith.constant 6.250000e-02 : f32
    %317 = vector.broadcast %cst_163 : f32 to vector<1x128xf32>
    %318 = arith.mulf %316, %317 : vector<1x128xf32>
    %319 = arith.mulf %310, %310 : vector<16x128xf32>
    %cst_164 = arith.constant dense<0.000000e+00> : vector<128xf32>
    %320 = vector.multi_reduction <add>, %319, %cst_164 [0] : vector<16x128xf32> to vector<128xf32>
    %321 = vector.shape_cast %320 : vector<128xf32> to vector<1x128xf32>
    %cst_165 = arith.constant 6.250000e-02 : f32
    %322 = vector.broadcast %cst_165 : f32 to vector<1x128xf32>
    %323 = arith.mulf %321, %322 : vector<1x128xf32>
    %324 = arith.mulf %318, %318 : vector<1x128xf32>
    %325 = arith.subf %323, %324 : vector<1x128xf32>
    %cst_166 = arith.constant 0.000000e+00 : f32
    %326 = vector.broadcast %cst_166 : f32 to vector<1x128xf32>
    %327 = arith.maximumf %325, %326 : vector<1x128xf32>
    %328 = vector.broadcast %318 : vector<1x128xf32> to vector<16x128xf32>
    %329 = arith.subf %310, %328 : vector<16x128xf32>
    %cst_167 = arith.constant 9.99999974E-6 : f32
    %330 = vector.broadcast %cst_167 : f32 to vector<1x128xf32>
    %331 = arith.addf %327, %330 : vector<1x128xf32>
    %332 = math.rsqrt %331 : vector<1x128xf32>
    %333 = vector.broadcast %332 : vector<1x128xf32> to vector<16x128xf32>
    %334 = arith.mulf %329, %333 : vector<16x128xf32>
    %335 = vector.broadcast %312 : vector<1x128xf32> to vector<16x128xf32>
    %336 = arith.mulf %334, %335 : vector<16x128xf32>
    %337 = vector.broadcast %314 : vector<1x128xf32> to vector<16x128xf32>
    %338 = arith.addf %336, %337 : vector<16x128xf32>
    %cst_168 = arith.constant 0.000000e+00 : f32
    %339 = vector.broadcast %cst_168 : f32 to vector<16x128xf32>
    %340 = arith.maximumf %338, %339 : vector<16x128xf32>
    %341 = arith.truncf %340 : vector<16x128xf32> to vector<16x128xbf16>
    %c3_169 = arith.constant 3 : index
    %c0_170 = arith.constant 0 : index
    %c0_171 = arith.constant 0 : index
    %342 = vector.load %arg8[%c3_169, %c0_170, %c0_171] : memref<5x128x128xbf16, #tpu.memory_space<vmem>>, vector<1x128x128xbf16>
    %343 = vector.shape_cast %342 : vector<1x128x128xbf16> to vector<128x128xbf16>
    %cst_172 = arith.constant dense<0.000000e+00> : vector<16x128xf32>
    %344 = tpu.matmul %341, %343, %cst_172 {dimension_numbers = #tpu.dot_dimension_numbers<[1], [0], [0], [1], [0, 0, 1, 1], [], []>} : vector<16x128xbf16>, vector<128x128xbf16>, vector<16x128xf32> -> vector<16x128xf32>
    %c3_173 = arith.constant 3 : index
    %c0_174 = arith.constant 0 : index
    %c0_175 = arith.constant 0 : index
    %345 = vector.load %arg9[%c3_173, %c0_174, %c0_175] : memref<5x1x128xf32, #tpu.memory_space<vmem>>, vector<1x1x128xf32>
    %346 = vector.shape_cast %345 : vector<1x1x128xf32> to vector<1x128xf32>
    %347 = vector.broadcast %346 : vector<1x128xf32> to vector<16x128xf32>
    %348 = arith.addf %344, %347 : vector<16x128xf32>
    %cst_176 = arith.constant 0.000000e+00 : f32
    %349 = vector.broadcast %cst_176 : f32 to vector<16x128xf32>
    %350 = arith.maximumf %348, %349 : vector<16x128xf32>
    %c3_177 = arith.constant 3 : index
    %c0_178 = arith.constant 0 : index
    %c0_179 = arith.constant 0 : index
    %351 = vector.load %arg10[%c3_177, %c0_178, %c0_179] : memref<5x1x128xf32, #tpu.memory_space<vmem>>, vector<1x1x128xf32>
    %352 = vector.shape_cast %351 : vector<1x1x128xf32> to vector<1x128xf32>
    %c3_180 = arith.constant 3 : index
    %c0_181 = arith.constant 0 : index
    %c0_182 = arith.constant 0 : index
    %353 = vector.load %arg11[%c3_180, %c0_181, %c0_182] : memref<5x1x128xf32, #tpu.memory_space<vmem>>, vector<1x1x128xf32>
    %354 = vector.shape_cast %353 : vector<1x1x128xf32> to vector<1x128xf32>
    %cst_183 = arith.constant dense<0.000000e+00> : vector<128xf32>
    %355 = vector.multi_reduction <add>, %350, %cst_183 [0] : vector<16x128xf32> to vector<128xf32>
    %356 = vector.shape_cast %355 : vector<128xf32> to vector<1x128xf32>
    %cst_184 = arith.constant 6.250000e-02 : f32
    %357 = vector.broadcast %cst_184 : f32 to vector<1x128xf32>
    %358 = arith.mulf %356, %357 : vector<1x128xf32>
    %359 = arith.mulf %350, %350 : vector<16x128xf32>
    %cst_185 = arith.constant dense<0.000000e+00> : vector<128xf32>
    %360 = vector.multi_reduction <add>, %359, %cst_185 [0] : vector<16x128xf32> to vector<128xf32>
    %361 = vector.shape_cast %360 : vector<128xf32> to vector<1x128xf32>
    %cst_186 = arith.constant 6.250000e-02 : f32
    %362 = vector.broadcast %cst_186 : f32 to vector<1x128xf32>
    %363 = arith.mulf %361, %362 : vector<1x128xf32>
    %364 = arith.mulf %358, %358 : vector<1x128xf32>
    %365 = arith.subf %363, %364 : vector<1x128xf32>
    %cst_187 = arith.constant 0.000000e+00 : f32
    %366 = vector.broadcast %cst_187 : f32 to vector<1x128xf32>
    %367 = arith.maximumf %365, %366 : vector<1x128xf32>
    %368 = vector.broadcast %358 : vector<1x128xf32> to vector<16x128xf32>
    %369 = arith.subf %350, %368 : vector<16x128xf32>
    %cst_188 = arith.constant 9.99999974E-6 : f32
    %370 = vector.broadcast %cst_188 : f32 to vector<1x128xf32>
    %371 = arith.addf %367, %370 : vector<1x128xf32>
    %372 = math.rsqrt %371 : vector<1x128xf32>
    %373 = vector.broadcast %372 : vector<1x128xf32> to vector<16x128xf32>
    %374 = arith.mulf %369, %373 : vector<16x128xf32>
    %375 = vector.broadcast %352 : vector<1x128xf32> to vector<16x128xf32>
    %376 = arith.mulf %374, %375 : vector<16x128xf32>
    %377 = vector.broadcast %354 : vector<1x128xf32> to vector<16x128xf32>
    %378 = arith.addf %376, %377 : vector<16x128xf32>
    %cst_189 = arith.constant 0.000000e+00 : f32
    %379 = vector.broadcast %cst_189 : f32 to vector<16x128xf32>
    %380 = arith.maximumf %378, %379 : vector<16x128xf32>
    %cst_190 = arith.constant dense<0.000000e+00> : vector<8x128xf32>
    %381 = tpu.matmul %43, %380, %cst_190 {dimension_numbers = #tpu.dot_dimension_numbers<[1], [0], [0], [1], [0, 0, 1, 1], [], []>} : vector<8x16xf32>, vector<16x128xf32>, vector<8x128xf32> -> vector<8x128xf32>
    %c0_191 = arith.constant 0 : index
    %c384 = arith.constant 384 : index
    %382 = vector.load %arg24[%c0_191, %c384] : memref<8x640xf32, #tpu.memory_space<vmem>>, vector<8x128xf32>
    tpu.vector_store %arg24[%c0_191, %c384], %381 {strides = array<i32>} : memref<8x640xf32, #tpu.memory_space<vmem>>, vector<8x128xf32>,
    %383 = arith.truncf %380 : vector<16x128xf32> to vector<16x128xbf16>
    %cst_192 = arith.constant dense<0.000000e+00> : vector<16x128xf32>
    %384 = tpu.matmul %31, %383, %cst_192 {dimension_numbers = #tpu.dot_dimension_numbers<[1], [0], [0], [1], [0, 0, 1, 1], [], []>} : vector<16x16xbf16>, vector<16x128xbf16>, vector<16x128xf32> -> vector<16x128xf32>
    %385 = vector.extract_strided_slice %45 {offsets = [0, 512], sizes = [16, 128], strides = [1, 1]} : vector<16x640xf32> to vector<16x128xf32>
    %386 = arith.addf %384, %385 : vector<16x128xf32>
    %387 = arith.truncf %386 : vector<16x128xf32> to vector<16x128xbf16>
    %c4 = arith.constant 4 : index
    %c0_193 = arith.constant 0 : index
    %c0_194 = arith.constant 0 : index
    %388 = vector.load %arg4[%c4, %c0_193, %c0_194] : memref<5x128x128xbf16, #tpu.memory_space<vmem>>, vector<1x128x128xbf16>
    %389 = vector.shape_cast %388 : vector<1x128x128xbf16> to vector<128x128xbf16>
    %cst_195 = arith.constant dense<0.000000e+00> : vector<16x128xf32>
    %390 = tpu.matmul %387, %389, %cst_195 {dimension_numbers = #tpu.dot_dimension_numbers<[1], [0], [0], [1], [0, 0, 1, 1], [], []>} : vector<16x128xbf16>, vector<128x128xbf16>, vector<16x128xf32> -> vector<16x128xf32>
    %c4_196 = arith.constant 4 : index
    %c0_197 = arith.constant 0 : index
    %c0_198 = arith.constant 0 : index
    %391 = vector.load %arg5[%c4_196, %c0_197, %c0_198] : memref<5x1x128xf32, #tpu.memory_space<vmem>>, vector<1x1x128xf32>
    %392 = vector.shape_cast %391 : vector<1x1x128xf32> to vector<1x128xf32>
    %393 = vector.broadcast %392 : vector<1x128xf32> to vector<16x128xf32>
    %394 = arith.addf %390, %393 : vector<16x128xf32>
    %c4_199 = arith.constant 4 : index
    %c0_200 = arith.constant 0 : index
    %c0_201 = arith.constant 0 : index
    %395 = vector.load %arg6[%c4_199, %c0_200, %c0_201] : memref<5x1x128xf32, #tpu.memory_space<vmem>>, vector<1x1x128xf32>
    %396 = vector.shape_cast %395 : vector<1x1x128xf32> to vector<1x128xf32>
    %c4_202 = arith.constant 4 : index
    %c0_203 = arith.constant 0 : index
    %c0_204 = arith.constant 0 : index
    %397 = vector.load %arg7[%c4_202, %c0_203, %c0_204] : memref<5x1x128xf32, #tpu.memory_space<vmem>>, vector<1x1x128xf32>
    %398 = vector.shape_cast %397 : vector<1x1x128xf32> to vector<1x128xf32>
    %cst_205 = arith.constant dense<0.000000e+00> : vector<128xf32>
    %399 = vector.multi_reduction <add>, %394, %cst_205 [0] : vector<16x128xf32> to vector<128xf32>
    %400 = vector.shape_cast %399 : vector<128xf32> to vector<1x128xf32>
    %cst_206 = arith.constant 6.250000e-02 : f32
    %401 = vector.broadcast %cst_206 : f32 to vector<1x128xf32>
    %402 = arith.mulf %400, %401 : vector<1x128xf32>
    %403 = arith.mulf %394, %394 : vector<16x128xf32>
    %cst_207 = arith.constant dense<0.000000e+00> : vector<128xf32>
    %404 = vector.multi_reduction <add>, %403, %cst_207 [0] : vector<16x128xf32> to vector<128xf32>
    %405 = vector.shape_cast %404 : vector<128xf32> to vector<1x128xf32>
    %cst_208 = arith.constant 6.250000e-02 : f32
    %406 = vector.broadcast %cst_208 : f32 to vector<1x128xf32>
    %407 = arith.mulf %405, %406 : vector<1x128xf32>
    %408 = arith.mulf %402, %402 : vector<1x128xf32>
    %409 = arith.subf %407, %408 : vector<1x128xf32>
    %cst_209 = arith.constant 0.000000e+00 : f32
    %410 = vector.broadcast %cst_209 : f32 to vector<1x128xf32>
    %411 = arith.maximumf %409, %410 : vector<1x128xf32>
    %412 = vector.broadcast %402 : vector<1x128xf32> to vector<16x128xf32>
    %413 = arith.subf %394, %412 : vector<16x128xf32>
    %cst_210 = arith.constant 9.99999974E-6 : f32
    %414 = vector.broadcast %cst_210 : f32 to vector<1x128xf32>
    %415 = arith.addf %411, %414 : vector<1x128xf32>
    %416 = math.rsqrt %415 : vector<1x128xf32>
    %417 = vector.broadcast %416 : vector<1x128xf32> to vector<16x128xf32>
    %418 = arith.mulf %413, %417 : vector<16x128xf32>
    %419 = vector.broadcast %396 : vector<1x128xf32> to vector<16x128xf32>
    %420 = arith.mulf %418, %419 : vector<16x128xf32>
    %421 = vector.broadcast %398 : vector<1x128xf32> to vector<16x128xf32>
    %422 = arith.addf %420, %421 : vector<16x128xf32>
    %cst_211 = arith.constant 0.000000e+00 : f32
    %423 = vector.broadcast %cst_211 : f32 to vector<16x128xf32>
    %424 = arith.maximumf %422, %423 : vector<16x128xf32>
    %425 = arith.truncf %424 : vector<16x128xf32> to vector<16x128xbf16>
    %c4_212 = arith.constant 4 : index
    %c0_213 = arith.constant 0 : index
    %c0_214 = arith.constant 0 : index
    %426 = vector.load %arg8[%c4_212, %c0_213, %c0_214] : memref<5x128x128xbf16, #tpu.memory_space<vmem>>, vector<1x128x128xbf16>
    %427 = vector.shape_cast %426 : vector<1x128x128xbf16> to vector<128x128xbf16>
    %cst_215 = arith.constant dense<0.000000e+00> : vector<16x128xf32>
    %428 = tpu.matmul %425, %427, %cst_215 {dimension_numbers = #tpu.dot_dimension_numbers<[1], [0], [0], [1], [0, 0, 1, 1], [], []>} : vector<16x128xbf16>, vector<128x128xbf16>, vector<16x128xf32> -> vector<16x128xf32>
    %c4_216 = arith.constant 4 : index
    %c0_217 = arith.constant 0 : index
    %c0_218 = arith.constant 0 : index
    %429 = vector.load %arg9[%c4_216, %c0_217, %c0_218] : memref<5x1x128xf32, #tpu.memory_space<vmem>>, vector<1x1x128xf32>
    %430 = vector.shape_cast %429 : vector<1x1x128xf32> to vector<1x128xf32>
    %431 = vector.broadcast %430 : vector<1x128xf32> to vector<16x128xf32>
    %432 = arith.addf %428, %431 : vector<16x128xf32>
    %cst_219 = arith.constant 0.000000e+00 : f32
    %433 = vector.broadcast %cst_219 : f32 to vector<16x128xf32>
    %434 = arith.maximumf %432, %433 : vector<16x128xf32>
    %c4_220 = arith.constant 4 : index
    %c0_221 = arith.constant 0 : index
    %c0_222 = arith.constant 0 : index
    %435 = vector.load %arg10[%c4_220, %c0_221, %c0_222] : memref<5x1x128xf32, #tpu.memory_space<vmem>>, vector<1x1x128xf32>
    %436 = vector.shape_cast %435 : vector<1x1x128xf32> to vector<1x128xf32>
    %c4_223 = arith.constant 4 : index
    %c0_224 = arith.constant 0 : index
    %c0_225 = arith.constant 0 : index
    %437 = vector.load %arg11[%c4_223, %c0_224, %c0_225] : memref<5x1x128xf32, #tpu.memory_space<vmem>>, vector<1x1x128xf32>
    %438 = vector.shape_cast %437 : vector<1x1x128xf32> to vector<1x128xf32>
    %cst_226 = arith.constant dense<0.000000e+00> : vector<128xf32>
    %439 = vector.multi_reduction <add>, %434, %cst_226 [0] : vector<16x128xf32> to vector<128xf32>
    %440 = vector.shape_cast %439 : vector<128xf32> to vector<1x128xf32>
    %cst_227 = arith.constant 6.250000e-02 : f32
    %441 = vector.broadcast %cst_227 : f32 to vector<1x128xf32>
    %442 = arith.mulf %440, %441 : vector<1x128xf32>
    %443 = arith.mulf %434, %434 : vector<16x128xf32>
    %cst_228 = arith.constant dense<0.000000e+00> : vector<128xf32>
    %444 = vector.multi_reduction <add>, %443, %cst_228 [0] : vector<16x128xf32> to vector<128xf32>
    %445 = vector.shape_cast %444 : vector<128xf32> to vector<1x128xf32>
    %cst_229 = arith.constant 6.250000e-02 : f32
    %446 = vector.broadcast %cst_229 : f32 to vector<1x128xf32>
    %447 = arith.mulf %445, %446 : vector<1x128xf32>
    %448 = arith.mulf %442, %442 : vector<1x128xf32>
    %449 = arith.subf %447, %448 : vector<1x128xf32>
    %cst_230 = arith.constant 0.000000e+00 : f32
    %450 = vector.broadcast %cst_230 : f32 to vector<1x128xf32>
    %451 = arith.maximumf %449, %450 : vector<1x128xf32>
    %452 = vector.broadcast %442 : vector<1x128xf32> to vector<16x128xf32>
    %453 = arith.subf %434, %452 : vector<16x128xf32>
    %cst_231 = arith.constant 9.99999974E-6 : f32
    %454 = vector.broadcast %cst_231 : f32 to vector<1x128xf32>
    %455 = arith.addf %451, %454 : vector<1x128xf32>
    %456 = math.rsqrt %455 : vector<1x128xf32>
    %457 = vector.broadcast %456 : vector<1x128xf32> to vector<16x128xf32>
    %458 = arith.mulf %453, %457 : vector<16x128xf32>
    %459 = vector.broadcast %436 : vector<1x128xf32> to vector<16x128xf32>
    %460 = arith.mulf %458, %459 : vector<16x128xf32>
    %461 = vector.broadcast %438 : vector<1x128xf32> to vector<16x128xf32>
    %462 = arith.addf %460, %461 : vector<16x128xf32>
    %cst_232 = arith.constant dense<0.000000e+00> : vector<8x128xf32>
    %463 = tpu.matmul %43, %462, %cst_232 {dimension_numbers = #tpu.dot_dimension_numbers<[1], [0], [0], [1], [0, 0, 1, 1], [], []>} : vector<8x16xf32>, vector<16x128xf32>, vector<8x128xf32> -> vector<8x128xf32>
    %c0_233 = arith.constant 0 : index
    %c512 = arith.constant 512 : index
    %464 = vector.load %arg24[%c0_233, %c512] : memref<8x640xf32, #tpu.memory_space<vmem>>, vector<8x128xf32>
    tpu.vector_store %arg24[%c0_233, %c512], %463 {strides = array<i32>} : memref<8x640xf32, #tpu.memory_space<vmem>>, vector<8x128xf32>,
    %c0_234 = arith.constant 0 : index
    %c0_235 = arith.constant 0 : index
    %465 = vector.load %arg24[%c0_234, %c0_235] : memref<8x640xf32, #tpu.memory_space<vmem>>, vector<8x640xf32>
    %466 = tpu.iota {dimensions = array<i32: 0>} : vector<8x1xi32>
    %c2_i32 = arith.constant 2 : i32
    %467 = vector.broadcast %c2_i32 : i32 to vector<8x1xi32>
    %468 = arith.cmpi slt, %466, %467 : vector<8x1xi32>
    %469 = arith.extui %468 : vector<8x1xi1> to vector<8x1xi32>
    %470 = arith.sitofp %469 : vector<8x1xi32> to vector<8x1xf32>
    %471 = arith.truncf %465 : vector<8x640xf32> to vector<8x640xbf16>
    %c0_236 = arith.constant 0 : index
    %c0_237 = arith.constant 0 : index
    %472 = vector.load %arg12[%c0_236, %c0_237] : memref<640x128xbf16, #tpu.memory_space<vmem>>, vector<640x128xbf16>
    %cst_238 = arith.constant dense<0.000000e+00> : vector<8x128xf32>
    %473 = tpu.matmul %471, %472, %cst_238 {dimension_numbers = #tpu.dot_dimension_numbers<[1], [0], [0], [1], [0, 0, 1, 1], [], []>} : vector<8x640xbf16>, vector<640x128xbf16>, vector<8x128xf32> -> vector<8x128xf32>
    %c0_239 = arith.constant 0 : index
    %c0_240 = arith.constant 0 : index
    %474 = vector.load %arg13[%c0_239, %c0_240] : memref<1x128xf32, #tpu.memory_space<vmem>>, vector<1x128xf32>
    %475 = vector.broadcast %474 : vector<1x128xf32> to vector<8x128xf32>
    %476 = arith.addf %473, %475 : vector<8x128xf32>
    %477 = arith.truncf %476 : vector<8x128xf32> to vector<8x128xbf16>
    %c0_241 = arith.constant 0 : index
    %c0_242 = arith.constant 0 : index
    %478 = vector.load %arg14[%c0_241, %c0_242] : memref<128x128xbf16, #tpu.memory_space<vmem>>, vector<128x128xbf16>
    %cst_243 = arith.constant dense<0.000000e+00> : vector<8x128xf32>
    %479 = tpu.matmul %477, %478, %cst_243 {dimension_numbers = #tpu.dot_dimension_numbers<[1], [0], [0], [1], [0, 0, 1, 1], [], []>} : vector<8x128xbf16>, vector<128x128xbf16>, vector<8x128xf32> -> vector<8x128xf32>
    %c0_244 = arith.constant 0 : index
    %c0_245 = arith.constant 0 : index
    %480 = vector.load %arg15[%c0_244, %c0_245] : memref<1x128xf32, #tpu.memory_space<vmem>>, vector<1x128xf32>
    %481 = vector.broadcast %480 : vector<1x128xf32> to vector<8x128xf32>
    %482 = arith.addf %479, %481 : vector<8x128xf32>
    %c0_246 = arith.constant 0 : index
    %c0_247 = arith.constant 0 : index
    %483 = vector.load %arg16[%c0_246, %c0_247] : memref<1x128xf32, #tpu.memory_space<vmem>>, vector<1x128xf32>
    %c0_248 = arith.constant 0 : index
    %c0_249 = arith.constant 0 : index
    %484 = vector.load %arg17[%c0_248, %c0_249] : memref<1x128xf32, #tpu.memory_space<vmem>>, vector<1x128xf32>
    %485 = vector.broadcast %470 : vector<8x1xf32> to vector<8x128xf32>
    %486 = arith.mulf %482, %485 : vector<8x128xf32>
    %cst_250 = arith.constant dense<0.000000e+00> : vector<128xf32>
    %487 = vector.multi_reduction <add>, %486, %cst_250 [0] : vector<8x128xf32> to vector<128xf32>
    %488 = vector.shape_cast %487 : vector<128xf32> to vector<1x128xf32>
    %cst_251 = arith.constant 5.000000e-01 : f32
    %489 = vector.broadcast %cst_251 : f32 to vector<1x128xf32>
    %490 = arith.mulf %488, %489 : vector<1x128xf32>
    %491 = arith.mulf %486, %486 : vector<8x128xf32>
    %cst_252 = arith.constant dense<0.000000e+00> : vector<128xf32>
    %492 = vector.multi_reduction <add>, %491, %cst_252 [0] : vector<8x128xf32> to vector<128xf32>
    %493 = vector.shape_cast %492 : vector<128xf32> to vector<1x128xf32>
    %cst_253 = arith.constant 5.000000e-01 : f32
    %494 = vector.broadcast %cst_253 : f32 to vector<1x128xf32>
    %495 = arith.mulf %493, %494 : vector<1x128xf32>
    %496 = arith.mulf %490, %490 : vector<1x128xf32>
    %497 = arith.subf %495, %496 : vector<1x128xf32>
    %cst_254 = arith.constant 0.000000e+00 : f32
    %498 = vector.broadcast %cst_254 : f32 to vector<1x128xf32>
    %499 = arith.maximumf %497, %498 : vector<1x128xf32>
    %500 = vector.broadcast %490 : vector<1x128xf32> to vector<8x128xf32>
    %501 = arith.subf %482, %500 : vector<8x128xf32>
    %cst_255 = arith.constant 9.99999974E-6 : f32
    %502 = vector.broadcast %cst_255 : f32 to vector<1x128xf32>
    %503 = arith.addf %499, %502 : vector<1x128xf32>
    %504 = math.rsqrt %503 : vector<1x128xf32>
    %505 = vector.broadcast %504 : vector<1x128xf32> to vector<8x128xf32>
    %506 = arith.mulf %501, %505 : vector<8x128xf32>
    %507 = vector.broadcast %483 : vector<1x128xf32> to vector<8x128xf32>
    %508 = arith.mulf %506, %507 : vector<8x128xf32>
    %509 = vector.broadcast %484 : vector<1x128xf32> to vector<8x128xf32>
    %510 = arith.addf %508, %509 : vector<8x128xf32>
    %cst_256 = arith.constant 0.000000e+00 : f32
    %511 = vector.broadcast %cst_256 : f32 to vector<8x128xf32>
    %512 = arith.maximumf %510, %511 : vector<8x128xf32>
    %513 = arith.truncf %512 : vector<8x128xf32> to vector<8x128xbf16>
    %c0_257 = arith.constant 0 : index
    %c0_258 = arith.constant 0 : index
    %514 = vector.load %arg18[%c0_257, %c0_258] : memref<128x128xbf16, #tpu.memory_space<vmem>>, vector<128x128xbf16>
    %cst_259 = arith.constant dense<0.000000e+00> : vector<8x128xf32>
    %515 = tpu.matmul %513, %514, %cst_259 {dimension_numbers = #tpu.dot_dimension_numbers<[1], [0], [0], [1], [0, 0, 1, 1], [], []>} : vector<8x128xbf16>, vector<128x128xbf16>, vector<8x128xf32> -> vector<8x128xf32>
    %c0_260 = arith.constant 0 : index
    %c0_261 = arith.constant 0 : index
    %516 = vector.load %arg19[%c0_260, %c0_261] : memref<1x128xf32, #tpu.memory_space<vmem>>, vector<1x128xf32>
    %517 = vector.broadcast %516 : vector<1x128xf32> to vector<8x128xf32>
    %518 = arith.addf %515, %517 : vector<8x128xf32>
    %c0_262 = arith.constant 0 : index
    %c0_263 = arith.constant 0 : index
    %519 = vector.load %arg20[%c0_262, %c0_263] : memref<1x128xf32, #tpu.memory_space<vmem>>, vector<1x128xf32>
    %c0_264 = arith.constant 0 : index
    %c0_265 = arith.constant 0 : index
    %520 = vector.load %arg21[%c0_264, %c0_265] : memref<1x128xf32, #tpu.memory_space<vmem>>, vector<1x128xf32>
    %521 = vector.broadcast %470 : vector<8x1xf32> to vector<8x128xf32>
    %522 = arith.mulf %518, %521 : vector<8x128xf32>
    %cst_266 = arith.constant dense<0.000000e+00> : vector<128xf32>
    %523 = vector.multi_reduction <add>, %522, %cst_266 [0] : vector<8x128xf32> to vector<128xf32>
    %524 = vector.shape_cast %523 : vector<128xf32> to vector<1x128xf32>
    %cst_267 = arith.constant 5.000000e-01 : f32
    %525 = vector.broadcast %cst_267 : f32 to vector<1x128xf32>
    %526 = arith.mulf %524, %525 : vector<1x128xf32>
    %527 = arith.mulf %522, %522 : vector<8x128xf32>
    %cst_268 = arith.constant dense<0.000000e+00> : vector<128xf32>
    %528 = vector.multi_reduction <add>, %527, %cst_268 [0] : vector<8x128xf32> to vector<128xf32>
    %529 = vector.shape_cast %528 : vector<128xf32> to vector<1x128xf32>
    %cst_269 = arith.constant 5.000000e-01 : f32
    %530 = vector.broadcast %cst_269 : f32 to vector<1x128xf32>
    %531 = arith.mulf %529, %530 : vector<1x128xf32>
    %532 = arith.mulf %526, %526 : vector<1x128xf32>
    %533 = arith.subf %531, %532 : vector<1x128xf32>
    %cst_270 = arith.constant 0.000000e+00 : f32
    %534 = vector.broadcast %cst_270 : f32 to vector<1x128xf32>
    %535 = arith.maximumf %533, %534 : vector<1x128xf32>
    %536 = vector.broadcast %526 : vector<1x128xf32> to vector<8x128xf32>
    %537 = arith.subf %518, %536 : vector<8x128xf32>
    %cst_271 = arith.constant 9.99999974E-6 : f32
    %538 = vector.broadcast %cst_271 : f32 to vector<1x128xf32>
    %539 = arith.addf %535, %538 : vector<1x128xf32>
    %540 = math.rsqrt %539 : vector<1x128xf32>
    %541 = vector.broadcast %540 : vector<1x128xf32> to vector<8x128xf32>
    %542 = arith.mulf %537, %541 : vector<8x128xf32>
    %543 = vector.broadcast %519 : vector<1x128xf32> to vector<8x128xf32>
    %544 = arith.mulf %542, %543 : vector<8x128xf32>
    %545 = vector.broadcast %520 : vector<1x128xf32> to vector<8x128xf32>
    %546 = arith.addf %544, %545 : vector<8x128xf32>
    %cst_272 = arith.constant 0.000000e+00 : f32
    %547 = vector.broadcast %cst_272 : f32 to vector<8x128xf32>
    %548 = arith.maximumf %546, %547 : vector<8x128xf32>
    %549 = arith.truncf %548 : vector<8x128xf32> to vector<8x128xbf16>
    %c0_273 = arith.constant 0 : index
    %c0_274 = arith.constant 0 : index
    %550 = vector.load %arg22[%c0_273, %c0_274] : memref<128x128xbf16, #tpu.memory_space<vmem>>, vector<128x128xbf16>
    %cst_275 = arith.constant dense<0.000000e+00> : vector<8x128xf32>
    %551 = tpu.matmul %549, %550, %cst_275 {dimension_numbers = #tpu.dot_dimension_numbers<[1], [0], [0], [1], [0, 0, 1, 1], [], []>} : vector<8x128xbf16>, vector<128x128xbf16>, vector<8x128xf32> -> vector<8x128xf32>
    %c0_276 = arith.constant 0 : index
    %c0_277 = arith.constant 0 : index
    %552 = vector.load %arg23[%c0_276, %c0_277] : memref<1x128xf32, #tpu.memory_space<vmem>>, vector<1x128xf32>
    %553 = vector.broadcast %552 : vector<1x128xf32> to vector<8x128xf32>
    %554 = arith.addf %551, %553 : vector<8x128xf32>
    %c0_278 = arith.constant 0 : index
    %c0_279 = arith.constant 0 : index
    %555 = vector.load %arg25[%c0_278, %c0_279] : memref<8x128xf32, #tpu.memory_space<vmem>>, vector<8x128xf32>
    tpu.vector_store %arg25[%c0_278, %c0_279], %554 {strides = array<i32>} : memref<8x128xf32, #tpu.memory_space<vmem>>, vector<8x128xf32>,
    return
  }
}

</mosaic_0001>

<llo_original>
// kernel: ginet_forward.1
$region0: #{ginet_forward.1}
  #allocation0 [shape = 'u32[]', space=smem, size = 0x4, offset = 0x4, fixed_abs, tag = 'smem constant byte address 0x4 - core index']
  #allocation1 [shape = 'u32[72,128]{1,0:T(1,128)}', space=vmem, size = 0x9000, scoped, tag = 'internal scratch']
  %s0 = inlined_call_operand.vmem [shape: f32[16,128], index: 0, kind: input, shape index: {}]
  %s1 = inlined_call_operand.vmem [shape: s32[8,128], index: 1, kind: input, shape index: {}]
  %s2 = inlined_call_operand.vmem [shape: s32[1,16], index: 2, kind: input, shape index: {}]
  %s3 = inlined_call_operand.vmem [shape: f32[16,640], index: 3, kind: input, shape index: {}]
  %s4 = inlined_call_operand.vmem [shape: bf16[5,128,128], index: 4, kind: input, shape index: {}]
  %s5 = inlined_call_operand.vmem [shape: f32[5,1,128], index: 5, kind: input, shape index: {}]
  %s6 = inlined_call_operand.vmem [shape: f32[5,1,128], index: 6, kind: input, shape index: {}]
  %s7 = inlined_call_operand.vmem [shape: f32[5,1,128], index: 7, kind: input, shape index: {}]
  %s8 = inlined_call_operand.hbm [shape: bf16[5,128,128], index: 8, kind: input, shape index: {}]
  %s9 = inlined_call_operand.vmem [shape: f32[5,1,128], index: 9, kind: input, shape index: {}]
  %s10 = inlined_call_operand.vmem [shape: f32[5,1,128], index: 10, kind: input, shape index: {}]
  %s11 = inlined_call_operand.vmem [shape: f32[5,1,128], index: 11, kind: input, shape index: {}]
  %s12 = inlined_call_operand.hbm [shape: bf16[640,128], index: 12, kind: input, shape index: {}]
  %s13 = inlined_call_operand.vmem [shape: f32[1,128], index: 13, kind: input, shape index: {}]
  %s14 = inlined_call_operand.vmem [shape: bf16[128,128], index: 14, kind: input, shape index: {}]
  %s15 = inlined_call_operand.vmem [shape: f32[1,128], index: 15, kind: input, shape index: {}]
  %s16 = inlined_call_operand.vmem [shape: f32[1,128], index: 16, kind: input, shape index: {}]
  %s17 = inlined_call_operand.vmem [shape: f32[1,128], index: 17, kind: input, shape index: {}]
  %s18 = inlined_call_operand.vmem [shape: bf16[128,128], index: 18, kind: input, shape index: {}]
  %s19 = inlined_call_operand.vmem [shape: f32[1,128], index: 19, kind: input, shape index: {}]
  %s20 = inlined_call_operand.vmem [shape: f32[1,128], index: 20, kind: input, shape index: {}]
  %s21 = inlined_call_operand.vmem [shape: f32[1,128], index: 21, kind: input, shape index: {}]
  %s22 = inlined_call_operand.hbm [shape: bf16[128,128], index: 22, kind: input, shape index: {}]
  %s23 = inlined_call_operand.vmem [shape: f32[1,128], index: 23, kind: input, shape index: {}]
  %s24 = inlined_call_operand.vmem [shape: f32[8,640], index: 24, kind: output, shape index: {0}]
  %s25 = inlined_call_operand.vmem [shape: f32[8,128], index: 25, kind: output, shape index: {1}]
  %26 = xla_tuple %s24, %s25
  %s27 = sld [smem:[#allocation0]]
  $region126: #{ginet_forward.1} parent=0
    _
  %s29 = ssub.s32 1, %s27
  %s30 = scalar_select 0, %s29, %s27
  $region1: #{ginet_forward.1} parent=0
    #allocation2 [shape = 'u8[163840]{0}', space=vmem, size = 0x28000, scoped, tag = 'input window, operand 8, single buffered']
    #allocation3 [shape = 's32[1]{0}', space=sflag, size = 0x4, scoped, tag = 'scoped memory for ginet_forward.1']
    #allocation4 [shape = 'u8[163840]{0}', space=vmem, size = 0x28000, scoped, tag = 'input window, operand 12, single buffered']
    #allocation5 [shape = 's32[1]{0}', space=sflag, size = 0x4, scoped, tag = 'scoped memory for ginet_forward.1']
    #allocation6 [shape = 'u8[32768]{0}', space=vmem, size = 0x8000, scoped, tag = 'input window, operand 22, single buffered']
    %31 = vsyncpa [#allocation3], 0
    %32 = vsyncpa [#allocation5], 0
    // Predicated region
    $region2: #{ginet_forward.1} parent=1 // pred_check
      _
    $region3: #{ginet_forward.1} parent=1 // pred_check_branch
      %34 = sbr.rel (0) target = $region5
    $region4: #{ginet_forward.1} parent=1 // pred_region
      _
    $region5: #{ginet_forward.1} parent=1 // pred_fallthru
      _
    // Predicated region
    $region6: #{ginet_forward.1} parent=1 // pred_check
      _
    $region7: #{ginet_forward.1} parent=1 // pred_check_branch
      %36 = sbr.rel (0) target = $region9
    $region8: #{ginet_forward.1} parent=1 // pred_region
      _
    $region9: #{ginet_forward.1} parent=1 // pred_fallthru
      _
    // Predicated region
    $region10: #{ginet_forward.1} parent=1 // pred_check
      _
    $region11: #{ginet_forward.1} parent=1 // pred_check_branch
      %38 = sbr.rel (0) target = $region13
    $region12: #{ginet_forward.1} parent=1 // pred_region
      _
    $region13: #{ginet_forward.1} parent=1 // pred_fallthru
      _
    // Predicated region
    $region14: #{ginet_forward.1} parent=1 // pred_check
      _
    $region15: #{ginet_forward.1} parent=1 // pred_check_branch
      %40 = sbr.rel (0) target = $region17
    $region16: #{ginet_forward.1} parent=1 // pred_region
      _
    $region17: #{ginet_forward.1} parent=1 // pred_fallthru
      _
    // Predicated region
    $region18: #{ginet_forward.1} parent=1 // pred_check
      _
    $region19: #{ginet_forward.1} parent=1 // pred_check_branch
      %42 = sbr.rel (0) target = $region21
    $region20: #{ginet_forward.1} parent=1 // pred_region
      _
    $region21: #{ginet_forward.1} parent=1 // pred_fallthru
      _
    // Predicated region
    $region22: #{ginet_forward.1} parent=1 // pred_check
      _
    $region23: #{ginet_forward.1} parent=1 // pred_check_branch
      %44 = sbr.rel (0) target = $region25
    $region24: #{ginet_forward.1} parent=1 // pred_region
      _
    $region25: #{ginet_forward.1} parent=1 // pred_fallthru
      _
    // Predicated region
    $region26: #{ginet_forward.1} parent=1 // pred_check
      _
    $region27: #{ginet_forward.1} parent=1 // pred_check_branch
      %46 = sbr.rel (0) target = $region29
    $region28: #{ginet_forward.1} parent=1 // pred_region
      _
    $region29: #{ginet_forward.1} parent=1 // pred_fallthru
      _
    // Predicated region
    $region30: #{ginet_forward.1} parent=1 // pred_check
      _
    $region31: #{ginet_forward.1} parent=1 // pred_check_branch
      %48 = sbr.rel (0) target = $region33
    $region32: #{ginet_forward.1} parent=1 // pred_region
      _
    $region33: #{ginet_forward.1} parent=1 // pred_fallthru
      _
    // Predicated region
    $region34: #{ginet_forward.1} parent=1 // pred_check
      _
    $region35: #{ginet_forward.1} parent=1 // pred_check_branch
      %50 = sbr.rel (0) target = $region37
    $region36: #{ginet_forward.1} parent=1 // pred_region
      %52 = vsyncadd [#allocation3], 0
      %s53 = sshll.u32 %s8, 4
      %s54 = int_to_ptr.hbm [resolvable:$true] %s53
      %s55 = sshll.u32 [#allocation2], 4
      %s56 = int_to_ptr.vmem [resolvable:$true] %s55
      %61 = dma.hbm_to_vmem [thread:$0]  %s54, 5120, %s56, [#allocation3], 64, 64, 4
    $region37: #{ginet_forward.1} parent=1 // pred_fallthru
      _
    // Predicated region
    $region38: #{ginet_forward.1} parent=1 // pred_check
      _
    $region39: #{ginet_forward.1} parent=1 // pred_check_branch
      %63 = sbr.rel (0) target = $region41
    $region40: #{ginet_forward.1} parent=1 // pred_region
      _
    $region41: #{ginet_forward.1} parent=1 // pred_fallthru
      _
    // Predicated region
    $region42: #{ginet_forward.1} parent=1 // pred_check
      _
    $region43: #{ginet_forward.1} parent=1 // pred_check_branch
      %65 = sbr.rel (0) target = $region45
    $region44: #{ginet_forward.1} parent=1 // pred_region
      _
    $region45: #{ginet_forward.1} parent=1 // pred_fallthru
      _
    // Predicated region
    $region46: #{ginet_forward.1} parent=1 // pred_check
      _
    $region47: #{ginet_forward.1} parent=1 // pred_check_branch
      %67 = sbr.rel (0) target = $region49
    $region48: #{ginet_forward.1} parent=1 // pred_region
      _
    $region49: #{ginet_forward.1} parent=1 // pred_fallthru
      _
    // Predicated region
    $region50: #{ginet_forward.1} parent=1 // pred_check
      _
    $region51: #{ginet_forward.1} parent=1 // pred_check_branch
      %69 = sbr.rel (0) target = $region53
    $region52: #{ginet_forward.1} parent=1 // pred_region
      %71 = vsyncadd [#allocation5], 0
      %s72 = sshll.u32 %s12, 4
      %s73 = int_to_ptr.hbm [resolvable:$true] %s72
      %s74 = sshll.u32 [#allocation4], 4
      %s75 = int_to_ptr.vmem [resolvable:$true] %s74
      %80 = dma.hbm_to_vmem [thread:$0]  %s73, 5120, %s75, [#allocation5], 64, 64, 4
    $region53: #{ginet_forward.1} parent=1 // pred_fallthru
      _
    // Predicated region
    $region54: #{ginet_forward.1} parent=1 // pred_check
      _
    $region55: #{ginet_forward.1} parent=1 // pred_check_branch
      %82 = sbr.rel (0) target = $region57
    $region56: #{ginet_forward.1} parent=1 // pred_region
      _
    $region57: #{ginet_forward.1} parent=1 // pred_fallthru
      _
    // Predicated region
    $region58: #{ginet_forward.1} parent=1 // pred_check
      _
    $region59: #{ginet_forward.1} parent=1 // pred_check_branch
      %84 = sbr.rel (0) target = $region61
    $region60: #{ginet_forward.1} parent=1 // pred_region
      _
    $region61: #{ginet_forward.1} parent=1 // pred_fallthru
      _
    // Predicated region
    $region62: #{ginet_forward.1} parent=1 // pred_check
      _
    $region63: #{ginet_forward.1} parent=1 // pred_check_branch
      %86 = sbr.rel (0) target = $region65
    $region64: #{ginet_forward.1} parent=1 // pred_region
      _
    $region65: #{ginet_forward.1} parent=1 // pred_fallthru
      _
    // Predicated region
    $region66: #{ginet_forward.1} parent=1 // pred_check
      _
    $region67: #{ginet_forward.1} parent=1 // pred_check_branch
      %88 = sbr.rel (0) target = $region69
    $region68: #{ginet_forward.1} parent=1 // pred_region
      _
    $region69: #{ginet_forward.1} parent=1 // pred_fallthru
      _
    // Predicated region
    $region70: #{ginet_forward.1} parent=1 // pred_check
      _
    $region71: #{ginet_forward.1} parent=1 // pred_check_branch
      %90 = sbr.rel (0) target = $region73
    $region72: #{ginet_forward.1} parent=1 // pred_region
      _
    $region73: #{ginet_forward.1} parent=1 // pred_fallthru
      _
    // Predicated region
    $region74: #{ginet_forward.1} parent=1 // pred_check
      _
    $region75: #{ginet_forward.1} parent=1 // pred_check_branch
      %92 = sbr.rel (0) target = $region77
    $region76: #{ginet_forward.1} parent=1 // pred_region
      _
    $region77: #{ginet_forward.1} parent=1 // pred_fallthru
      _
    // Predicated region
    $region78: #{ginet_forward.1} parent=1 // pred_check
      _
    $region79: #{ginet_forward.1} parent=1 // pred_check_branch
      %94 = sbr.rel (0) target = $region81
    $region80: #{ginet_forward.1} parent=1 // pred_region
      _
    $region81: #{ginet_forward.1} parent=1 // pred_fallthru
      _
    // Predicated region
    $region82: #{ginet_forward.1} parent=1 // pred_check
      _
    $region83: #{ginet_forward.1} parent=1 // pred_check_branch
      %96 = sbr.rel (0) target = $region85
    $region84: #{ginet_forward.1} parent=1 // pred_region
      _
    $region85: #{ginet_forward.1} parent=1 // pred_fallthru
      _
    // Predicated region
    $region86: #{ginet_forward.1} parent=1 // pred_check
      _
    $region87: #{ginet_forward.1} parent=1 // pred_check_branch
      %98 = sbr.rel (0) target = $region89
    $region88: #{ginet_forward.1} parent=1 // pred_region
      _
    $region89: #{ginet_forward.1} parent=1 // pred_fallthru
      _
    // Predicated region
    $region90: #{ginet_forward.1} parent=1 // pred_check
      _
    $region91: #{ginet_forward.1} parent=1 // pred_check_branch
      %100 = sbr.rel (0) target = $region93
    $region92: #{ginet_forward.1} parent=1 // pred_region
      %102 = vsyncadd [#allocation5], 0
      %s103 = sshll.u32 %s22, 4
      %s104 = int_to_ptr.hbm [resolvable:$true] %s103
      %s105 = sshll.u32 [#allocation6], 4
      %s106 = int_to_ptr.vmem [resolvable:$true] %s105
      %111 = dma.hbm_to_vmem [thread:$0]  %s104, 1024, %s106, [#allocation5], 64, 64, 4
    $region93: #{ginet_forward.1} parent=1 // pred_fallthru
      _
    // Predicated region
    $region94: #{ginet_forward.1} parent=1 // pred_check
      _
    $region95: #{ginet_forward.1} parent=1 // pred_check_branch
      %113 = sbr.rel (0) target = $region97
    $region96: #{ginet_forward.1} parent=1 // pred_region
      _
    $region97: #{ginet_forward.1} parent=1 // pred_fallthru
      _
    // Predicated region
    $region98: #{ginet_forward.1} parent=1 // pred_check
      _
    $region99: #{ginet_forward.1} parent=1 // pred_check_branch
      %115 = sbr.rel (0) target = $region101
    $region100: #{ginet_forward.1} parent=1 // pred_region
      %117 = dma.done [#allocation3], 5120
    $region101: #{ginet_forward.1} parent=1 // pred_fallthru
      _
    // Predicated region
    $region102: #{ginet_forward.1} parent=1 // pred_check
      _
    $region103: #{ginet_forward.1} parent=1 // pred_check_branch
      %119 = sbr.rel (0) target = $region105
    $region104: #{ginet_forward.1} parent=1 // pred_region
      %121 = dma.done [#allocation5], 5120
    $region105: #{ginet_forward.1} parent=1 // pred_fallthru
      _
    // Predicated region
    $region106: #{ginet_forward.1} parent=1 // pred_check
      _
    $region107: #{ginet_forward.1} parent=1 // pred_check_branch
      %123 = sbr.rel (0) target = $region109
    $region108: #{ginet_forward.1} parent=1 // pred_region
      %125 = dma.done [#allocation5], 1024
    $region109: #{ginet_forward.1} parent=1 // pred_fallthru
      _
    %v127 = vld [vmem:[%s1] sm:$0x1]
    %v128 = vld [vmem:[%s1 + $0x1] sm:$0x1]
    %v129 = vld [vmem:[%s1 + $0x2] sm:$0x1]
    %v130 = vld [vmem:[%s1 + $0x3] sm:$0x1]
    %v131 = vlaneseq
    %v132 = vshrl.u32 %v131, 7
    %v133 = vadd.s32 %v132, 8
    %v134 = vperm.slane %v128, 0
    %vm135 = vcmp.eq.s32.totalorder %v132, %v134
    %vm136 = vcmp.eq.s32.totalorder %v133, %v134
    %v137 = vsel %vm135, 1, 0
    %v138 = vsel %vm136, 1, 0
    %v139 = vcvt.s32.f32 %v137
    %v140 = vcvt.s32.f32 %v138
    %v141 = vpack.c.bf16 %v140, %v139
    %v142 = vperm.slane %v127, 0
    %vm143 = vcmp.eq.s32.totalorder %v132, %v142
    %vm144 = vcmp.eq.s32.totalorder %v133, %v142
    %v145 = vsel %vm143, 1, 0
    %v146 = vsel %vm144, 1, 0
    %v147 = vcvt.s32.f32 %v145
    %v148 = vcvt.s32.f32 %v146
    %v149 = vpack.c.bf16 %v148, %v147
    %vm150 = vcmp.lt.s32.totalorder %v132, 8
    %vm151 = vcmp.lt.s32.totalorder %v133, 8
    %v152 = vadd.s32 %v130, 8
    %v153 = vperm.slane %v129, 0
    %v154 = vperm.slane %v152, 0
    %v155 = vsel %vm150, %v153, %v154
    %v156 = vsel %vm151, %v153, %v154
    %vm157 = vcmp.eq.s32.totalorder %v132, %v155
    %vm158 = vcmp.eq.s32.totalorder %v133, %v156
    %v159 = vsel %vm157, 1, 0
    %v160 = vsel %vm158, 1, 0
    %v161 = vcvt.s32.f32 %v159
    %v162 = vcvt.s32.f32 %v160
    %v163 = vpack.c.bf16 %v162, %v161
    %164 = vmatpush.bf16.xpose.msra.mxu0 0
    %165 = vmatpush.bf16.xpose.msra.mxu0 0
    %166 = vmatpush.bf16.xpose.msra.mxu0 0
    %167 = vmatpush.bf16.xpose.msra.mxu0 0
    %168 = vmatpush.bf16.xpose.msra.mxu0 0
    %169 = vmatpush.bf16.xpose.msra.mxu0 0
    %170 = vmatpush.bf16.xpose.msra.mxu0 0
    %171 = vmatpush.bf16.xpose.msra.mxu0 %v149
    %172 = vmatmul.bf16.gmra.mxu0 %v141
    %v173 = vpop.f32.mrf.mxu0
    %v174 = vadd.f32 0.0, %v173
    %v175 = vpop.f32.mrf.mxu0
    %v176 = vadd.f32 0.0, %v175
    %177 = vdwg.mxu0
    %178 = vmatpush.bf16.xpose.msra.mxu0 0
    %179 = vmatpush.bf16.xpose.msra.mxu0 0
    %180 = vmatpush.bf16.xpose.msra.mxu0 0
    %181 = vmatpush.bf16.xpose.msra.mxu0 0
    %182 = vmatpush.bf16.xpose.msra.mxu0 0
    %183 = vmatpush.bf16.xpose.msra.mxu0 0
    %184 = vmatpush.bf16.xpose.msra.mxu0 0
    %185 = vmatpush.bf16.xpose.msra.mxu0 %v163
    %186 = vmatmul.bf16.gmra.mxu0 %v141
    %v187 = vpop.f32.mrf.mxu0
    %v188 = vadd.f32 0.0, %v187
    %v189 = vpop.f32.mrf.mxu0
    %v190 = vadd.f32 0.0, %v189
    %191 = vdwg.mxu0
    %v192 = vpack.c.bf16 %v176, %v174
    %v193 = vld [vmem:[%s2] sm:$0x1]
    %v194 = vperm.slane %v193, 0
    %vm195 = vcmp.eq.s32.totalorder %v132, %v194
    %v196 = vsel %vm195, 1, 0
    %v197 = vcvt.s32.f32 %v196
    %vm198 = vcmask 130048
    %v199 = vsel %vm198, %v197, 0.0
    %200 = vadd.xlane.f32.xlu0 %v199
    %v201 = vpop.xlane.xlu0 %200
    %v202 = vmax.f32 %v201, 1.0
    %v203 = vrcp.pop %v202
    %v204 = vmul.f32 %v202, %v203
    %v205 = vsub.f32 1.0, %v204
    %v206 = vmul.f32 %v203, %v205
    %v207 = vadd.f32 %v203, %v206
    %vm208 = vweird.f32 %v202
    %vm209 = vweird.f32 %v203
    %vm210 = vmor %vm208, %vm209
    %v211 = vsel %vm210, %v203, %v207
    %v212 = vand.u32 2147483647, %v202
    %vm213 = vcmp.eq.f32.partialorder %v212, 8.507059e+37
    %v214 = vand.u32 %v202, 2147483648
    %v215 = vor.u32 1.1754944e-38, %v214
    %v216 = vsel %vm213, %v215, %v211
    %v217 = vmul.f32 %v197, %v216
    %v218 = vld [vmem:[%s3] sm:$0xff]
    %v219 = vld [vmem:[%s3 + $0x8] sm:$0xff]
    %v220 = vld [vmem:[%s3 + $0x10] sm:$0xff]
    %v221 = vld [vmem:[%s3 + $0x18] sm:$0xff]
    %v222 = vld [vmem:[%s3 + $0x20] sm:$0xff]
    %v223 = vld [vmem:[%s3 + $0x28] sm:$0xff]
    %v224 = vld [vmem:[%s3 + $0x30] sm:$0xff]
    %v225 = vld [vmem:[%s3 + $0x38] sm:$0xff]
    %v226 = vld [vmem:[%s3 + $0x40] sm:$0xff]
    %v227 = vld [vmem:[%s3 + $0x48] sm:$0xff]
    %v229 = vsel %vm198, %v188, 0
    %v232 = vsel %vm198, %v190, 0
    %234 = vmatpush.msra.mxu0 0.0
    %235 = vmatpush.msra.mxu0 0.0
    %236 = vmatpush.msra.mxu0 0.0
    %237 = vmatpush.msra.mxu0 0.0
    %238 = vmatpush.msra.mxu0 0.0
    %239 = vmatpush.msra.mxu0 0.0
    %240 = vmatpush.msra.mxu0 0.0
    %241 = vmatpush.msra.mxu0 0.0
    %242 = vmatpush.msra.mxu0 0.0
    %243 = vmatpush.msra.mxu0 0.0
    %244 = vmatpush.msra.mxu0 0.0
    %245 = vmatpush.msra.mxu0 0.0
    %246 = vmatpush.msra.mxu0 0.0
    %247 = vmatpush.msra.mxu0 0.0
    %248 = vmatpush.msra.mxu0 %v223
    %249 = vmatpush.msra.mxu0 %v218
    %250 = vmatmul.f32.gmra.mxu0 %v229
    %v251 = vpop.f32.mrf.mxu0
    %v252 = vadd.f32 0.0, %v251
    %253 = vmatmul.f32.gmra.mxu0 %v232
    %v254 = vpop.f32.mrf.mxu0
    %v255 = vadd.f32 0.0, %v254
    %256 = vdwg.mxu0
    %257 = vmatpush.msra.mxu0 0.0
    %258 = vmatpush.msra.mxu0 0.0
    %259 = vmatpush.msra.mxu0 0.0
    %260 = vmatpush.msra.mxu0 0.0
    %261 = vmatpush.msra.mxu0 0.0
    %262 = vmatpush.msra.mxu0 0.0
    %263 = vmatpush.msra.mxu0 0.0
    %264 = vmatpush.msra.mxu0 0.0
    %265 = vmatpush.msra.mxu0 0.0
    %266 = vmatpush.msra.mxu0 0.0
    %267 = vmatpush.msra.mxu0 0.0
    %268 = vmatpush.msra.mxu0 0.0
    %269 = vmatpush.msra.mxu0 0.0
    %270 = vmatpush.msra.mxu0 0.0
    %271 = vmatpush.msra.mxu0 %v224
    %272 = vmatpush.msra.mxu0 %v219
    %273 = vmatmul.f32.gmra.mxu0 %v229
    %v274 = vpop.f32.mrf.mxu0
    %v275 = vadd.f32 0.0, %v274
    %276 = vmatmul.f32.gmra.mxu0 %v232
    %v277 = vpop.f32.mrf.mxu0
    %v278 = vadd.f32 0.0, %v277
    %279 = vdwg.mxu0
    %280 = vmatpush.msra.mxu0 0.0
    %281 = vmatpush.msra.mxu0 0.0
    %282 = vmatpush.msra.mxu0 0.0
    %283 = vmatpush.msra.mxu0 0.0
    %284 = vmatpush.msra.mxu0 0.0
    %285 = vmatpush.msra.mxu0 0.0
    %286 = vmatpush.msra.mxu0 0.0
    %287 = vmatpush.msra.mxu0 0.0
    %288 = vmatpush.msra.mxu0 0.0
    %289 = vmatpush.msra.mxu0 0.0
    %290 = vmatpush.msra.mxu0 0.0
    %291 = vmatpush.msra.mxu0 0.0
    %292 = vmatpush.msra.mxu0 0.0
    %293 = vmatpush.msra.mxu0 0.0
    %294 = vmatpush.msra.mxu0 %v225
    %295 = vmatpush.msra.mxu0 %v220
    %296 = vmatmul.f32.gmra.mxu0 %v229
    %v297 = vpop.f32.mrf.mxu0
    %v298 = vadd.f32 0.0, %v297
    %299 = vmatmul.f32.gmra.mxu0 %v232
    %v300 = vpop.f32.mrf.mxu0
    %v301 = vadd.f32 0.0, %v300
    %302 = vdwg.mxu0
    %303 = vmatpush.msra.mxu0 0.0
    %304 = vmatpush.msra.mxu0 0.0
    %305 = vmatpush.msra.mxu0 0.0
    %306 = vmatpush.msra.mxu0 0.0
    %307 = vmatpush.msra.mxu0 0.0
    %308 = vmatpush.msra.mxu0 0.0
    %309 = vmatpush.msra.mxu0 0.0
    %310 = vmatpush.msra.mxu0 0.0
    %311 = vmatpush.msra.mxu0 0.0
    %312 = vmatpush.msra.mxu0 0.0
    %313 = vmatpush.msra.mxu0 0.0
    %314 = vmatpush.msra.mxu0 0.0
    %315 = vmatpush.msra.mxu0 0.0
    %316 = vmatpush.msra.mxu0 0.0
    %317 = vmatpush.msra.mxu0 %v226
    %318 = vmatpush.msra.mxu0 %v221
    %319 = vmatmul.f32.gmra.mxu0 %v229
    %v320 = vpop.f32.mrf.mxu0
    %v321 = vadd.f32 0.0, %v320
    %322 = vmatmul.f32.gmra.mxu0 %v232
    %v323 = vpop.f32.mrf.mxu0
    %v324 = vadd.f32 0.0, %v323
    %325 = vdwg.mxu0
    %326 = vmatpush.msra.mxu0 0.0
    %327 = vmatpush.msra.mxu0 0.0
    %328 = vmatpush.msra.mxu0 0.0
    %329 = vmatpush.msra.mxu0 0.0
    %330 = vmatpush.msra.mxu0 0.0
    %331 = vmatpush.msra.mxu0 0.0
    %332 = vmatpush.msra.mxu0 0.0
    %333 = vmatpush.msra.mxu0 0.0
    %334 = vmatpush.msra.mxu0 0.0
    %335 = vmatpush.msra.mxu0 0.0
    %336 = vmatpush.msra.mxu0 0.0
    %337 = vmatpush.msra.mxu0 0.0
    %338 = vmatpush.msra.mxu0 0.0
    %339 = vmatpush.msra.mxu0 0.0
    %340 = vmatpush.msra.mxu0 %v227
    %341 = vmatpush.msra.mxu0 %v222
    %342 = vmatmul.f32.gmra.mxu0 %v229
    %v343 = vpop.f32.mrf.mxu0
    %v344 = vadd.f32 0.0, %v343
    %345 = vmatmul.f32.gmra.mxu0 %v232
    %v346 = vpop.f32.mrf.mxu0
    %v347 = vadd.f32 0.0, %v346
    %348 = vdwg.mxu0
    %v349 = vld [vmem:[%s0] sm:$0xff]
    %v350 = vld [vmem:[%s0 + $0x8] sm:$0xff]
    %v351 = vpack.c.bf16 %v350, %v349
    %v353 = vsel %vm198, %v192, 0
    %355 = vmatpush.bf16.msra.mxu0 0
    %356 = vmatpush.bf16.msra.mxu0 0
    %357 = vmatpush.bf16.msra.mxu0 0
    %358 = vmatpush.bf16.msra.mxu0 0
    %359 = vmatpush.bf16.msra.mxu0 0
    %360 = vmatpush.bf16.msra.mxu0 0
    %361 = vmatpush.bf16.msra.mxu0 0
    %362 = vmatpush.bf16.msra.mxu0 %v351
    %363 = vmatmul.bf16.gmra.mxu0 %v353
    %v364 = vpop.f32.mrf.mxu0
    %v365 = vadd.f32 %v252, %v364
    %v366 = vpop.f32.mrf.mxu0
    %v367 = vadd.f32 %v255, %v366
    %368 = vdwg.mxu0
    %v369 = vpack.c.bf16 %v367, %v365
    %v370 = vld [vmem:[%s4] sm:$0xf]
    %v371 = vld [vmem:[%s4 + $0x4] sm:$0xf]
    %v372 = vld [vmem:[%s4 + $0x8] sm:$0xf]
    %v373 = vld [vmem:[%s4 + $0xc] sm:$0xf]
    %v374 = vld [vmem:[%s4 + $0x10] sm:$0xf]
    %v375 = vld [vmem:[%s4 + $0x14] sm:$0xf]
    %v376 = vld [vmem:[%s4 + $0x18] sm:$0xf]
    %v377 = vld [vmem:[%s4 + $0x1c] sm:$0xf]
    %v378 = vld [vmem:[%s4 + $0x20] sm:$0xf]
    %v379 = vld [vmem:[%s4 + $0x24] sm:$0xf]
    %v380 = vld [vmem:[%s4 + $0x28] sm:$0xf]
    %v381 = vld [vmem:[%s4 + $0x2c] sm:$0xf]
    %v382 = vld [vmem:[%s4 + $0x30] sm:$0xf]
    %v383 = vld [vmem:[%s4 + $0x34] sm:$0xf]
    %v384 = vld [vmem:[%s4 + $0x38] sm:$0xf]
    %v385 = vld [vmem:[%s4 + $0x3c] sm:$0xf]
    %v386 = vld [vmem:[%s5] sm:$0x1]
    %v388 = vperm.slane %v386, 0
    %v406 = vunpack.c.l.b16 %v370
    %v407 = vunpack.c.l.b16 %v371
    %v408 = vunpack.c.l.b16 %v372
    %v409 = vunpack.c.l.b16 %v373
    %v410 = vunpack.c.l.b16 %v374
    %v411 = vunpack.c.l.b16 %v375
    %v412 = vunpack.c.l.b16 %v376
    %v413 = vunpack.c.l.b16 %v377
    %v414 = vunpack.c.l.b16 %v378
    %v415 = vunpack.c.l.b16 %v379
    %v416 = vunpack.c.l.b16 %v380
    %v417 = vunpack.c.l.b16 %v381
    %v418 = vunpack.c.l.b16 %v382
    %v419 = vunpack.c.l.b16 %v383
    %v420 = vunpack.c.l.b16 %v384
    %v421 = vunpack.c.l.b16 %v385
    %v422 = vpack.c.b16 %v407, %v406
    %v423 = vpack.c.b16 %v409, %v408
    %v424 = vpack.c.b16 %v411, %v410
    %v425 = vpack.c.b16 %v413, %v412
    %v426 = vpack.c.b16 %v415, %v414
    %v427 = vpack.c.b16 %v417, %v416
    %v428 = vpack.c.b16 %v419, %v418
    %v429 = vpack.c.b16 %v421, %v420
    %438 = vmatpush.bf16.msra.mxu0 %v429
    %439 = vmatpush.bf16.msra.mxu0 %v428
    %440 = vmatpush.bf16.msra.mxu0 %v427
    %441 = vmatpush.bf16.msra.mxu0 %v426
    %442 = vmatpush.bf16.msra.mxu0 %v425
    %443 = vmatpush.bf16.msra.mxu0 %v424
    %444 = vmatpush.bf16.msra.mxu0 %v423
    %445 = vmatpush.bf16.msra.mxu0 %v422
    %446 = vmatmul.bf16.gmra.mxu0 %v369
    %v447 = vpop.f32.mrf.mxu0
    %v448 = vadd.f32 %v388, %v447
    %v449 = vpop.f32.mrf.mxu0
    %v450 = vadd.f32 %v388, %v449
    %451 = vdwg.mxu0
    %v452 = vld [vmem:[%s6] sm:$0x1]
    %v453 = vld [vmem:[%s7] sm:$0x1]
    %v454 = vadd.f32 %v448, %v450
    %v455 = vrot.slane %v454, 4
    %v456 = vadd.f32 %v454, %v455
    %v457 = vrot.slane %v456, 2
    %v458 = vadd.f32 %v456, %v457
    %v459 = vrot.slane %v458, 1
    %v460 = vadd.f32 %v458, %v459
    %v461 = vmul.f32 %v460, 0.0625
    %v462 = vmul.f32 %v448, %v448
    %v463 = vmul.f32 %v450, %v450
    %v464 = vadd.f32 %v462, %v463
    %v465 = vrot.slane %v464, 4
    %v466 = vadd.f32 %v464, %v465
    %v467 = vrot.slane %v466, 2
    %v468 = vadd.f32 %v466, %v467
    %v469 = vrot.slane %v468, 1
    %v470 = vadd.f32 %v468, %v469
    %v471 = vmul.f32 %v470, 0.0625
    %v472 = vmul.f32 %v461, %v461
    %v473 = vsub.f32 %v471, %v472
    %v474 = vmax.f32 %v473, 0.0
    %v475 = vsub.f32 %v448, %v461
    %v476 = vsub.f32 %v450, %v461
    %v477 = vadd.f32 %v474, 1e-05
    %v478 = vrsqrt.pop %v477
    %v479 = vmul.f32 %v478, %v477
    %v480 = vmul.f32 %v479, %v478
    %v481 = vmul.f32 0.5, %v480
    %v482 = vsub.f32 1.5, %v481
    %v483 = vmul.f32 %v478, %v482
    %vm484 = vweird.f32 %v477
    %vm485 = vweird.f32 %v478
    %vm486 = vmor %vm484, %vm485
    %v487 = vsel %vm486, %v478, %v483
    %v488 = vmul.f32 %v475, %v487
    %v489 = vmul.f32 %v476, %v487
    %v491 = vperm.slane %v452, 0
    %v493 = vmul.f32 %v488, %v491
    %v494 = vmul.f32 %v489, %v491
    %v496 = vperm.slane %v453, 0
    %v498 = vadd.f32 %v493, %v496
    %v499 = vadd.f32 %v494, %v496
    %v500 = vmax.f32 %v498, 0.0
    %v501 = vmax.f32 %v499, 0.0
    %v502 = vpack.c.bf16 %v501, %v500
    %v503 = vld [vmem:[#allocation2] sm:$0xf]
    %v504 = vld [vmem:[#allocation2 + $0x4] sm:$0xf]
    %v505 = vld [vmem:[#allocation2 + $0x8] sm:$0xf]
    %v506 = vld [vmem:[#allocation2 + $0xc] sm:$0xf]
    %v507 = vld [vmem:[#allocation2 + $0x10] sm:$0xf]
    %v508 = vld [vmem:[#allocation2 + $0x14] sm:$0xf]
    %v509 = vld [vmem:[#allocation2 + $0x18] sm:$0xf]
    %v510 = vld [vmem:[#allocation2 + $0x1c] sm:$0xf]
    %v511 = vld [vmem:[#allocation2 + $0x20] sm:$0xf]
    %v512 = vld [vmem:[#allocation2 + $0x24] sm:$0xf]
    %v513 = vld [vmem:[#allocation2 + $0x28] sm:$0xf]
    %v514 = vld [vmem:[#allocation2 + $0x2c] sm:$0xf]
    %v515 = vld [vmem:[#allocation2 + $0x30] sm:$0xf]
    %v516 = vld [vmem:[#allocation2 + $0x34] sm:$0xf]
    %v517 = vld [vmem:[#allocation2 + $0x38] sm:$0xf]
    %v518 = vld [vmem:[#allocation2 + $0x3c] sm:$0xf]
    %v519 = vld [vmem:[%s9] sm:$0x1]
    %v521 = vperm.slane %v519, 0
    %v539 = vunpack.c.l.b16 %v503
    %v540 = vunpack.c.l.b16 %v504
    %v541 = vunpack.c.l.b16 %v505
    %v542 = vunpack.c.l.b16 %v506
    %v543 = vunpack.c.l.b16 %v507
    %v544 = vunpack.c.l.b16 %v508
    %v545 = vunpack.c.l.b16 %v509
    %v546 = vunpack.c.l.b16 %v510
    %v547 = vunpack.c.l.b16 %v511
    %v548 = vunpack.c.l.b16 %v512
    %v549 = vunpack.c.l.b16 %v513
    %v550 = vunpack.c.l.b16 %v514
    %v551 = vunpack.c.l.b16 %v515
    %v552 = vunpack.c.l.b16 %v516
    %v553 = vunpack.c.l.b16 %v517
    %v554 = vunpack.c.l.b16 %v518
    %v555 = vpack.c.b16 %v540, %v539
    %v556 = vpack.c.b16 %v542, %v541
    %v557 = vpack.c.b16 %v544, %v543
    %v558 = vpack.c.b16 %v546, %v545
    %v559 = vpack.c.b16 %v548, %v547
    %v560 = vpack.c.b16 %v550, %v549
    %v561 = vpack.c.b16 %v552, %v551
    %v562 = vpack.c.b16 %v554, %v553
    %571 = vmatpush.bf16.msra.mxu0 %v562
    %572 = vmatpush.bf16.msra.mxu0 %v561
    %573 = vmatpush.bf16.msra.mxu0 %v560
    %574 = vmatpush.bf16.msra.mxu0 %v559
    %575 = vmatpush.bf16.msra.mxu0 %v558
    %576 = vmatpush.bf16.msra.mxu0 %v557
    %577 = vmatpush.bf16.msra.mxu0 %v556
    %578 = vmatpush.bf16.msra.mxu0 %v555
    %579 = vmatmul.bf16.gmra.mxu0 %v502
    %v580 = vpop.f32.mrf.mxu0
    %v581 = vadd.f32 %v521, %v580
    %v582 = vpop.f32.mrf.mxu0
    %v583 = vadd.f32 %v521, %v582
    %584 = vdwg.mxu0
    %v585 = vmax.f32 %v581, 0.0
    %v586 = vmax.f32 %v583, 0.0
    %v587 = vld [vmem:[%s10] sm:$0x1]
    %v588 = vld [vmem:[%s11] sm:$0x1]
    %v589 = vadd.f32 %v585, %v586
    %v590 = vrot.slane %v589, 4
    %v591 = vadd.f32 %v589, %v590
    %v592 = vrot.slane %v591, 2
    %v593 = vadd.f32 %v591, %v592
    %v594 = vrot.slane %v593, 1
    %v595 = vadd.f32 %v593, %v594
    %v596 = vmul.f32 %v595, 0.0625
    %v597 = vmul.f32 %v585, %v585
    %v598 = vmul.f32 %v586, %v586
    %v599 = vadd.f32 %v597, %v598
    %v600 = vrot.slane %v599, 4
    %v601 = vadd.f32 %v599, %v600
    %v602 = vrot.slane %v601, 2
    %v603 = vadd.f32 %v601, %v602
    %v604 = vrot.slane %v603, 1
    %v605 = vadd.f32 %v603, %v604
    %v606 = vmul.f32 %v605, 0.0625
    %v607 = vmul.f32 %v596, %v596
    %v608 = vsub.f32 %v606, %v607
    %v609 = vmax.f32 %v608, 0.0
    %v610 = vsub.f32 %v585, %v596
    %v611 = vsub.f32 %v586, %v596
    %v612 = vadd.f32 %v609, 1e-05
    %v613 = vrsqrt.pop %v612
    %v614 = vmul.f32 %v613, %v612
    %v615 = vmul.f32 %v614, %v613
    %v616 = vmul.f32 0.5, %v615
    %v617 = vsub.f32 1.5, %v616
    %v618 = vmul.f32 %v613, %v617
    %vm619 = vweird.f32 %v612
    %vm620 = vweird.f32 %v613
    %vm621 = vmor %vm619, %vm620
    %v622 = vsel %vm621, %v613, %v618
    %v623 = vmul.f32 %v610, %v622
    %v624 = vmul.f32 %v611, %v622
    %v626 = vperm.slane %v587, 0
    %v628 = vmul.f32 %v623, %v626
    %v629 = vmul.f32 %v624, %v626
    %v631 = vperm.slane %v588, 0
    %v633 = vadd.f32 %v628, %v631
    %v634 = vadd.f32 %v629, %v631
    %v635 = vmax.f32 %v633, 0.0
    %v636 = vmax.f32 %v634, 0.0
    %v638 = vsel %vm198, %v217, 0
    %640 = vmatpush.msra.mxu0 0.0
    %641 = vmatpush.msra.mxu0 0.0
    %642 = vmatpush.msra.mxu0 0.0
    %643 = vmatpush.msra.mxu0 0.0
    %644 = vmatpush.msra.mxu0 0.0
    %645 = vmatpush.msra.mxu0 0.0
    %646 = vmatpush.msra.mxu0 0.0
    %647 = vmatpush.msra.mxu0 0.0
    %648 = vmatpush.msra.mxu0 0.0
    %649 = vmatpush.msra.mxu0 0.0
    %650 = vmatpush.msra.mxu0 0.0
    %651 = vmatpush.msra.mxu0 0.0
    %652 = vmatpush.msra.mxu0 0.0
    %653 = vmatpush.msra.mxu0 0.0
    %654 = vmatpush.msra.mxu0 %v636
    %655 = vmatpush.msra.mxu0 %v635
    %656 = vmatmul.f32.gmra.mxu0 %v638
    %v657 = vpop.f32.mrf.mxu0
    %v658 = vadd.f32 0.0, %v657
    %659 = vdwg.mxu0
    %660 = vst [vmem:[%s24] sm:$0xff] %v658
    %v661 = vpack.c.bf16 %v636, %v635
    %662 = vmatpush.bf16.msra.mxu0 0
    %663 = vmatpush.bf16.msra.mxu0 0
    %664 = vmatpush.bf16.msra.mxu0 0
    %665 = vmatpush.bf16.msra.mxu0 0
    %666 = vmatpush.bf16.msra.mxu0 0
    %667 = vmatpush.bf16.msra.mxu0 0
    %668 = vmatpush.bf16.msra.mxu0 0
    %669 = vmatpush.bf16.msra.mxu0 %v661
    %670 = vmatmul.bf16.gmra.mxu0 %v353
    %v671 = vpop.f32.mrf.mxu0
    %v672 = vadd.f32 %v275, %v671
    %v673 = vpop.f32.mrf.mxu0
    %v674 = vadd.f32 %v278, %v673
    %675 = vdwg.mxu0
    %v676 = vpack.c.bf16 %v674, %v672
    %s677 = scalar_lea.vmem %s4, 64
    %v678 = vld [vmem:[%s677] sm:$0xf]
    %v679 = vld [vmem:[%s677 + $0x4] sm:$0xf]
    %v680 = vld [vmem:[%s677 + $0x8] sm:$0xf]
    %v681 = vld [vmem:[%s677 + $0xc] sm:$0xf]
    %v682 = vld [vmem:[%s677 + $0x10] sm:$0xf]
    %v683 = vld [vmem:[%s677 + $0x14] sm:$0xf]
    %v684 = vld [vmem:[%s677 + $0x18] sm:$0xf]
    %v685 = vld [vmem:[%s677 + $0x1c] sm:$0xf]
    %v686 = vld [vmem:[%s677 + $0x20] sm:$0xf]
    %v687 = vld [vmem:[%s677 + $0x24] sm:$0xf]
    %v688 = vld [vmem:[%s677 + $0x28] sm:$0xf]
    %v689 = vld [vmem:[%s677 + $0x2c] sm:$0xf]
    %v690 = vld [vmem:[%s677 + $0x30] sm:$0xf]
    %v691 = vld [vmem:[%s677 + $0x34] sm:$0xf]
    %v692 = vld [vmem:[%s677 + $0x38] sm:$0xf]
    %v693 = vld [vmem:[%s677 + $0x3c] sm:$0xf]
    %s694 = scalar_lea.vmem %s5, 1
    %v695 = vld [vmem:[%s694] sm:$0x1]
    %v697 = vperm.slane %v695, 0
    %v715 = vunpack.c.l.b16 %v678
    %v716 = vunpack.c.l.b16 %v679
    %v717 = vunpack.c.l.b16 %v680
    %v718 = vunpack.c.l.b16 %v681
    %v719 = vunpack.c.l.b16 %v682
    %v720 = vunpack.c.l.b16 %v683
    %v721 = vunpack.c.l.b16 %v684
    %v722 = vunpack.c.l.b16 %v685
    %v723 = vunpack.c.l.b16 %v686
    %v724 = vunpack.c.l.b16 %v687
    %v725 = vunpack.c.l.b16 %v688
    %v726 = vunpack.c.l.b16 %v689
    %v727 = vunpack.c.l.b16 %v690
    %v728 = vunpack.c.l.b16 %v691
    %v729 = vunpack.c.l.b16 %v692
    %v730 = vunpack.c.l.b16 %v693
    %v731 = vpack.c.b16 %v716, %v715
    %v732 = vpack.c.b16 %v718, %v717
    %v733 = vpack.c.b16 %v720, %v719
    %v734 = vpack.c.b16 %v722, %v721
    %v735 = vpack.c.b16 %v724, %v723
    %v736 = vpack.c.b16 %v726, %v725
    %v737 = vpack.c.b16 %v728, %v727
    %v738 = vpack.c.b16 %v730, %v729
    %747 = vmatpush.bf16.msra.mxu0 %v738
    %748 = vmatpush.bf16.msra.mxu0 %v737
    %749 = vmatpush.bf16.msra.mxu0 %v736
    %750 = vmatpush.bf16.msra.mxu0 %v735
    %751 = vmatpush.bf16.msra.mxu0 %v734
    %752 = vmatpush.bf16.msra.mxu0 %v733
    %753 = vmatpush.bf16.msra.mxu0 %v732
    %754 = vmatpush.bf16.msra.mxu0 %v731
    %755 = vmatmul.bf16.gmra.mxu0 %v676
    %v756 = vpop.f32.mrf.mxu0
    %v757 = vadd.f32 %v697, %v756
    %v758 = vpop.f32.mrf.mxu0
    %v759 = vadd.f32 %v697, %v758
    %760 = vdwg.mxu0
    %s761 = scalar_lea.vmem %s6, 1
    %v762 = vld [vmem:[%s761] sm:$0x1]
    %s763 = scalar_lea.vmem %s7, 1
    %v764 = vld [vmem:[%s763] sm:$0x1]
    %v765 = vadd.f32 %v757, %v759
    %v766 = vrot.slane %v765, 4
    %v767 = vadd.f32 %v765, %v766
    %v768 = vrot.slane %v767, 2
    %v769 = vadd.f32 %v767, %v768
    %v770 = vrot.slane %v769, 1
    %v771 = vadd.f32 %v769, %v770
    %v772 = vmul.f32 %v771, 0.0625
    %v773 = vmul.f32 %v757, %v757
    %v774 = vmul.f32 %v759, %v759
    %v775 = vadd.f32 %v773, %v774
    %v776 = vrot.slane %v775, 4
    %v777 = vadd.f32 %v775, %v776
    %v778 = vrot.slane %v777, 2
    %v779 = vadd.f32 %v777, %v778
    %v780 = vrot.slane %v779, 1
    %v781 = vadd.f32 %v779, %v780
    %v782 = vmul.f32 %v781, 0.0625
    %v783 = vmul.f32 %v772, %v772
    %v784 = vsub.f32 %v782, %v783
    %v785 = vmax.f32 %v784, 0.0
    %v786 = vsub.f32 %v757, %v772
    %v787 = vsub.f32 %v759, %v772
    %v788 = vadd.f32 %v785, 1e-05
    %v789 = vrsqrt.pop %v788
    %v790 = vmul.f32 %v789, %v788
    %v791 = vmul.f32 %v790, %v789
    %v792 = vmul.f32 0.5, %v791
    %v793 = vsub.f32 1.5, %v792
    %v794 = vmul.f32 %v789, %v793
    %vm795 = vweird.f32 %v788
    %vm796 = vweird.f32 %v789
    %vm797 = vmor %vm795, %vm796
    %v798 = vsel %vm797, %v789, %v794
    %v799 = vmul.f32 %v786, %v798
    %v800 = vmul.f32 %v787, %v798
    %v802 = vperm.slane %v762, 0
    %v804 = vmul.f32 %v799, %v802
    %v805 = vmul.f32 %v800, %v802
    %v807 = vperm.slane %v764, 0
    %v809 = vadd.f32 %v804, %v807
    %v810 = vadd.f32 %v805, %v807
    %v811 = vmax.f32 %v809, 0.0
    %v812 = vmax.f32 %v810, 0.0
    %v813 = vpack.c.bf16 %v812, %v811
    %s814 = scalar_lea.vmem [#allocation2], 64
    %v815 = vld [vmem:[%s814] sm:$0xf]
    %v816 = vld [vmem:[%s814 + $0x4] sm:$0xf]
    %v817 = vld [vmem:[%s814 + $0x8] sm:$0xf]
    %v818 = vld [vmem:[%s814 + $0xc] sm:$0xf]
    %v819 = vld [vmem:[%s814 + $0x10] sm:$0xf]
    %v820 = vld [vmem:[%s814 + $0x14] sm:$0xf]
    %v821 = vld [vmem:[%s814 + $0x18] sm:$0xf]
    %v822 = vld [vmem:[%s814 + $0x1c] sm:$0xf]
    %v823 = vld [vmem:[%s814 + $0x20] sm:$0xf]
    %v824 = vld [vmem:[%s814 + $0x24] sm:$0xf]
    %v825 = vld [vmem:[%s814 + $0x28] sm:$0xf]
    %v826 = vld [vmem:[%s814 + $0x2c] sm:$0xf]
    %v827 = vld [vmem:[%s814 + $0x30] sm:$0xf]
    %v828 = vld [vmem:[%s814 + $0x34] sm:$0xf]
    %v829 = vld [vmem:[%s814 + $0x38] sm:$0xf]
    %v830 = vld [vmem:[%s814 + $0x3c] sm:$0xf]
    %s831 = scalar_lea.vmem %s9, 1
    %v832 = vld [vmem:[%s831] sm:$0x1]
    %v834 = vperm.slane %v832, 0
    %v852 = vunpack.c.l.b16 %v815
    %v853 = vunpack.c.l.b16 %v816
    %v854 = vunpack.c.l.b16 %v817
    %v855 = vunpack.c.l.b16 %v818
    %v856 = vunpack.c.l.b16 %v819
    %v857 = vunpack.c.l.b16 %v820
    %v858 = vunpack.c.l.b16 %v821
    %v859 = vunpack.c.l.b16 %v822
    %v860 = vunpack.c.l.b16 %v823
    %v861 = vunpack.c.l.b16 %v824
    %v862 = vunpack.c.l.b16 %v825
    %v863 = vunpack.c.l.b16 %v826
    %v864 = vunpack.c.l.b16 %v827
    %v865 = vunpack.c.l.b16 %v828
    %v866 = vunpack.c.l.b16 %v829
    %v867 = vunpack.c.l.b16 %v830
    %v868 = vpack.c.b16 %v853, %v852
    %v869 = vpack.c.b16 %v855, %v854
    %v870 = vpack.c.b16 %v857, %v856
    %v871 = vpack.c.b16 %v859, %v858
    %v872 = vpack.c.b16 %v861, %v860
    %v873 = vpack.c.b16 %v863, %v862
    %v874 = vpack.c.b16 %v865, %v864
    %v875 = vpack.c.b16 %v867, %v866
    %884 = vmatpush.bf16.msra.mxu0 %v875
    %885 = vmatpush.bf16.msra.mxu0 %v874
    %886 = vmatpush.bf16.msra.mxu0 %v873
    %887 = vmatpush.bf16.msra.mxu0 %v872
    %888 = vmatpush.bf16.msra.mxu0 %v871
    %889 = vmatpush.bf16.msra.mxu0 %v870
    %890 = vmatpush.bf16.msra.mxu0 %v869
    %891 = vmatpush.bf16.msra.mxu0 %v868
    %892 = vmatmul.bf16.gmra.mxu0 %v813
    %v893 = vpop.f32.mrf.mxu0
    %v894 = vadd.f32 %v834, %v893
    %v895 = vpop.f32.mrf.mxu0
    %v896 = vadd.f32 %v834, %v895
    %897 = vdwg.mxu0
    %v898 = vmax.f32 %v894, 0.0
    %v899 = vmax.f32 %v896, 0.0
    %s900 = scalar_lea.vmem %s10, 1
    %v901 = vld [vmem:[%s900] sm:$0x1]
    %s902 = scalar_lea.vmem %s11, 1
    %v903 = vld [vmem:[%s902] sm:$0x1]
    %v904 = vadd.f32 %v898, %v899
    %v905 = vrot.slane %v904, 4
    %v906 = vadd.f32 %v904, %v905
    %v907 = vrot.slane %v906, 2
    %v908 = vadd.f32 %v906, %v907
    %v909 = vrot.slane %v908, 1
    %v910 = vadd.f32 %v908, %v909
    %v911 = vmul.f32 %v910, 0.0625
    %v912 = vmul.f32 %v898, %v898
    %v913 = vmul.f32 %v899, %v899
    %v914 = vadd.f32 %v912, %v913
    %v915 = vrot.slane %v914, 4
    %v916 = vadd.f32 %v914, %v915
    %v917 = vrot.slane %v916, 2
    %v918 = vadd.f32 %v916, %v917
    %v919 = vrot.slane %v918, 1
    %v920 = vadd.f32 %v918, %v919
    %v921 = vmul.f32 %v920, 0.0625
    %v922 = vmul.f32 %v911, %v911
    %v923 = vsub.f32 %v921, %v922
    %v924 = vmax.f32 %v923, 0.0
    %v925 = vsub.f32 %v898, %v911
    %v926 = vsub.f32 %v899, %v911
    %v927 = vadd.f32 %v924, 1e-05
    %v928 = vrsqrt.pop %v927
    %v929 = vmul.f32 %v928, %v927
    %v930 = vmul.f32 %v929, %v928
    %v931 = vmul.f32 0.5, %v930
    %v932 = vsub.f32 1.5, %v931
    %v933 = vmul.f32 %v928, %v932
    %vm934 = vweird.f32 %v927
    %vm935 = vweird.f32 %v928
    %vm936 = vmor %vm934, %vm935
    %v937 = vsel %vm936, %v928, %v933
    %v938 = vmul.f32 %v925, %v937
    %v939 = vmul.f32 %v926, %v937
    %v941 = vperm.slane %v901, 0
    %v943 = vmul.f32 %v938, %v941
    %v944 = vmul.f32 %v939, %v941
    %v946 = vperm.slane %v903, 0
    %v948 = vadd.f32 %v943, %v946
    %v949 = vadd.f32 %v944, %v946
    %v950 = vmax.f32 %v948, 0.0
    %v951 = vmax.f32 %v949, 0.0
    %952 = vmatpush.msra.mxu0 0.0
    %953 = vmatpush.msra.mxu0 0.0
    %954 = vmatpush.msra.mxu0 0.0
    %955 = vmatpush.msra.mxu0 0.0
    %956 = vmatpush.msra.mxu0 0.0
    %957 = vmatpush.msra.mxu0 0.0
    %958 = vmatpush.msra.mxu0 0.0
    %959 = vmatpush.msra.mxu0 0.0
    %960 = vmatpush.msra.mxu0 0.0
    %961 = vmatpush.msra.mxu0 0.0
    %962 = vmatpush.msra.mxu0 0.0
    %963 = vmatpush.msra.mxu0 0.0
    %964 = vmatpush.msra.mxu0 0.0
    %965 = vmatpush.msra.mxu0 0.0
    %966 = vmatpush.msra.mxu0 %v951
    %967 = vmatpush.msra.mxu0 %v950
    %968 = vmatmul.f32.gmra.mxu0 %v638
    %v969 = vpop.f32.mrf.mxu0
    %v970 = vadd.f32 0.0, %v969
    %971 = vdwg.mxu0
    %972 = vst [vmem:[%s24 + $0x8] sm:$0xff] %v970
    %v973 = vpack.c.bf16 %v951, %v950
    %974 = vmatpush.bf16.msra.mxu0 0
    %975 = vmatpush.bf16.msra.mxu0 0
    %976 = vmatpush.bf16.msra.mxu0 0
    %977 = vmatpush.bf16.msra.mxu0 0
    %978 = vmatpush.bf16.msra.mxu0 0
    %979 = vmatpush.bf16.msra.mxu0 0
    %980 = vmatpush.bf16.msra.mxu0 0
    %981 = vmatpush.bf16.msra.mxu0 %v973
    %982 = vmatmul.bf16.gmra.mxu0 %v353
    %v983 = vpop.f32.mrf.mxu0
    %v984 = vadd.f32 %v298, %v983
    %v985 = vpop.f32.mrf.mxu0
    %v986 = vadd.f32 %v301, %v985
    %987 = vdwg.mxu0
    %v988 = vpack.c.bf16 %v986, %v984
    %s989 = scalar_lea.vmem %s4, 128
    %v990 = vld [vmem:[%s989] sm:$0xf]
    %v991 = vld [vmem:[%s989 + $0x4] sm:$0xf]
    %v992 = vld [vmem:[%s989 + $0x8] sm:$0xf]
    %v993 = vld [vmem:[%s989 + $0xc] sm:$0xf]
    %v994 = vld [vmem:[%s989 + $0x10] sm:$0xf]
    %v995 = vld [vmem:[%s989 + $0x14] sm:$0xf]
    %v996 = vld [vmem:[%s989 + $0x18] sm:$0xf]
    %v997 = vld [vmem:[%s989 + $0x1c] sm:$0xf]
    %v998 = vld [vmem:[%s989 + $0x20] sm:$0xf]
    %v999 = vld [vmem:[%s989 + $0x24] sm:$0xf]
    %v1000 = vld [vmem:[%s989 + $0x28] sm:$0xf]
    %v1001 = vld [vmem:[%s989 + $0x2c] sm:$0xf]
    %v1002 = vld [vmem:[%s989 + $0x30] sm:$0xf]
    %v1003 = vld [vmem:[%s989 + $0x34] sm:$0xf]
    %v1004 = vld [vmem:[%s989 + $0x38] sm:$0xf]
    %v1005 = vld [vmem:[%s989 + $0x3c] sm:$0xf]
    %s1006 = scalar_lea.vmem %s5, 2
    %v1007 = vld [vmem:[%s1006] sm:$0x1]
    %v1009 = vperm.slane %v1007, 0
    %v1027 = vunpack.c.l.b16 %v990
    %v1028 = vunpack.c.l.b16 %v991
    %v1029 = vunpack.c.l.b16 %v992
    %v1030 = vunpack.c.l.b16 %v993
    %v1031 = vunpack.c.l.b16 %v994
    %v1032 = vunpack.c.l.b16 %v995
    %v1033 = vunpack.c.l.b16 %v996
    %v1034 = vunpack.c.l.b16 %v997
    %v1035 = vunpack.c.l.b16 %v998
    %v1036 = vunpack.c.l.b16 %v999
    %v1037 = vunpack.c.l.b16 %v1000
    %v1038 = vunpack.c.l.b16 %v1001
    %v1039 = vunpack.c.l.b16 %v1002
    %v1040 = vunpack.c.l.b16 %v1003
    %v1041 = vunpack.c.l.b16 %v1004
    %v1042 = vunpack.c.l.b16 %v1005
    %v1043 = vpack.c.b16 %v1028, %v1027
    %v1044 = vpack.c.b16 %v1030, %v1029
    %v1045 = vpack.c.b16 %v1032, %v1031
    %v1046 = vpack.c.b16 %v1034, %v1033
    %v1047 = vpack.c.b16 %v1036, %v1035
    %v1048 = vpack.c.b16 %v1038, %v1037
    %v1049 = vpack.c.b16 %v1040, %v1039
    %v1050 = vpack.c.b16 %v1042, %v1041
    %1059 = vmatpush.bf16.msra.mxu0 %v1050
    %1060 = vmatpush.bf16.msra.mxu0 %v1049
    %1061 = vmatpush.bf16.msra.mxu0 %v1048
    %1062 = vmatpush.bf16.msra.mxu0 %v1047
    %1063 = vmatpush.bf16.msra.mxu0 %v1046
    %1064 = vmatpush.bf16.msra.mxu0 %v1045
    %1065 = vmatpush.bf16.msra.mxu0 %v1044
    %1066 = vmatpush.bf16.msra.mxu0 %v1043
    %1067 = vmatmul.bf16.gmra.mxu0 %v988
    %v1068 = vpop.f32.mrf.mxu0
    %v1069 = vadd.f32 %v1009, %v1068
    %v1070 = vpop.f32.mrf.mxu0
    %v1071 = vadd.f32 %v1009, %v1070
    %1072 = vdwg.mxu0
    %s1073 = scalar_lea.vmem %s6, 2
    %v1074 = vld [vmem:[%s1073] sm:$0x1]
    %s1075 = scalar_lea.vmem %s7, 2
    %v1076 = vld [vmem:[%s1075] sm:$0x1]
    %v1077 = vadd.f32 %v1069, %v1071
    %v1078 = vrot.slane %v1077, 4
    %v1079 = vadd.f32 %v1077, %v1078
    %v1080 = vrot.slane %v1079, 2
    %v1081 = vadd.f32 %v1079, %v1080
    %v1082 = vrot.slane %v1081, 1
    %v1083 = vadd.f32 %v1081, %v1082
    %v1084 = vmul.f32 %v1083, 0.0625
    %v1085 = vmul.f32 %v1069, %v1069
    %v1086 = vmul.f32 %v1071, %v1071
    %v1087 = vadd.f32 %v1085, %v1086
    %v1088 = vrot.slane %v1087, 4
    %v1089 = vadd.f32 %v1087, %v1088
    %v1090 = vrot.slane %v1089, 2
    %v1091 = vadd.f32 %v1089, %v1090
    %v1092 = vrot.slane %v1091, 1
    %v1093 = vadd.f32 %v1091, %v1092
    %v1094 = vmul.f32 %v1093, 0.0625
    %v1095 = vmul.f32 %v1084, %v1084
    %v1096 = vsub.f32 %v1094, %v1095
    %v1097 = vmax.f32 %v1096, 0.0
    %v1098 = vsub.f32 %v1069, %v1084
    %v1099 = vsub.f32 %v1071, %v1084
    %v1100 = vadd.f32 %v1097, 1e-05
    %v1101 = vrsqrt.pop %v1100
    %v1102 = vmul.f32 %v1101, %v1100
    %v1103 = vmul.f32 %v1102, %v1101
    %v1104 = vmul.f32 0.5, %v1103
    %v1105 = vsub.f32 1.5, %v1104
    %v1106 = vmul.f32 %v1101, %v1105
    %vm1107 = vweird.f32 %v1100
    %vm1108 = vweird.f32 %v1101
    %vm1109 = vmor %vm1107, %vm1108
    %v1110 = vsel %vm1109, %v1101, %v1106
    %v1111 = vmul.f32 %v1098, %v1110
    %v1112 = vmul.f32 %v1099, %v1110
    %v1114 = vperm.slane %v1074, 0
    %v1116 = vmul.f32 %v1111, %v1114
    %v1117 = vmul.f32 %v1112, %v1114
    %v1119 = vperm.slane %v1076, 0
    %v1121 = vadd.f32 %v1116, %v1119
    %v1122 = vadd.f32 %v1117, %v1119
    %v1123 = vmax.f32 %v1121, 0.0
    %v1124 = vmax.f32 %v1122, 0.0
    %v1125 = vpack.c.bf16 %v1124, %v1123
    %s1126 = scalar_lea.vmem [#allocation2], 128
    %v1127 = vld [vmem:[%s1126] sm:$0xf]
    %v1128 = vld [vmem:[%s1126 + $0x4] sm:$0xf]
    %v1129 = vld [vmem:[%s1126 + $0x8] sm:$0xf]
    %v1130 = vld [vmem:[%s1126 + $0xc] sm:$0xf]
    %v1131 = vld [vmem:[%s1126 + $0x10] sm:$0xf]
    %v1132 = vld [vmem:[%s1126 + $0x14] sm:$0xf]
    %v1133 = vld [vmem:[%s1126 + $0x18] sm:$0xf]
    %v1134 = vld [vmem:[%s1126 + $0x1c] sm:$0xf]
    %v1135 = vld [vmem:[%s1126 + $0x20] sm:$0xf]
    %v1136 = vld [vmem:[%s1126 + $0x24] sm:$0xf]
    %v1137 = vld [vmem:[%s1126 + $0x28] sm:$0xf]
    %v1138 = vld [vmem:[%s1126 + $0x2c] sm:$0xf]
    %v1139 = vld [vmem:[%s1126 + $0x30] sm:$0xf]
    %v1140 = vld [vmem:[%s1126 + $0x34] sm:$0xf]
    %v1141 = vld [vmem:[%s1126 + $0x38] sm:$0xf]
    %v1142 = vld [vmem:[%s1126 + $0x3c] sm:$0xf]
    %s1143 = scalar_lea.vmem %s9, 2
    %v1144 = vld [vmem:[%s1143] sm:$0x1]
    %v1146 = vperm.slane %v1144, 0
    %v1164 = vunpack.c.l.b16 %v1127
    %v1165 = vunpack.c.l.b16 %v1128
    %v1166 = vunpack.c.l.b16 %v1129
    %v1167 = vunpack.c.l.b16 %v1130
    %v1168 = vunpack.c.l.b16 %v1131
    %v1169 = vunpack.c.l.b16 %v1132
    %v1170 = vunpack.c.l.b16 %v1133
    %v1171 = vunpack.c.l.b16 %v1134
    %v1172 = vunpack.c.l.b16 %v1135
    %v1173 = vunpack.c.l.b16 %v1136
    %v1174 = vunpack.c.l.b16 %v1137
    %v1175 = vunpack.c.l.b16 %v1138
    %v1176 = vunpack.c.l.b16 %v1139
    %v1177 = vunpack.c.l.b16 %v1140
    %v1178 = vunpack.c.l.b16 %v1141
    %v1179 = vunpack.c.l.b16 %v1142
    %v1180 = vpack.c.b16 %v1165, %v1164
    %v1181 = vpack.c.b16 %v1167, %v1166
    %v1182 = vpack.c.b16 %v1169, %v1168
    %v1183 = vpack.c.b16 %v1171, %v1170
    %v1184 = vpack.c.b16 %v1173, %v1172
    %v1185 = vpack.c.b16 %v1175, %v1174
    %v1186 = vpack.c.b16 %v1177, %v1176
    %v1187 = vpack.c.b16 %v1179, %v1178
    %1196 = vmatpush.bf16.msra.mxu0 %v1187
    %1197 = vmatpush.bf16.msra.mxu0 %v1186
    %1198 = vmatpush.bf16.msra.mxu0 %v1185
    %1199 = vmatpush.bf16.msra.mxu0 %v1184
    %1200 = vmatpush.bf16.msra.mxu0 %v1183
    %1201 = vmatpush.bf16.msra.mxu0 %v1182
    %1202 = vmatpush.bf16.msra.mxu0 %v1181
    %1203 = vmatpush.bf16.msra.mxu0 %v1180
    %1204 = vmatmul.bf16.gmra.mxu0 %v1125
    %v1205 = vpop.f32.mrf.mxu0
    %v1206 = vadd.f32 %v1146, %v1205
    %v1207 = vpop.f32.mrf.mxu0
    %v1208 = vadd.f32 %v1146, %v1207
    %1209 = vdwg.mxu0
    %v1210 = vmax.f32 %v1206, 0.0
    %v1211 = vmax.f32 %v1208, 0.0
    %s1212 = scalar_lea.vmem %s10, 2
    %v1213 = vld [vmem:[%s1212] sm:$0x1]
    %s1214 = scalar_lea.vmem %s11, 2
    %v1215 = vld [vmem:[%s1214] sm:$0x1]
    %v1216 = vadd.f32 %v1210, %v1211
    %v1217 = vrot.slane %v1216, 4
    %v1218 = vadd.f32 %v1216, %v1217
    %v1219 = vrot.slane %v1218, 2
    %v1220 = vadd.f32 %v1218, %v1219
    %v1221 = vrot.slane %v1220, 1
    %v1222 = vadd.f32 %v1220, %v1221
    %v1223 = vmul.f32 %v1222, 0.0625
    %v1224 = vmul.f32 %v1210, %v1210
    %v1225 = vmul.f32 %v1211, %v1211
    %v1226 = vadd.f32 %v1224, %v1225
    %v1227 = vrot.slane %v1226, 4
    %v1228 = vadd.f32 %v1226, %v1227
    %v1229 = vrot.slane %v1228, 2
    %v1230 = vadd.f32 %v1228, %v1229
    %v1231 = vrot.slane %v1230, 1
    %v1232 = vadd.f32 %v1230, %v1231
    %v1233 = vmul.f32 %v1232, 0.0625
    %v1234 = vmul.f32 %v1223, %v1223
    %v1235 = vsub.f32 %v1233, %v1234
    %v1236 = vmax.f32 %v1235, 0.0
    %v1237 = vsub.f32 %v1210, %v1223
    %v1238 = vsub.f32 %v1211, %v1223
    %v1239 = vadd.f32 %v1236, 1e-05
    %v1240 = vrsqrt.pop %v1239
    %v1241 = vmul.f32 %v1240, %v1239
    %v1242 = vmul.f32 %v1241, %v1240
    %v1243 = vmul.f32 0.5, %v1242
    %v1244 = vsub.f32 1.5, %v1243
    %v1245 = vmul.f32 %v1240, %v1244
    %vm1246 = vweird.f32 %v1239
    %vm1247 = vweird.f32 %v1240
    %vm1248 = vmor %vm1246, %vm1247
    %v1249 = vsel %vm1248, %v1240, %v1245
    %v1250 = vmul.f32 %v1237, %v1249
    %v1251 = vmul.f32 %v1238, %v1249
    %v1253 = vperm.slane %v1213, 0
    %v1255 = vmul.f32 %v1250, %v1253
    %v1256 = vmul.f32 %v1251, %v1253
    %v1258 = vperm.slane %v1215, 0
    %v1260 = vadd.f32 %v1255, %v1258
    %v1261 = vadd.f32 %v1256, %v1258
    %v1262 = vmax.f32 %v1260, 0.0
    %v1263 = vmax.f32 %v1261, 0.0
    %1264 = vmatpush.msra.mxu0 0.0
    %1265 = vmatpush.msra.mxu0 0.0
    %1266 = vmatpush.msra.mxu0 0.0
    %1267 = vmatpush.msra.mxu0 0.0
    %1268 = vmatpush.msra.mxu0 0.0
    %1269 = vmatpush.msra.mxu0 0.0
    %1270 = vmatpush.msra.mxu0 0.0
    %1271 = vmatpush.msra.mxu0 0.0
    %1272 = vmatpush.msra.mxu0 0.0
    %1273 = vmatpush.msra.mxu0 0.0
    %1274 = vmatpush.msra.mxu0 0.0
    %1275 = vmatpush.msra.mxu0 0.0
    %1276 = vmatpush.msra.mxu0 0.0
    %1277 = vmatpush.msra.mxu0 0.0
    %1278 = vmatpush.msra.mxu0 %v1263
    %1279 = vmatpush.msra.mxu0 %v1262
    %1280 = vmatmul.f32.gmra.mxu0 %v638
    %v1281 = vpop.f32.mrf.mxu0
    %v1282 = vadd.f32 0.0, %v1281
    %1283 = vdwg.mxu0
    %1284 = vst [vmem:[%s24 + $0x10] sm:$0xff] %v1282
    %v1285 = vpack.c.bf16 %v1263, %v1262
    %1286 = vmatpush.bf16.msra.mxu0 0
    %1287 = vmatpush.bf16.msra.mxu0 0
    %1288 = vmatpush.bf16.msra.mxu0 0
    %1289 = vmatpush.bf16.msra.mxu0 0
    %1290 = vmatpush.bf16.msra.mxu0 0
    %1291 = vmatpush.bf16.msra.mxu0 0
    %1292 = vmatpush.bf16.msra.mxu0 0
    %1293 = vmatpush.bf16.msra.mxu0 %v1285
    %1294 = vmatmul.bf16.gmra.mxu0 %v353
    %v1295 = vpop.f32.mrf.mxu0
    %v1296 = vadd.f32 %v321, %v1295
    %v1297 = vpop.f32.mrf.mxu0
    %v1298 = vadd.f32 %v324, %v1297
    %1299 = vdwg.mxu0
    %v1300 = vpack.c.bf16 %v1298, %v1296
    %s1301 = scalar_lea.vmem %s4, 192
    %v1302 = vld [vmem:[%s1301] sm:$0xf]
    %v1303 = vld [vmem:[%s1301 + $0x4] sm:$0xf]
    %v1304 = vld [vmem:[%s1301 + $0x8] sm:$0xf]
    %v1305 = vld [vmem:[%s1301 + $0xc] sm:$0xf]
    %v1306 = vld [vmem:[%s1301 + $0x10] sm:$0xf]
    %v1307 = vld [vmem:[%s1301 + $0x14] sm:$0xf]
    %v1308 = vld [vmem:[%s1301 + $0x18] sm:$0xf]
    %v1309 = vld [vmem:[%s1301 + $0x1c] sm:$0xf]
    %v1310 = vld [vmem:[%s1301 + $0x20] sm:$0xf]
    %v1311 = vld [vmem:[%s1301 + $0x24] sm:$0xf]
    %v1312 = vld [vmem:[%s1301 + $0x28] sm:$0xf]
    %v1313 = vld [vmem:[%s1301 + $0x2c] sm:$0xf]
    %v1314 = vld [vmem:[%s1301 + $0x30] sm:$0xf]
    %v1315 = vld [vmem:[%s1301 + $0x34] sm:$0xf]
    %v1316 = vld [vmem:[%s1301 + $0x38] sm:$0xf]
    %v1317 = vld [vmem:[%s1301 + $0x3c] sm:$0xf]
    %s1318 = scalar_lea.vmem %s5, 3
    %v1319 = vld [vmem:[%s1318] sm:$0x1]
    %v1321 = vperm.slane %v1319, 0
    %v1339 = vunpack.c.l.b16 %v1302
    %v1340 = vunpack.c.l.b16 %v1303
    %v1341 = vunpack.c.l.b16 %v1304
    %v1342 = vunpack.c.l.b16 %v1305
    %v1343 = vunpack.c.l.b16 %v1306
    %v1344 = vunpack.c.l.b16 %v1307
    %v1345 = vunpack.c.l.b16 %v1308
    %v1346 = vunpack.c.l.b16 %v1309
    %v1347 = vunpack.c.l.b16 %v1310
    %v1348 = vunpack.c.l.b16 %v1311
    %v1349 = vunpack.c.l.b16 %v1312
    %v1350 = vunpack.c.l.b16 %v1313
    %v1351 = vunpack.c.l.b16 %v1314
    %v1352 = vunpack.c.l.b16 %v1315
    %v1353 = vunpack.c.l.b16 %v1316
    %v1354 = vunpack.c.l.b16 %v1317
    %v1355 = vpack.c.b16 %v1340, %v1339
    %v1356 = vpack.c.b16 %v1342, %v1341
    %v1357 = vpack.c.b16 %v1344, %v1343
    %v1358 = vpack.c.b16 %v1346, %v1345
    %v1359 = vpack.c.b16 %v1348, %v1347
    %v1360 = vpack.c.b16 %v1350, %v1349
    %v1361 = vpack.c.b16 %v1352, %v1351
    %v1362 = vpack.c.b16 %v1354, %v1353
    %1371 = vmatpush.bf16.msra.mxu0 %v1362
    %1372 = vmatpush.bf16.msra.mxu0 %v1361
    %1373 = vmatpush.bf16.msra.mxu0 %v1360
    %1374 = vmatpush.bf16.msra.mxu0 %v1359
    %1375 = vmatpush.bf16.msra.mxu0 %v1358
    %1376 = vmatpush.bf16.msra.mxu0 %v1357
    %1377 = vmatpush.bf16.msra.mxu0 %v1356
    %1378 = vmatpush.bf16.msra.mxu0 %v1355
    %1379 = vmatmul.bf16.gmra.mxu0 %v1300
    %v1380 = vpop.f32.mrf.mxu0
    %v1381 = vadd.f32 %v1321, %v1380
    %v1382 = vpop.f32.mrf.mxu0
    %v1383 = vadd.f32 %v1321, %v1382
    %1384 = vdwg.mxu0
    %s1385 = scalar_lea.vmem %s6, 3
    %v1386 = vld [vmem:[%s1385] sm:$0x1]
    %s1387 = scalar_lea.vmem %s7, 3
    %v1388 = vld [vmem:[%s1387] sm:$0x1]
    %v1389 = vadd.f32 %v1381, %v1383
    %v1390 = vrot.slane %v1389, 4
    %v1391 = vadd.f32 %v1389, %v1390
    %v1392 = vrot.slane %v1391, 2
    %v1393 = vadd.f32 %v1391, %v1392
    %v1394 = vrot.slane %v1393, 1
    %v1395 = vadd.f32 %v1393, %v1394
    %v1396 = vmul.f32 %v1395, 0.0625
    %v1397 = vmul.f32 %v1381, %v1381
    %v1398 = vmul.f32 %v1383, %v1383
    %v1399 = vadd.f32 %v1397, %v1398
    %v1400 = vrot.slane %v1399, 4
    %v1401 = vadd.f32 %v1399, %v1400
    %v1402 = vrot.slane %v1401, 2
    %v1403 = vadd.f32 %v1401, %v1402
    %v1404 = vrot.slane %v1403, 1
    %v1405 = vadd.f32 %v1403, %v1404
    %v1406 = vmul.f32 %v1405, 0.0625
    %v1407 = vmul.f32 %v1396, %v1396
    %v1408 = vsub.f32 %v1406, %v1407
    %v1409 = vmax.f32 %v1408, 0.0
    %v1410 = vsub.f32 %v1381, %v1396
    %v1411 = vsub.f32 %v1383, %v1396
    %v1412 = vadd.f32 %v1409, 1e-05
    %v1413 = vrsqrt.pop %v1412
    %v1414 = vmul.f32 %v1413, %v1412
    %v1415 = vmul.f32 %v1414, %v1413
    %v1416 = vmul.f32 0.5, %v1415
    %v1417 = vsub.f32 1.5, %v1416
    %v1418 = vmul.f32 %v1413, %v1417
    %vm1419 = vweird.f32 %v1412
    %vm1420 = vweird.f32 %v1413
    %vm1421 = vmor %vm1419, %vm1420
    %v1422 = vsel %vm1421, %v1413, %v1418
    %v1423 = vmul.f32 %v1410, %v1422
    %v1424 = vmul.f32 %v1411, %v1422
    %v1426 = vperm.slane %v1386, 0
    %v1428 = vmul.f32 %v1423, %v1426
    %v1429 = vmul.f32 %v1424, %v1426
    %v1431 = vperm.slane %v1388, 0
    %v1433 = vadd.f32 %v1428, %v1431
    %v1434 = vadd.f32 %v1429, %v1431
    %v1435 = vmax.f32 %v1433, 0.0
    %v1436 = vmax.f32 %v1434, 0.0
    %v1437 = vpack.c.bf16 %v1436, %v1435
    %s1438 = scalar_lea.vmem [#allocation2], 192
    %v1439 = vld [vmem:[%s1438] sm:$0xf]
    %v1440 = vld [vmem:[%s1438 + $0x4] sm:$0xf]
    %v1441 = vld [vmem:[%s1438 + $0x8] sm:$0xf]
    %v1442 = vld [vmem:[%s1438 + $0xc] sm:$0xf]
    %v1443 = vld [vmem:[%s1438 + $0x10] sm:$0xf]
    %v1444 = vld [vmem:[%s1438 + $0x14] sm:$0xf]
    %v1445 = vld [vmem:[%s1438 + $0x18] sm:$0xf]
    %v1446 = vld [vmem:[%s1438 + $0x1c] sm:$0xf]
    %v1447 = vld [vmem:[%s1438 + $0x20] sm:$0xf]
    %v1448 = vld [vmem:[%s1438 + $0x24] sm:$0xf]
    %v1449 = vld [vmem:[%s1438 + $0x28] sm:$0xf]
    %v1450 = vld [vmem:[%s1438 + $0x2c] sm:$0xf]
    %v1451 = vld [vmem:[%s1438 + $0x30] sm:$0xf]
    %v1452 = vld [vmem:[%s1438 + $0x34] sm:$0xf]
    %v1453 = vld [vmem:[%s1438 + $0x38] sm:$0xf]
    %v1454 = vld [vmem:[%s1438 + $0x3c] sm:$0xf]
    %s1455 = scalar_lea.vmem %s9, 3
    %v1456 = vld [vmem:[%s1455] sm:$0x1]
    %v1458 = vperm.slane %v1456, 0
    %v1476 = vunpack.c.l.b16 %v1439
    %v1477 = vunpack.c.l.b16 %v1440
    %v1478 = vunpack.c.l.b16 %v1441
    %v1479 = vunpack.c.l.b16 %v1442
    %v1480 = vunpack.c.l.b16 %v1443
    %v1481 = vunpack.c.l.b16 %v1444
    %v1482 = vunpack.c.l.b16 %v1445
    %v1483 = vunpack.c.l.b16 %v1446
    %v1484 = vunpack.c.l.b16 %v1447
    %v1485 = vunpack.c.l.b16 %v1448
    %v1486 = vunpack.c.l.b16 %v1449
    %v1487 = vunpack.c.l.b16 %v1450
    %v1488 = vunpack.c.l.b16 %v1451
    %v1489 = vunpack.c.l.b16 %v1452
    %v1490 = vunpack.c.l.b16 %v1453
    %v1491 = vunpack.c.l.b16 %v1454
    %v1492 = vpack.c.b16 %v1477, %v1476
    %v1493 = vpack.c.b16 %v1479, %v1478
    %v1494 = vpack.c.b16 %v1481, %v1480
    %v1495 = vpack.c.b16 %v1483, %v1482
    %v1496 = vpack.c.b16 %v1485, %v1484
    %v1497 = vpack.c.b16 %v1487, %v1486
    %v1498 = vpack.c.b16 %v1489, %v1488
    %v1499 = vpack.c.b16 %v1491, %v1490
    %1508 = vmatpush.bf16.msra.mxu0 %v1499
    %1509 = vmatpush.bf16.msra.mxu0 %v1498
    %1510 = vmatpush.bf16.msra.mxu0 %v1497
    %1511 = vmatpush.bf16.msra.mxu0 %v1496
    %1512 = vmatpush.bf16.msra.mxu0 %v1495
    %1513 = vmatpush.bf16.msra.mxu0 %v1494
    %1514 = vmatpush.bf16.msra.mxu0 %v1493
    %1515 = vmatpush.bf16.msra.mxu0 %v1492
    %1516 = vmatmul.bf16.gmra.mxu0 %v1437
    %v1517 = vpop.f32.mrf.mxu0
    %v1518 = vadd.f32 %v1458, %v1517
    %v1519 = vpop.f32.mrf.mxu0
    %v1520 = vadd.f32 %v1458, %v1519
    %1521 = vdwg.mxu0
    %v1522 = vmax.f32 %v1518, 0.0
    %v1523 = vmax.f32 %v1520, 0.0
    %s1524 = scalar_lea.vmem %s10, 3
    %v1525 = vld [vmem:[%s1524] sm:$0x1]
    %s1526 = scalar_lea.vmem %s11, 3
    %v1527 = vld [vmem:[%s1526] sm:$0x1]
    %v1528 = vadd.f32 %v1522, %v1523
    %v1529 = vrot.slane %v1528, 4
    %v1530 = vadd.f32 %v1528, %v1529
    %v1531 = vrot.slane %v1530, 2
    %v1532 = vadd.f32 %v1530, %v1531
    %v1533 = vrot.slane %v1532, 1
    %v1534 = vadd.f32 %v1532, %v1533
    %v1535 = vmul.f32 %v1534, 0.0625
    %v1536 = vmul.f32 %v1522, %v1522
    %v1537 = vmul.f32 %v1523, %v1523
    %v1538 = vadd.f32 %v1536, %v1537
    %v1539 = vrot.slane %v1538, 4
    %v1540 = vadd.f32 %v1538, %v1539
    %v1541 = vrot.slane %v1540, 2
    %v1542 = vadd.f32 %v1540, %v1541
    %v1543 = vrot.slane %v1542, 1
    %v1544 = vadd.f32 %v1542, %v1543
    %v1545 = vmul.f32 %v1544, 0.0625
    %v1546 = vmul.f32 %v1535, %v1535
    %v1547 = vsub.f32 %v1545, %v1546
    %v1548 = vmax.f32 %v1547, 0.0
    %v1549 = vsub.f32 %v1522, %v1535
    %v1550 = vsub.f32 %v1523, %v1535
    %v1551 = vadd.f32 %v1548, 1e-05
    %v1552 = vrsqrt.pop %v1551
    %v1553 = vmul.f32 %v1552, %v1551
    %v1554 = vmul.f32 %v1553, %v1552
    %v1555 = vmul.f32 0.5, %v1554
    %v1556 = vsub.f32 1.5, %v1555
    %v1557 = vmul.f32 %v1552, %v1556
    %vm1558 = vweird.f32 %v1551
    %vm1559 = vweird.f32 %v1552
    %vm1560 = vmor %vm1558, %vm1559
    %v1561 = vsel %vm1560, %v1552, %v1557
    %v1562 = vmul.f32 %v1549, %v1561
    %v1563 = vmul.f32 %v1550, %v1561
    %v1565 = vperm.slane %v1525, 0
    %v1567 = vmul.f32 %v1562, %v1565
    %v1568 = vmul.f32 %v1563, %v1565
    %v1570 = vperm.slane %v1527, 0
    %v1572 = vadd.f32 %v1567, %v1570
    %v1573 = vadd.f32 %v1568, %v1570
    %v1574 = vmax.f32 %v1572, 0.0
    %v1575 = vmax.f32 %v1573, 0.0
    %1576 = vmatpush.msra.mxu0 0.0
    %1577 = vmatpush.msra.mxu0 0.0
    %1578 = vmatpush.msra.mxu0 0.0
    %1579 = vmatpush.msra.mxu0 0.0
    %1580 = vmatpush.msra.mxu0 0.0
    %1581 = vmatpush.msra.mxu0 0.0
    %1582 = vmatpush.msra.mxu0 0.0
    %1583 = vmatpush.msra.mxu0 0.0
    %1584 = vmatpush.msra.mxu0 0.0
    %1585 = vmatpush.msra.mxu0 0.0
    %1586 = vmatpush.msra.mxu0 0.0
    %1587 = vmatpush.msra.mxu0 0.0
    %1588 = vmatpush.msra.mxu0 0.0
    %1589 = vmatpush.msra.mxu0 0.0
    %1590 = vmatpush.msra.mxu0 %v1575
    %1591 = vmatpush.msra.mxu0 %v1574
    %1592 = vmatmul.f32.gmra.mxu0 %v638
    %v1593 = vpop.f32.mrf.mxu0
    %v1594 = vadd.f32 0.0, %v1593
    %1595 = vdwg.mxu0
    %1596 = vst [vmem:[%s24 + $0x18] sm:$0xff] %v1594
    %v1597 = vpack.c.bf16 %v1575, %v1574
    %1598 = vmatpush.bf16.msra.mxu0 0
    %1599 = vmatpush.bf16.msra.mxu0 0
    %1600 = vmatpush.bf16.msra.mxu0 0
    %1601 = vmatpush.bf16.msra.mxu0 0
    %1602 = vmatpush.bf16.msra.mxu0 0
    %1603 = vmatpush.bf16.msra.mxu0 0
    %1604 = vmatpush.bf16.msra.mxu0 0
    %1605 = vmatpush.bf16.msra.mxu0 %v1597
    %1606 = vmatmul.bf16.gmra.mxu0 %v353
    %v1607 = vpop.f32.mrf.mxu0
    %v1608 = vadd.f32 %v344, %v1607
    %v1609 = vpop.f32.mrf.mxu0
    %v1610 = vadd.f32 %v347, %v1609
    %1611 = vdwg.mxu0
    %v1612 = vpack.c.bf16 %v1610, %v1608
    %s1613 = scalar_lea.vmem %s4, 256
    %v1614 = vld [vmem:[%s1613] sm:$0xf]
    %v1615 = vld [vmem:[%s1613 + $0x4] sm:$0xf]
    %v1616 = vld [vmem:[%s1613 + $0x8] sm:$0xf]
    %v1617 = vld [vmem:[%s1613 + $0xc] sm:$0xf]
    %v1618 = vld [vmem:[%s1613 + $0x10] sm:$0xf]
    %v1619 = vld [vmem:[%s1613 + $0x14] sm:$0xf]
    %v1620 = vld [vmem:[%s1613 + $0x18] sm:$0xf]
    %v1621 = vld [vmem:[%s1613 + $0x1c] sm:$0xf]
    %v1622 = vld [vmem:[%s1613 + $0x20] sm:$0xf]
    %v1623 = vld [vmem:[%s1613 + $0x24] sm:$0xf]
    %v1624 = vld [vmem:[%s1613 + $0x28] sm:$0xf]
    %v1625 = vld [vmem:[%s1613 + $0x2c] sm:$0xf]
    %v1626 = vld [vmem:[%s1613 + $0x30] sm:$0xf]
    %v1627 = vld [vmem:[%s1613 + $0x34] sm:$0xf]
    %v1628 = vld [vmem:[%s1613 + $0x38] sm:$0xf]
    %v1629 = vld [vmem:[%s1613 + $0x3c] sm:$0xf]
    %s1630 = scalar_lea.vmem %s5, 4
    %v1631 = vld [vmem:[%s1630] sm:$0x1]
    %v1633 = vperm.slane %v1631, 0
    %v1651 = vunpack.c.l.b16 %v1614
    %v1652 = vunpack.c.l.b16 %v1615
    %v1653 = vunpack.c.l.b16 %v1616
    %v1654 = vunpack.c.l.b16 %v1617
    %v1655 = vunpack.c.l.b16 %v1618
    %v1656 = vunpack.c.l.b16 %v1619
    %v1657 = vunpack.c.l.b16 %v1620
    %v1658 = vunpack.c.l.b16 %v1621
    %v1659 = vunpack.c.l.b16 %v1622
    %v1660 = vunpack.c.l.b16 %v1623
    %v1661 = vunpack.c.l.b16 %v1624
    %v1662 = vunpack.c.l.b16 %v1625
    %v1663 = vunpack.c.l.b16 %v1626
    %v1664 = vunpack.c.l.b16 %v1627
    %v1665 = vunpack.c.l.b16 %v1628
    %v1666 = vunpack.c.l.b16 %v1629
    %v1667 = vpack.c.b16 %v1652, %v1651
    %v1668 = vpack.c.b16 %v1654, %v1653
    %v1669 = vpack.c.b16 %v1656, %v1655
    %v1670 = vpack.c.b16 %v1658, %v1657
    %v1671 = vpack.c.b16 %v1660, %v1659
    %v1672 = vpack.c.b16 %v1662, %v1661
    %v1673 = vpack.c.b16 %v1664, %v1663
    %v1674 = vpack.c.b16 %v1666, %v1665
    %1683 = vmatpush.bf16.msra.mxu0 %v1674
    %1684 = vmatpush.bf16.msra.mxu0 %v1673
    %1685 = vmatpush.bf16.msra.mxu0 %v1672
    %1686 = vmatpush.bf16.msra.mxu0 %v1671
    %1687 = vmatpush.bf16.msra.mxu0 %v1670
    %1688 = vmatpush.bf16.msra.mxu0 %v1669
    %1689 = vmatpush.bf16.msra.mxu0 %v1668
    %1690 = vmatpush.bf16.msra.mxu0 %v1667
    %1691 = vmatmul.bf16.gmra.mxu0 %v1612
    %v1692 = vpop.f32.mrf.mxu0
    %v1693 = vadd.f32 %v1633, %v1692
    %v1694 = vpop.f32.mrf.mxu0
    %v1695 = vadd.f32 %v1633, %v1694
    %1696 = vdwg.mxu0
    %s1697 = scalar_lea.vmem %s6, 4
    %v1698 = vld [vmem:[%s1697] sm:$0x1]
    %s1699 = scalar_lea.vmem %s7, 4
    %v1700 = vld [vmem:[%s1699] sm:$0x1]
    %v1701 = vadd.f32 %v1693, %v1695
    %v1702 = vrot.slane %v1701, 4
    %v1703 = vadd.f32 %v1701, %v1702
    %v1704 = vrot.slane %v1703, 2
    %v1705 = vadd.f32 %v1703, %v1704
    %v1706 = vrot.slane %v1705, 1
    %v1707 = vadd.f32 %v1705, %v1706
    %v1708 = vmul.f32 %v1707, 0.0625
    %v1709 = vmul.f32 %v1693, %v1693
    %v1710 = vmul.f32 %v1695, %v1695
    %v1711 = vadd.f32 %v1709, %v1710
    %v1712 = vrot.slane %v1711, 4
    %v1713 = vadd.f32 %v1711, %v1712
    %v1714 = vrot.slane %v1713, 2
    %v1715 = vadd.f32 %v1713, %v1714
    %v1716 = vrot.slane %v1715, 1
    %v1717 = vadd.f32 %v1715, %v1716
    %v1718 = vmul.f32 %v1717, 0.0625
    %v1719 = vmul.f32 %v1708, %v1708
    %v1720 = vsub.f32 %v1718, %v1719
    %v1721 = vmax.f32 %v1720, 0.0
    %v1722 = vsub.f32 %v1693, %v1708
    %v1723 = vsub.f32 %v1695, %v1708
    %v1724 = vadd.f32 %v1721, 1e-05
    %v1725 = vrsqrt.pop %v1724
    %v1726 = vmul.f32 %v1725, %v1724
    %v1727 = vmul.f32 %v1726, %v1725
    %v1728 = vmul.f32 0.5, %v1727
    %v1729 = vsub.f32 1.5, %v1728
    %v1730 = vmul.f32 %v1725, %v1729
    %vm1731 = vweird.f32 %v1724
    %vm1732 = vweird.f32 %v1725
    %vm1733 = vmor %vm1731, %vm1732
    %v1734 = vsel %vm1733, %v1725, %v1730
    %v1735 = vmul.f32 %v1722, %v1734
    %v1736 = vmul.f32 %v1723, %v1734
    %v1738 = vperm.slane %v1698, 0
    %v1740 = vmul.f32 %v1735, %v1738
    %v1741 = vmul.f32 %v1736, %v1738
    %v1743 = vperm.slane %v1700, 0
    %v1745 = vadd.f32 %v1740, %v1743
    %v1746 = vadd.f32 %v1741, %v1743
    %v1747 = vmax.f32 %v1745, 0.0
    %v1748 = vmax.f32 %v1746, 0.0
    %v1749 = vpack.c.bf16 %v1748, %v1747
    %s1750 = scalar_lea.vmem [#allocation2], 256
    %v1751 = vld [vmem:[%s1750] sm:$0xf]
    %v1752 = vld [vmem:[%s1750 + $0x4] sm:$0xf]
    %v1753 = vld [vmem:[%s1750 + $0x8] sm:$0xf]
    %v1754 = vld [vmem:[%s1750 + $0xc] sm:$0xf]
    %v1755 = vld [vmem:[%s1750 + $0x10] sm:$0xf]
    %v1756 = vld [vmem:[%s1750 + $0x14] sm:$0xf]
    %v1757 = vld [vmem:[%s1750 + $0x18] sm:$0xf]
    %v1758 = vld [vmem:[%s1750 + $0x1c] sm:$0xf]
    %v1759 = vld [vmem:[%s1750 + $0x20] sm:$0xf]
    %v1760 = vld [vmem:[%s1750 + $0x24] sm:$0xf]
    %v1761 = vld [vmem:[%s1750 + $0x28] sm:$0xf]
    %v1762 = vld [vmem:[%s1750 + $0x2c] sm:$0xf]
    %v1763 = vld [vmem:[%s1750 + $0x30] sm:$0xf]
    %v1764 = vld [vmem:[%s1750 + $0x34] sm:$0xf]
    %v1765 = vld [vmem:[%s1750 + $0x38] sm:$0xf]
    %v1766 = vld [vmem:[%s1750 + $0x3c] sm:$0xf]
    %s1767 = scalar_lea.vmem %s9, 4
    %v1768 = vld [vmem:[%s1767] sm:$0x1]
    %v1770 = vperm.slane %v1768, 0
    %v1788 = vunpack.c.l.b16 %v1751
    %v1789 = vunpack.c.l.b16 %v1752
    %v1790 = vunpack.c.l.b16 %v1753
    %v1791 = vunpack.c.l.b16 %v1754
    %v1792 = vunpack.c.l.b16 %v1755
    %v1793 = vunpack.c.l.b16 %v1756
    %v1794 = vunpack.c.l.b16 %v1757
    %v1795 = vunpack.c.l.b16 %v1758
    %v1796 = vunpack.c.l.b16 %v1759
    %v1797 = vunpack.c.l.b16 %v1760
    %v1798 = vunpack.c.l.b16 %v1761
    %v1799 = vunpack.c.l.b16 %v1762
    %v1800 = vunpack.c.l.b16 %v1763
    %v1801 = vunpack.c.l.b16 %v1764
    %v1802 = vunpack.c.l.b16 %v1765
    %v1803 = vunpack.c.l.b16 %v1766
    %v1804 = vpack.c.b16 %v1789, %v1788
    %v1805 = vpack.c.b16 %v1791, %v1790
    %v1806 = vpack.c.b16 %v1793, %v1792
    %v1807 = vpack.c.b16 %v1795, %v1794
    %v1808 = vpack.c.b16 %v1797, %v1796
    %v1809 = vpack.c.b16 %v1799, %v1798
    %v1810 = vpack.c.b16 %v1801, %v1800
    %v1811 = vpack.c.b16 %v1803, %v1802
    %1820 = vmatpush.bf16.msra.mxu0 %v1811
    %1821 = vmatpush.bf16.msra.mxu0 %v1810
    %1822 = vmatpush.bf16.msra.mxu0 %v1809
    %1823 = vmatpush.bf16.msra.mxu0 %v1808
    %1824 = vmatpush.bf16.msra.mxu0 %v1807
    %1825 = vmatpush.bf16.msra.mxu0 %v1806
    %1826 = vmatpush.bf16.msra.mxu0 %v1805
    %1827 = vmatpush.bf16.msra.mxu0 %v1804
    %1828 = vmatmul.bf16.gmra.mxu0 %v1749
    %v1829 = vpop.f32.mrf.mxu0
    %v1830 = vadd.f32 %v1770, %v1829
    %v1831 = vpop.f32.mrf.mxu0
    %v1832 = vadd.f32 %v1770, %v1831
    %1833 = vdwg.mxu0
    %v1834 = vmax.f32 %v1830, 0.0
    %v1835 = vmax.f32 %v1832, 0.0
    %s1836 = scalar_lea.vmem %s10, 4
    %v1837 = vld [vmem:[%s1836] sm:$0x1]
    %s1838 = scalar_lea.vmem %s11, 4
    %v1839 = vld [vmem:[%s1838] sm:$0x1]
    %v1840 = vadd.f32 %v1834, %v1835
    %v1841 = vrot.slane %v1840, 4
    %v1842 = vadd.f32 %v1840, %v1841
    %v1843 = vrot.slane %v1842, 2
    %v1844 = vadd.f32 %v1842, %v1843
    %v1845 = vrot.slane %v1844, 1
    %v1846 = vadd.f32 %v1844, %v1845
    %v1847 = vmul.f32 %v1846, 0.0625
    %v1848 = vmul.f32 %v1834, %v1834
    %v1849 = vmul.f32 %v1835, %v1835
    %v1850 = vadd.f32 %v1848, %v1849
    %v1851 = vrot.slane %v1850, 4
    %v1852 = vadd.f32 %v1850, %v1851
    %v1853 = vrot.slane %v1852, 2
    %v1854 = vadd.f32 %v1852, %v1853
    %v1855 = vrot.slane %v1854, 1
    %v1856 = vadd.f32 %v1854, %v1855
    %v1857 = vmul.f32 %v1856, 0.0625
    %v1858 = vmul.f32 %v1847, %v1847
    %v1859 = vsub.f32 %v1857, %v1858
    %v1860 = vmax.f32 %v1859, 0.0
    %v1861 = vsub.f32 %v1834, %v1847
    %v1862 = vsub.f32 %v1835, %v1847
    %v1863 = vadd.f32 %v1860, 1e-05
    %v1864 = vrsqrt.pop %v1863
    %v1865 = vmul.f32 %v1864, %v1863
    %v1866 = vmul.f32 %v1865, %v1864
    %v1867 = vmul.f32 0.5, %v1866
    %v1868 = vsub.f32 1.5, %v1867
    %v1869 = vmul.f32 %v1864, %v1868
    %vm1870 = vweird.f32 %v1863
    %vm1871 = vweird.f32 %v1864
    %vm1872 = vmor %vm1870, %vm1871
    %v1873 = vsel %vm1872, %v1864, %v1869
    %v1874 = vmul.f32 %v1861, %v1873
    %v1875 = vmul.f32 %v1862, %v1873
    %v1877 = vperm.slane %v1837, 0
    %v1879 = vmul.f32 %v1874, %v1877
    %v1880 = vmul.f32 %v1875, %v1877
    %v1882 = vperm.slane %v1839, 0
    %v1884 = vadd.f32 %v1879, %v1882
    %v1885 = vadd.f32 %v1880, %v1882
    %1886 = vmatpush.msra.mxu0 0.0
    %1887 = vmatpush.msra.mxu0 0.0
    %1888 = vmatpush.msra.mxu0 0.0
    %1889 = vmatpush.msra.mxu0 0.0
    %1890 = vmatpush.msra.mxu0 0.0
    %1891 = vmatpush.msra.mxu0 0.0
    %1892 = vmatpush.msra.mxu0 0.0
    %1893 = vmatpush.msra.mxu0 0.0
    %1894 = vmatpush.msra.mxu0 0.0
    %1895 = vmatpush.msra.mxu0 0.0
    %1896 = vmatpush.msra.mxu0 0.0
    %1897 = vmatpush.msra.mxu0 0.0
    %1898 = vmatpush.msra.mxu0 0.0
    %1899 = vmatpush.msra.mxu0 0.0
    %1900 = vmatpush.msra.mxu0 %v1885
    %1901 = vmatpush.msra.mxu0 %v1884
    %1902 = vmatmul.f32.gmra.mxu0 %v638
    %v1903 = vpop.f32.mrf.mxu0
    %v1904 = vadd.f32 0.0, %v1903
    %1905 = vdwg.mxu0
    %1906 = vst [vmem:[%s24 + $0x20] sm:$0xff] %v1904
    %v1907 = vld [vmem:[%s24] sm:$0xff]
    %v1908 = vld [vmem:[%s24 + $0x8] sm:$0xff]
    %v1909 = vld [vmem:[%s24 + $0x10] sm:$0xff]
    %v1910 = vld [vmem:[%s24 + $0x18] sm:$0xff]
    %v1911 = vld [vmem:[%s24 + $0x20] sm:$0xff]
    %vm1912 = vcmp.lt.s32.totalorder %v132, 2
    %v1913 = vsel %vm1912, 1, 0
    %v1914 = vcvt.s32.f32 %v1913
    %v1915 = vpack.c.bf16 %v1907, %v1907
    %v1916 = vpack.c.bf16 %v1908, %v1908
    %v1917 = vpack.c.bf16 %v1909, %v1909
    %v1918 = vpack.c.bf16 %v1910, %v1910
    %v1919 = vpack.c.bf16 %v1911, %v1911
    %v1920 = vld [vmem:[#allocation4] sm:$0xf]
    %v1921 = vld [vmem:[#allocation4 + $0x4] sm:$0xf]
    %v1922 = vld [vmem:[#allocation4 + $0x8] sm:$0xf]
    %v1923 = vld [vmem:[#allocation4 + $0xc] sm:$0xf]
    %v1924 = vld [vmem:[#allocation4 + $0x10] sm:$0xf]
    %v1925 = vld [vmem:[#allocation4 + $0x14] sm:$0xf]
    %v1926 = vld [vmem:[#allocation4 + $0x18] sm:$0xf]
    %v1927 = vld [vmem:[#allocation4 + $0x1c] sm:$0xf]
    %v1928 = vld [vmem:[#allocation4 + $0x20] sm:$0xf]
    %v1929 = vld [vmem:[#allocation4 + $0x24] sm:$0xf]
    %v1930 = vld [vmem:[#allocation4 + $0x28] sm:$0xf]
    %v1931 = vld [vmem:[#allocation4 + $0x2c] sm:$0xf]
    %v1932 = vld [vmem:[#allocation4 + $0x30] sm:$0xf]
    %v1933 = vld [vmem:[#allocation4 + $0x34] sm:$0xf]
    %v1934 = vld [vmem:[#allocation4 + $0x38] sm:$0xf]
    %v1935 = vld [vmem:[#allocation4 + $0x3c] sm:$0xf]
    %v1936 = vld [vmem:[#allocation4 + $0x40] sm:$0xf]
    %v1937 = vld [vmem:[#allocation4 + $0x44] sm:$0xf]
    %v1938 = vld [vmem:[#allocation4 + $0x48] sm:$0xf]
    %v1939 = vld [vmem:[#allocation4 + $0x4c] sm:$0xf]
    %v1940 = vld [vmem:[#allocation4 + $0x50] sm:$0xf]
    %v1941 = vld [vmem:[#allocation4 + $0x54] sm:$0xf]
    %v1942 = vld [vmem:[#allocation4 + $0x58] sm:$0xf]
    %v1943 = vld [vmem:[#allocation4 + $0x5c] sm:$0xf]
    %v1944 = vld [vmem:[#allocation4 + $0x60] sm:$0xf]
    %v1945 = vld [vmem:[#allocation4 + $0x64] sm:$0xf]
    %v1946 = vld [vmem:[#allocation4 + $0x68] sm:$0xf]
    %v1947 = vld [vmem:[#allocation4 + $0x6c] sm:$0xf]
    %v1948 = vld [vmem:[#allocation4 + $0x70] sm:$0xf]
    %v1949 = vld [vmem:[#allocation4 + $0x74] sm:$0xf]
    %v1950 = vld [vmem:[#allocation4 + $0x78] sm:$0xf]
    %v1951 = vld [vmem:[#allocation4 + $0x7c] sm:$0xf]
    %v1952 = vld [vmem:[#allocation4 + $0x80] sm:$0xf]
    %v1953 = vld [vmem:[#allocation4 + $0x84] sm:$0xf]
    %v1954 = vld [vmem:[#allocation4 + $0x88] sm:$0xf]
    %v1955 = vld [vmem:[#allocation4 + $0x8c] sm:$0xf]
    %v1956 = vld [vmem:[#allocation4 + $0x90] sm:$0xf]
    %v1957 = vld [vmem:[#allocation4 + $0x94] sm:$0xf]
    %v1958 = vld [vmem:[#allocation4 + $0x98] sm:$0xf]
    %v1959 = vld [vmem:[#allocation4 + $0x9c] sm:$0xf]
    %v1960 = vld [vmem:[#allocation4 + $0xa0] sm:$0xf]
    %v1961 = vld [vmem:[#allocation4 + $0xa4] sm:$0xf]
    %v1962 = vld [vmem:[#allocation4 + $0xa8] sm:$0xf]
    %v1963 = vld [vmem:[#allocation4 + $0xac] sm:$0xf]
    %v1964 = vld [vmem:[#allocation4 + $0xb0] sm:$0xf]
    %v1965 = vld [vmem:[#allocation4 + $0xb4] sm:$0xf]
    %v1966 = vld [vmem:[#allocation4 + $0xb8] sm:$0xf]
    %v1967 = vld [vmem:[#allocation4 + $0xbc] sm:$0xf]
    %v1968 = vld [vmem:[#allocation4 + $0xc0] sm:$0xf]
    %v1969 = vld [vmem:[#allocation4 + $0xc4] sm:$0xf]
    %v1970 = vld [vmem:[#allocation4 + $0xc8] sm:$0xf]
    %v1971 = vld [vmem:[#allocation4 + $0xcc] sm:$0xf]
    %v1972 = vld [vmem:[#allocation4 + $0xd0] sm:$0xf]
    %v1973 = vld [vmem:[#allocation4 + $0xd4] sm:$0xf]
    %v1974 = vld [vmem:[#allocation4 + $0xd8] sm:$0xf]
    %v1975 = vld [vmem:[#allocation4 + $0xdc] sm:$0xf]
    %v1976 = vld [vmem:[#allocation4 + $0xe0] sm:$0xf]
    %v1977 = vld [vmem:[#allocation4 + $0xe4] sm:$0xf]
    %v1978 = vld [vmem:[#allocation4 + $0xe8] sm:$0xf]
    %v1979 = vld [vmem:[#allocation4 + $0xec] sm:$0xf]
    %v1980 = vld [vmem:[#allocation4 + $0xf0] sm:$0xf]
    %v1981 = vld [vmem:[#allocation4 + $0xf4] sm:$0xf]
    %v1982 = vld [vmem:[#allocation4 + $0xf8] sm:$0xf]
    %v1983 = vld [vmem:[#allocation4 + $0xfc] sm:$0xf]
    %v1984 = vld [vmem:[#allocation4 + $0x100] sm:$0xf]
    %v1985 = vld [vmem:[#allocation4 + $0x104] sm:$0xf]
    %v1986 = vld [vmem:[#allocation4 + $0x108] sm:$0xf]
    %v1987 = vld [vmem:[#allocation4 + $0x10c] sm:$0xf]
    %v1988 = vld [vmem:[#allocation4 + $0x110] sm:$0xf]
    %v1989 = vld [vmem:[#allocation4 + $0x114] sm:$0xf]
    %v1990 = vld [vmem:[#allocation4 + $0x118] sm:$0xf]
    %v1991 = vld [vmem:[#allocation4 + $0x11c] sm:$0xf]
    %v1992 = vld [vmem:[#allocation4 + $0x120] sm:$0xf]
    %v1993 = vld [vmem:[#allocation4 + $0x124] sm:$0xf]
    %v1994 = vld [vmem:[#allocation4 + $0x128] sm:$0xf]
    %v1995 = vld [vmem:[#allocation4 + $0x12c] sm:$0xf]
    %v1996 = vld [vmem:[#allocation4 + $0x130] sm:$0xf]
    %v1997 = vld [vmem:[#allocation4 + $0x134] sm:$0xf]
    %v1998 = vld [vmem:[#allocation4 + $0x138] sm:$0xf]
    %v1999 = vld [vmem:[#allocation4 + $0x13c] sm:$0xf]
    %v2000 = vld [vmem:[%s13] sm:$0x1]
    %v2002 = vperm.slane %v2000, 0
    %v2084 = vunpack.c.l.b16 %v1920
    %v2085 = vunpack.c.l.b16 %v1921
    %v2086 = vunpack.c.l.b16 %v1922
    %v2087 = vunpack.c.l.b16 %v1923
    %v2088 = vunpack.c.l.b16 %v1924
    %v2089 = vunpack.c.l.b16 %v1925
    %v2090 = vunpack.c.l.b16 %v1926
    %v2091 = vunpack.c.l.b16 %v1927
    %v2092 = vunpack.c.l.b16 %v1928
    %v2093 = vunpack.c.l.b16 %v1929
    %v2094 = vunpack.c.l.b16 %v1930
    %v2095 = vunpack.c.l.b16 %v1931
    %v2096 = vunpack.c.l.b16 %v1932
    %v2097 = vunpack.c.l.b16 %v1933
    %v2098 = vunpack.c.l.b16 %v1934
    %v2099 = vunpack.c.l.b16 %v1935
    %v2100 = vunpack.c.l.b16 %v1936
    %v2101 = vunpack.c.l.b16 %v1937
    %v2102 = vunpack.c.l.b16 %v1938
    %v2103 = vunpack.c.l.b16 %v1939
    %v2104 = vunpack.c.l.b16 %v1940
    %v2105 = vunpack.c.l.b16 %v1941
    %v2106 = vunpack.c.l.b16 %v1942
    %v2107 = vunpack.c.l.b16 %v1943
    %v2108 = vunpack.c.l.b16 %v1944
    %v2109 = vunpack.c.l.b16 %v1945
    %v2110 = vunpack.c.l.b16 %v1946
    %v2111 = vunpack.c.l.b16 %v1947
    %v2112 = vunpack.c.l.b16 %v1948
    %v2113 = vunpack.c.l.b16 %v1949
    %v2114 = vunpack.c.l.b16 %v1950
    %v2115 = vunpack.c.l.b16 %v1951
    %v2116 = vunpack.c.l.b16 %v1952
    %v2117 = vunpack.c.l.b16 %v1953
    %v2118 = vunpack.c.l.b16 %v1954
    %v2119 = vunpack.c.l.b16 %v1955
    %v2120 = vunpack.c.l.b16 %v1956
    %v2121 = vunpack.c.l.b16 %v1957
    %v2122 = vunpack.c.l.b16 %v1958
    %v2123 = vunpack.c.l.b16 %v1959
    %v2124 = vunpack.c.l.b16 %v1960
    %v2125 = vunpack.c.l.b16 %v1961
    %v2126 = vunpack.c.l.b16 %v1962
    %v2127 = vunpack.c.l.b16 %v1963
    %v2128 = vunpack.c.l.b16 %v1964
    %v2129 = vunpack.c.l.b16 %v1965
    %v2130 = vunpack.c.l.b16 %v1966
    %v2131 = vunpack.c.l.b16 %v1967
    %v2132 = vunpack.c.l.b16 %v1968
    %v2133 = vunpack.c.l.b16 %v1969
    %v2134 = vunpack.c.l.b16 %v1970
    %v2135 = vunpack.c.l.b16 %v1971
    %v2136 = vunpack.c.l.b16 %v1972
    %v2137 = vunpack.c.l.b16 %v1973
    %v2138 = vunpack.c.l.b16 %v1974
    %v2139 = vunpack.c.l.b16 %v1975
    %v2140 = vunpack.c.l.b16 %v1976
    %v2141 = vunpack.c.l.b16 %v1977
    %v2142 = vunpack.c.l.b16 %v1978
    %v2143 = vunpack.c.l.b16 %v1979
    %v2144 = vunpack.c.l.b16 %v1980
    %v2145 = vunpack.c.l.b16 %v1981
    %v2146 = vunpack.c.l.b16 %v1982
    %v2147 = vunpack.c.l.b16 %v1983
    %v2148 = vunpack.c.l.b16 %v1984
    %v2149 = vunpack.c.l.b16 %v1985
    %v2150 = vunpack.c.l.b16 %v1986
    %v2151 = vunpack.c.l.b16 %v1987
    %v2152 = vunpack.c.l.b16 %v1988
    %v2153 = vunpack.c.l.b16 %v1989
    %v2154 = vunpack.c.l.b16 %v1990
    %v2155 = vunpack.c.l.b16 %v1991
    %v2156 = vunpack.c.l.b16 %v1992
    %v2157 = vunpack.c.l.b16 %v1993
    %v2158 = vunpack.c.l.b16 %v1994
    %v2159 = vunpack.c.l.b16 %v1995
    %v2160 = vunpack.c.l.b16 %v1996
    %v2161 = vunpack.c.l.b16 %v1997
    %v2162 = vunpack.c.l.b16 %v1998
    %v2163 = vunpack.c.l.b16 %v1999
    %v2164 = vpack.c.b16 %v2085, %v2084
    %v2165 = vpack.c.b16 %v2087, %v2086
    %v2166 = vpack.c.b16 %v2089, %v2088
    %v2167 = vpack.c.b16 %v2091, %v2090
    %v2168 = vpack.c.b16 %v2093, %v2092
    %v2169 = vpack.c.b16 %v2095, %v2094
    %v2170 = vpack.c.b16 %v2097, %v2096
    %v2171 = vpack.c.b16 %v2099, %v2098
    %v2172 = vpack.c.b16 %v2101, %v2100
    %v2173 = vpack.c.b16 %v2103, %v2102
    %v2174 = vpack.c.b16 %v2105, %v2104
    %v2175 = vpack.c.b16 %v2107, %v2106
    %v2176 = vpack.c.b16 %v2109, %v2108
    %v2177 = vpack.c.b16 %v2111, %v2110
    %v2178 = vpack.c.b16 %v2113, %v2112
    %v2179 = vpack.c.b16 %v2115, %v2114
    %v2180 = vpack.c.b16 %v2117, %v2116
    %v2181 = vpack.c.b16 %v2119, %v2118
    %v2182 = vpack.c.b16 %v2121, %v2120
    %v2183 = vpack.c.b16 %v2123, %v2122
    %v2184 = vpack.c.b16 %v2125, %v2124
    %v2185 = vpack.c.b16 %v2127, %v2126
    %v2186 = vpack.c.b16 %v2129, %v2128
    %v2187 = vpack.c.b16 %v2131, %v2130
    %v2188 = vpack.c.b16 %v2133, %v2132
    %v2189 = vpack.c.b16 %v2135, %v2134
    %v2190 = vpack.c.b16 %v2137, %v2136
    %v2191 = vpack.c.b16 %v2139, %v2138
    %v2192 = vpack.c.b16 %v2141, %v2140
    %v2193 = vpack.c.b16 %v2143, %v2142
    %v2194 = vpack.c.b16 %v2145, %v2144
    %v2195 = vpack.c.b16 %v2147, %v2146
    %v2196 = vpack.c.b16 %v2149, %v2148
    %v2197 = vpack.c.b16 %v2151, %v2150
    %v2198 = vpack.c.b16 %v2153, %v2152
    %v2199 = vpack.c.b16 %v2155, %v2154
    %v2200 = vpack.c.b16 %v2157, %v2156
    %v2201 = vpack.c.b16 %v2159, %v2158
    %v2202 = vpack.c.b16 %v2161, %v2160
    %v2203 = vpack.c.b16 %v2163, %v2162
    %2244 = vmatpush.bf16.msra.mxu0 %v2171
    %2245 = vmatpush.bf16.msra.mxu0 %v2170
    %2246 = vmatpush.bf16.msra.mxu0 %v2169
    %2247 = vmatpush.bf16.msra.mxu0 %v2168
    %2248 = vmatpush.bf16.msra.mxu0 %v2167
    %2249 = vmatpush.bf16.msra.mxu0 %v2166
    %2250 = vmatpush.bf16.msra.mxu0 %v2165
    %2251 = vmatpush.bf16.msra.mxu0 %v2164
    %2252 = vmatmul.bf16.gmra.mxu0 %v1915
    %v2253 = vpop.f32.mrf.mxu0
    %v2254 = vadd.f32 %v2002, %v2253
    %v2255 = vpop.f32.mrf.mxu0
    %2256 = vdwg.mxu0
    %2257 = vmatpush.bf16.msra.mxu0 %v2179
    %2258 = vmatpush.bf16.msra.mxu0 %v2178
    %2259 = vmatpush.bf16.msra.mxu0 %v2177
    %2260 = vmatpush.bf16.msra.mxu0 %v2176
    %2261 = vmatpush.bf16.msra.mxu0 %v2175
    %2262 = vmatpush.bf16.msra.mxu0 %v2174
    %2263 = vmatpush.bf16.msra.mxu0 %v2173
    %2264 = vmatpush.bf16.msra.mxu0 %v2172
    %2265 = vmatmul.bf16.gmra.mxu0 %v1916
    %v2266 = vpop.f32.mrf.mxu0
    %v2267 = vadd.f32 %v2254, %v2266
    %v2268 = vpop.f32.mrf.mxu0
    %2269 = vdwg.mxu0
    %2270 = vmatpush.bf16.msra.mxu0 %v2187
    %2271 = vmatpush.bf16.msra.mxu0 %v2186
    %2272 = vmatpush.bf16.msra.mxu0 %v2185
    %2273 = vmatpush.bf16.msra.mxu0 %v2184
    %2274 = vmatpush.bf16.msra.mxu0 %v2183
    %2275 = vmatpush.bf16.msra.mxu0 %v2182
    %2276 = vmatpush.bf16.msra.mxu0 %v2181
    %2277 = vmatpush.bf16.msra.mxu0 %v2180
    %2278 = vmatmul.bf16.gmra.mxu0 %v1917
    %v2279 = vpop.f32.mrf.mxu0
    %v2280 = vadd.f32 %v2267, %v2279
    %v2281 = vpop.f32.mrf.mxu0
    %2282 = vdwg.mxu0
    %2283 = vmatpush.bf16.msra.mxu0 %v2195
    %2284 = vmatpush.bf16.msra.mxu0 %v2194
    %2285 = vmatpush.bf16.msra.mxu0 %v2193
    %2286 = vmatpush.bf16.msra.mxu0 %v2192
    %2287 = vmatpush.bf16.msra.mxu0 %v2191
    %2288 = vmatpush.bf16.msra.mxu0 %v2190
    %2289 = vmatpush.bf16.msra.mxu0 %v2189
    %2290 = vmatpush.bf16.msra.mxu0 %v2188
    %2291 = vmatmul.bf16.gmra.mxu0 %v1918
    %v2292 = vpop.f32.mrf.mxu0
    %v2293 = vadd.f32 %v2280, %v2292
    %v2294 = vpop.f32.mrf.mxu0
    %2295 = vdwg.mxu0
    %2296 = vmatpush.bf16.msra.mxu0 %v2203
    %2297 = vmatpush.bf16.msra.mxu0 %v2202
    %2298 = vmatpush.bf16.msra.mxu0 %v2201
    %2299 = vmatpush.bf16.msra.mxu0 %v2200
    %2300 = vmatpush.bf16.msra.mxu0 %v2199
    %2301 = vmatpush.bf16.msra.mxu0 %v2198
    %2302 = vmatpush.bf16.msra.mxu0 %v2197
    %2303 = vmatpush.bf16.msra.mxu0 %v2196
    %2304 = vmatmul.bf16.gmra.mxu0 %v1919
    %v2305 = vpop.f32.mrf.mxu0
    %v2306 = vadd.f32 %v2293, %v2305
    %v2307 = vpop.f32.mrf.mxu0
    %2308 = vdwg.mxu0
    %v2309 = vpack.c.bf16 %v2306, %v2306
    %v2310 = vld [vmem:[%s14] sm:$0xf]
    %v2311 = vld [vmem:[%s14 + $0x4] sm:$0xf]
    %v2312 = vld [vmem:[%s14 + $0x8] sm:$0xf]
    %v2313 = vld [vmem:[%s14 + $0xc] sm:$0xf]
    %v2314 = vld [vmem:[%s14 + $0x10] sm:$0xf]
    %v2315 = vld [vmem:[%s14 + $0x14] sm:$0xf]
    %v2316 = vld [vmem:[%s14 + $0x18] sm:$0xf]
    %v2317 = vld [vmem:[%s14 + $0x1c] sm:$0xf]
    %v2318 = vld [vmem:[%s14 + $0x20] sm:$0xf]
    %v2319 = vld [vmem:[%s14 + $0x24] sm:$0xf]
    %v2320 = vld [vmem:[%s14 + $0x28] sm:$0xf]
    %v2321 = vld [vmem:[%s14 + $0x2c] sm:$0xf]
    %v2322 = vld [vmem:[%s14 + $0x30] sm:$0xf]
    %v2323 = vld [vmem:[%s14 + $0x34] sm:$0xf]
    %v2324 = vld [vmem:[%s14 + $0x38] sm:$0xf]
    %v2325 = vld [vmem:[%s14 + $0x3c] sm:$0xf]
    %v2326 = vld [vmem:[%s15] sm:$0x1]
    %v2328 = vperm.slane %v2326, 0
    %v2346 = vunpack.c.l.b16 %v2310
    %v2347 = vunpack.c.l.b16 %v2311
    %v2348 = vunpack.c.l.b16 %v2312
    %v2349 = vunpack.c.l.b16 %v2313
    %v2350 = vunpack.c.l.b16 %v2314
    %v2351 = vunpack.c.l.b16 %v2315
    %v2352 = vunpack.c.l.b16 %v2316
    %v2353 = vunpack.c.l.b16 %v2317
    %v2354 = vunpack.c.l.b16 %v2318
    %v2355 = vunpack.c.l.b16 %v2319
    %v2356 = vunpack.c.l.b16 %v2320
    %v2357 = vunpack.c.l.b16 %v2321
    %v2358 = vunpack.c.l.b16 %v2322
    %v2359 = vunpack.c.l.b16 %v2323
    %v2360 = vunpack.c.l.b16 %v2324
    %v2361 = vunpack.c.l.b16 %v2325
    %v2362 = vpack.c.b16 %v2347, %v2346
    %v2363 = vpack.c.b16 %v2349, %v2348
    %v2364 = vpack.c.b16 %v2351, %v2350
    %v2365 = vpack.c.b16 %v2353, %v2352
    %v2366 = vpack.c.b16 %v2355, %v2354
    %v2367 = vpack.c.b16 %v2357, %v2356
    %v2368 = vpack.c.b16 %v2359, %v2358
    %v2369 = vpack.c.b16 %v2361, %v2360
    %2378 = vmatpush.bf16.msra.mxu0 %v2369
    %2379 = vmatpush.bf16.msra.mxu0 %v2368
    %2380 = vmatpush.bf16.msra.mxu0 %v2367
    %2381 = vmatpush.bf16.msra.mxu0 %v2366
    %2382 = vmatpush.bf16.msra.mxu0 %v2365
    %2383 = vmatpush.bf16.msra.mxu0 %v2364
    %2384 = vmatpush.bf16.msra.mxu0 %v2363
    %2385 = vmatpush.bf16.msra.mxu0 %v2362
    %2386 = vmatmul.bf16.gmra.mxu0 %v2309
    %v2387 = vpop.f32.mrf.mxu0
    %v2388 = vadd.f32 %v2328, %v2387
    %v2389 = vpop.f32.mrf.mxu0
    %2390 = vdwg.mxu0
    %v2391 = vld [vmem:[%s16] sm:$0x1]
    %v2392 = vld [vmem:[%s17] sm:$0x1]
    %v2393 = vmul.f32 %v2388, %v1914
    %v2394 = vrot.slane %v2393, 4
    %v2395 = vadd.f32 %v2393, %v2394
    %v2396 = vrot.slane %v2395, 2
    %v2397 = vadd.f32 %v2395, %v2396
    %v2398 = vrot.slane %v2397, 1
    %v2399 = vadd.f32 %v2397, %v2398
    %v2400 = vmul.f32 %v2399, 0.5
    %v2401 = vmul.f32 %v2393, %v2393
    %v2402 = vrot.slane %v2401, 4
    %v2403 = vadd.f32 %v2401, %v2402
    %v2404 = vrot.slane %v2403, 2
    %v2405 = vadd.f32 %v2403, %v2404
    %v2406 = vrot.slane %v2405, 1
    %v2407 = vadd.f32 %v2405, %v2406
    %v2408 = vmul.f32 %v2407, 0.5
    %v2409 = vmul.f32 %v2400, %v2400
    %v2410 = vsub.f32 %v2408, %v2409
    %v2411 = vmax.f32 %v2410, 0.0
    %v2412 = vsub.f32 %v2388, %v2400
    %v2413 = vadd.f32 %v2411, 1e-05
    %v2414 = vrsqrt.pop %v2413
    %v2415 = vmul.f32 %v2414, %v2413
    %v2416 = vmul.f32 %v2415, %v2414
    %v2417 = vmul.f32 0.5, %v2416
    %v2418 = vsub.f32 1.5, %v2417
    %v2419 = vmul.f32 %v2414, %v2418
    %vm2420 = vweird.f32 %v2413
    %vm2421 = vweird.f32 %v2414
    %vm2422 = vmor %vm2420, %vm2421
    %v2423 = vsel %vm2422, %v2414, %v2419
    %v2424 = vmul.f32 %v2412, %v2423
    %v2426 = vperm.slane %v2391, 0
    %v2428 = vmul.f32 %v2424, %v2426
    %v2430 = vperm.slane %v2392, 0
    %v2432 = vadd.f32 %v2428, %v2430
    %v2433 = vmax.f32 %v2432, 0.0
    %v2434 = vpack.c.bf16 %v2433, %v2433
    %v2435 = vld [vmem:[%s18] sm:$0xf]
    %v2436 = vld [vmem:[%s18 + $0x4] sm:$0xf]
    %v2437 = vld [vmem:[%s18 + $0x8] sm:$0xf]
    %v2438 = vld [vmem:[%s18 + $0xc] sm:$0xf]
    %v2439 = vld [vmem:[%s18 + $0x10] sm:$0xf]
    %v2440 = vld [vmem:[%s18 + $0x14] sm:$0xf]
    %v2441 = vld [vmem:[%s18 + $0x18] sm:$0xf]
    %v2442 = vld [vmem:[%s18 + $0x1c] sm:$0xf]
    %v2443 = vld [vmem:[%s18 + $0x20] sm:$0xf]
    %v2444 = vld [vmem:[%s18 + $0x24] sm:$0xf]
    %v2445 = vld [vmem:[%s18 + $0x28] sm:$0xf]
    %v2446 = vld [vmem:[%s18 + $0x2c] sm:$0xf]
    %v2447 = vld [vmem:[%s18 + $0x30] sm:$0xf]
    %v2448 = vld [vmem:[%s18 + $0x34] sm:$0xf]
    %v2449 = vld [vmem:[%s18 + $0x38] sm:$0xf]
    %v2450 = vld [vmem:[%s18 + $0x3c] sm:$0xf]
    %v2451 = vld [vmem:[%s19] sm:$0x1]
    %v2453 = vperm.slane %v2451, 0
    %v2471 = vunpack.c.l.b16 %v2435
    %v2472 = vunpack.c.l.b16 %v2436
    %v2473 = vunpack.c.l.b16 %v2437
    %v2474 = vunpack.c.l.b16 %v2438
    %v2475 = vunpack.c.l.b16 %v2439
    %v2476 = vunpack.c.l.b16 %v2440
    %v2477 = vunpack.c.l.b16 %v2441
    %v2478 = vunpack.c.l.b16 %v2442
    %v2479 = vunpack.c.l.b16 %v2443
    %v2480 = vunpack.c.l.b16 %v2444
    %v2481 = vunpack.c.l.b16 %v2445
    %v2482 = vunpack.c.l.b16 %v2446
    %v2483 = vunpack.c.l.b16 %v2447
    %v2484 = vunpack.c.l.b16 %v2448
    %v2485 = vunpack.c.l.b16 %v2449
    %v2486 = vunpack.c.l.b16 %v2450
    %v2487 = vpack.c.b16 %v2472, %v2471
    %v2488 = vpack.c.b16 %v2474, %v2473
    %v2489 = vpack.c.b16 %v2476, %v2475
    %v2490 = vpack.c.b16 %v2478, %v2477
    %v2491 = vpack.c.b16 %v2480, %v2479
    %v2492 = vpack.c.b16 %v2482, %v2481
    %v2493 = vpack.c.b16 %v2484, %v2483
    %v2494 = vpack.c.b16 %v2486, %v2485
    %2503 = vmatpush.bf16.msra.mxu0 %v2494
    %2504 = vmatpush.bf16.msra.mxu0 %v2493
    %2505 = vmatpush.bf16.msra.mxu0 %v2492
    %2506 = vmatpush.bf16.msra.mxu0 %v2491
    %2507 = vmatpush.bf16.msra.mxu0 %v2490
    %2508 = vmatpush.bf16.msra.mxu0 %v2489
    %2509 = vmatpush.bf16.msra.mxu0 %v2488
    %2510 = vmatpush.bf16.msra.mxu0 %v2487
    %2511 = vmatmul.bf16.gmra.mxu0 %v2434
    %v2512 = vpop.f32.mrf.mxu0
    %v2513 = vadd.f32 %v2453, %v2512
    %v2514 = vpop.f32.mrf.mxu0
    %2515 = vdwg.mxu0
    %v2516 = vld [vmem:[%s20] sm:$0x1]
    %v2517 = vld [vmem:[%s21] sm:$0x1]
    %v2518 = vmul.f32 %v2513, %v1914
    %v2519 = vrot.slane %v2518, 4
    %v2520 = vadd.f32 %v2518, %v2519
    %v2521 = vrot.slane %v2520, 2
    %v2522 = vadd.f32 %v2520, %v2521
    %v2523 = vrot.slane %v2522, 1
    %v2524 = vadd.f32 %v2522, %v2523
    %v2525 = vmul.f32 %v2524, 0.5
    %v2526 = vmul.f32 %v2518, %v2518
    %v2527 = vrot.slane %v2526, 4
    %v2528 = vadd.f32 %v2526, %v2527
    %v2529 = vrot.slane %v2528, 2
    %v2530 = vadd.f32 %v2528, %v2529
    %v2531 = vrot.slane %v2530, 1
    %v2532 = vadd.f32 %v2530, %v2531
    %v2533 = vmul.f32 %v2532, 0.5
    %v2534 = vmul.f32 %v2525, %v2525
    %v2535 = vsub.f32 %v2533, %v2534
    %v2536 = vmax.f32 %v2535, 0.0
    %v2537 = vsub.f32 %v2513, %v2525
    %v2538 = vadd.f32 %v2536, 1e-05
    %v2539 = vrsqrt.pop %v2538
    %v2540 = vmul.f32 %v2539, %v2538
    %v2541 = vmul.f32 %v2540, %v2539
    %v2542 = vmul.f32 0.5, %v2541
    %v2543 = vsub.f32 1.5, %v2542
    %v2544 = vmul.f32 %v2539, %v2543
    %vm2545 = vweird.f32 %v2538
    %vm2546 = vweird.f32 %v2539
    %vm2547 = vmor %vm2545, %vm2546
    %v2548 = vsel %vm2547, %v2539, %v2544
    %v2549 = vmul.f32 %v2537, %v2548
    %v2551 = vperm.slane %v2516, 0
    %v2553 = vmul.f32 %v2549, %v2551
    %v2555 = vperm.slane %v2517, 0
    %v2557 = vadd.f32 %v2553, %v2555
    %v2558 = vmax.f32 %v2557, 0.0
    %v2559 = vpack.c.bf16 %v2558, %v2558
    %v2560 = vld [vmem:[#allocation6] sm:$0xf]
    %v2561 = vld [vmem:[#allocation6 + $0x4] sm:$0xf]
    %v2562 = vld [vmem:[#allocation6 + $0x8] sm:$0xf]
    %v2563 = vld [vmem:[#allocation6 + $0xc] sm:$0xf]
    %v2564 = vld [vmem:[#allocation6 + $0x10] sm:$0xf]
    %v2565 = vld [vmem:[#allocation6 + $0x14] sm:$0xf]
    %v2566 = vld [vmem:[#allocation6 + $0x18] sm:$0xf]
    %v2567 = vld [vmem:[#allocation6 + $0x1c] sm:$0xf]
    %v2568 = vld [vmem:[#allocation6 + $0x20] sm:$0xf]
    %v2569 = vld [vmem:[#allocation6 + $0x24] sm:$0xf]
    %v2570 = vld [vmem:[#allocation6 + $0x28] sm:$0xf]
    %v2571 = vld [vmem:[#allocation6 + $0x2c] sm:$0xf]
    %v2572 = vld [vmem:[#allocation6 + $0x30] sm:$0xf]
    %v2573 = vld [vmem:[#allocation6 + $0x34] sm:$0xf]
    %v2574 = vld [vmem:[#allocation6 + $0x38] sm:$0xf]
    %v2575 = vld [vmem:[#allocation6 + $0x3c] sm:$0xf]
    %v2576 = vld [vmem:[%s23] sm:$0x1]
    %v2578 = vperm.slane %v2576, 0
    %v2596 = vunpack.c.l.b16 %v2560
    %v2597 = vunpack.c.l.b16 %v2561
    %v2598 = vunpack.c.l.b16 %v2562
    %v2599 = vunpack.c.l.b16 %v2563
    %v2600 = vunpack.c.l.b16 %v2564
    %v2601 = vunpack.c.l.b16 %v2565
    %v2602 = vunpack.c.l.b16 %v2566
    %v2603 = vunpack.c.l.b16 %v2567
    %v2604 = vunpack.c.l.b16 %v2568
    %v2605 = vunpack.c.l.b16 %v2569
    %v2606 = vunpack.c.l.b16 %v2570
    %v2607 = vunpack.c.l.b16 %v2571
    %v2608 = vunpack.c.l.b16 %v2572
    %v2609 = vunpack.c.l.b16 %v2573
    %v2610 = vunpack.c.l.b16 %v2574
    %v2611 = vunpack.c.l.b16 %v2575
    %v2612 = vpack.c.b16 %v2597, %v2596
    %v2613 = vpack.c.b16 %v2599, %v2598
    %v2614 = vpack.c.b16 %v2601, %v2600
    %v2615 = vpack.c.b16 %v2603, %v2602
    %v2616 = vpack.c.b16 %v2605, %v2604
    %v2617 = vpack.c.b16 %v2607, %v2606
    %v2618 = vpack.c.b16 %v2609, %v2608
    %v2619 = vpack.c.b16 %v2611, %v2610
    %2628 = vmatpush.bf16.msra.mxu0 %v2619
    %2629 = vmatpush.bf16.msra.mxu0 %v2618
    %2630 = vmatpush.bf16.msra.mxu0 %v2617
    %2631 = vmatpush.bf16.msra.mxu0 %v2616
    %2632 = vmatpush.bf16.msra.mxu0 %v2615
    %2633 = vmatpush.bf16.msra.mxu0 %v2614
    %2634 = vmatpush.bf16.msra.mxu0 %v2613
    %2635 = vmatpush.bf16.msra.mxu0 %v2612
    %2636 = vmatmul.bf16.gmra.mxu0 %v2559
    %v2637 = vpop.f32.mrf.mxu0
    %v2638 = vadd.f32 %v2578, %v2637
    %v2639 = vpop.f32.mrf.mxu0
    %2640 = vdwg.mxu0
    %2641 = vst [vmem:[%s25] sm:$0xff] %v2638
    // Predicated region
    $region110: #{ginet_forward.1} parent=1 // pred_check
      _
    $region111: #{ginet_forward.1} parent=1 // pred_check_branch
      %2643 = sbr.rel (0) target = $region113
    $region112: #{ginet_forward.1} parent=1 // pred_region
      _
    $region113: #{ginet_forward.1} parent=1 // pred_fallthru
      _
    // Predicated region
    $region114: #{ginet_forward.1} parent=1 // pred_check
      _
    $region115: #{ginet_forward.1} parent=1 // pred_check_branch
      %2645 = sbr.rel (0) target = $region117
    $region116: #{ginet_forward.1} parent=1 // pred_region
      _
    $region117: #{ginet_forward.1} parent=1 // pred_fallthru
      _
    // Predicated region
    $region118: #{ginet_forward.1} parent=1 // pred_check
      _
    $region119: #{ginet_forward.1} parent=1 // pred_check_branch
      %2647 = sbr.rel (0) target = $region121
    $region120: #{ginet_forward.1} parent=1 // pred_region
      _
    $region121: #{ginet_forward.1} parent=1 // pred_fallthru
      _
    // Predicated region
    $region122: #{ginet_forward.1} parent=1 // pred_check
      _
    $region123: #{ginet_forward.1} parent=1 // pred_check_branch
      %2649 = sbr.rel (0) target = $region125
    $region124: #{ginet_forward.1} parent=1 // pred_region
      _
    $region125: #{ginet_forward.1} parent=1 // pred_fallthru
      _
    %2650 = vsyncpa [#allocation3], 1
    %2651 = vsyncpa [#allocation5], 1

</llo_original>
